<compile_context>
chip_gen: v7x
topology: tpu7x:2x2x1
jax: 0.10.0
libtpu: 0.0.40
codegen_flags: <defaults>
</compile_context>

<pallas_src>
import functools
import math

import jax
import jax.numpy as jnp
from jax.experimental import pallas as pl
from jax.experimental.pallas import tpu as pltpu

_LN_EPS = 1e-5  # PyTorch nn.LayerNorm default


def _layer_norm(x, w, b):
    """LayerNorm over the last axis. x: (..., D) f32; w, b broadcastable (1, D)."""
    mean = jnp.mean(x, axis=-1, keepdims=True)
    xc = x - mean
    var = jnp.mean(xc * xc, axis=-1, keepdims=True)
    return xc * jax.lax.rsqrt(var + _LN_EPS) * w + b


def _gelu_tanh(x):
    # TODO(synk): PyTorch activation='gelu' is the exact erf GELU; tanh approximation used
    # here (safe Mosaic lowering), max deviation ~1e-3.
    c = math.sqrt(2.0 / math.pi)
    return 0.5 * x * (1.0 + jnp.tanh(c * (x + 0.044715 * x * x * x)))


def _sigmoid(x):
    return 1.0 / (1.0 + jnp.exp(-x))


def _transformer_mlp_kernel(
    x_ref,                     # (TB, Sp, D)  compute dtype (S includes CLS + padding)
    wqkv_ref, bqkv_ref,        # (L, D, 3D) cdt, (L, 1, 3D) f32
    wo_ref, bo_ref,            # (L, D, D)  cdt, (L, 1, D)  f32
    ln1w_ref, ln1b_ref,        # (L, 1, D) f32
    wff1_ref, bff1_ref,        # (L, D, F)  cdt, (L, 1, F)  f32
    wff2_ref, bff2_ref,        # (L, F, D)  cdt, (L, 1, D)  f32
    ln2w_ref, ln2b_ref,        # (L, 1, D) f32
    wh1_ref, bh1_ref,          # (D, M) cdt, (1, M) f32
    wh2_ref, bh2_ref,          # (M, Opad) cdt (zero-padded), (1, Opad) f32
    o_ref,                     # (TB, Opad) f32
    *, n_heads, s_real, use_cls_token):
    cdt = wqkv_ref.dtype
    TB, Sp, D = x_ref.shape
    n_layers = wqkv_ref.shape[0]
    Dh = D // n_heads
    N = TB * Sp
    scale = 1.0 / math.sqrt(Dh)

    # Additive key-padding bias (built once, broadcast over batch/queries).
    if Sp != s_real:
        key_idx = jax.lax.broadcasted_iota(jnp.int32, (1, 1, Sp), 2)
        kbias = jnp.where(key_idx < s_real, 0.0, -1e30).astype(jnp.float32)
    else:
        kbias = None

    # Residual stream in f32, flattened to (TB*Sp, D) for the dense layers.
    x = x_ref[...].astype(jnp.float32).reshape(N, D)

    for l in range(n_layers):  # static unroll (n_layers is tiny)
        # ---- fused QKV projection: one (N, D) @ (D, 3D) matmul, one cast of the result ----
        qkv = jnp.dot(x.astype(cdt), wqkv_ref[l],
                      preferred_element_type=jnp.float32) + bqkv_ref[l]      # (N, 3D) f32
        qkv3 = qkv.astype(cdt).reshape(TB, Sp, 3 * D)                        # layout-preserving

        # ---- batched attention over the tile; heads statically unrolled (H, Dh tiny) ----
        o_heads = []
        for h in range(n_heads):
            q = qkv3[:, :, h * Dh:(h + 1) * Dh]                              # (TB, Sp, Dh)
            k = qkv3[:, :, D + h * Dh:D + (h + 1) * Dh]
            v = qkv3[:, :, 2 * D + h * Dh:2 * D + (h + 1) * Dh]
            s = jnp.einsum('bqd,bkd->bqk', q, k,
                           preferred_element_type=jnp.float32) * scale       # (TB, Sp, Sp)
            if kbias is not None:
                s = s + kbias                                                # mask padded keys
            s = s - jnp.max(s, axis=-1, keepdims=True)
            p = jnp.exp(s)
            p = p * pl.reciprocal(jnp.sum(p, axis=-1, keepdims=True), approx=True)
            o_heads.append(jnp.einsum('bqk,bkd->bqd', p.astype(cdt), v,
                                      preferred_element_type=jnp.float32))   # (TB, Sp, Dh)

        # ---- single (N, D) @ (D, D) output projection (no per-head K=8 sub-matmuls) ----
        o_all = jnp.concatenate(o_heads, axis=-1).reshape(N, D)
        attn = jnp.dot(o_all.astype(cdt), wo_ref[l],
                       preferred_element_type=jnp.float32) + bo_ref[l]
        x = _layer_norm(x + attn, ln1w_ref[l], ln1b_ref[l])                  # post-norm

        # ---- feed-forward block ----
        t = jnp.dot(x.astype(cdt), wff1_ref[l],
                    preferred_element_type=jnp.float32) + bff1_ref[l]        # (N, F)
        t = _gelu_tanh(t)
        ff = jnp.dot(t.astype(cdt), wff2_ref[l],
                     preferred_element_type=jnp.float32) + bff2_ref[l]       # (N, D)
        x = _layer_norm(x + ff, ln2w_ref[l], ln2b_ref[l])

    # ---- pooling (padded rows are never used) ----
    x3 = x.reshape(TB, Sp, D)
    if use_cls_token:
        pooled = x3[:, 0:1, :].reshape(TB, D)
    else:
        row_idx = jax.lax.broadcasted_iota(jnp.int32, (1, Sp, 1), 1)
        mask = (row_idx < s_real).astype(jnp.float32)
        pooled = jnp.sum(x3 * mask, axis=1) * (1.0 / s_real)

    # ---- MLP head: Linear -> SiLU -> (Dropout=identity) -> Linear (lane-dense output) ----
    h1 = jnp.dot(pooled.astype(cdt), wh1_ref[...],
                 preferred_element_type=jnp.float32) + bh1_ref[...]
    h1 = h1 * _sigmoid(h1)
    # TODO(synk): nn.Dropout is identity at inference; training-mode dropout not implemented.
    out = jnp.dot(h1.astype(cdt), wh2_ref[...],
                  preferred_element_type=jnp.float32) + bh2_ref[...]
    o_ref[...] = out.astype(o_ref.dtype)                                     # (TB, Opad)


def transformer_mlp_forward(x, params, *, n_heads=4, use_cls_token=True,
                            compute_dtype=jnp.bfloat16, block_b=None):
    """x: (B, seq_len, feature_dim) f32 -> (B, num_classes) f32."""
    B, _, D = x.shape
    if use_cls_token:
        cls = jnp.broadcast_to(params["cls_token"].astype(x.dtype), (B, 1, D))
        x = jnp.concatenate([cls, x], axis=1)
    S_real = x.shape[1]
    # Pad sequence to a sublane multiple so in-kernel reshapes are layout-preserving;
    # padded keys are masked inside the kernel softmax.
    S_pad = ((S_real + 7) // 8) * 8
    if S_pad != S_real:
        x = jnp.pad(x, ((0, 0), (0, S_pad - S_real), (0, 0)))

    L = params["wqkv"].shape[0]
    Fd = params["wff1"].shape[-1]
    M = params["wh1"].shape[-1]
    C = params["wh2"].shape[-1]
    O_pad = ((C + 127) // 128) * 128

    # Lane-dense output: pad classifier to a multiple of 128 lanes; slice outside.
    wh2 = jnp.pad(params["wh2"], ((0, 0), (0, O_pad - C)))
    bh2 = jnp.pad(params["bh2"], ((0, 0), (0, O_pad - C)))

    cdt = compute_dtype
    wqkv = params["wqkv"].astype(cdt)
    wo = params["wo"].astype(cdt)
    wff1 = params["wff1"].astype(cdt)
    wff2 = params["wff2"].astype(cdt)
    wh1 = params["wh1"].astype(cdt)
    wh2 = wh2.astype(cdt)

    # Batch tile: target ~256 MXU M-rows (TB*S_pad) per grid step.  Small B -> one grid
    # step (best on 1-TC v5e/v6e); large B -> multiple "parallel" steps for v7x's 2 TCs.
    # VMEM footprint at these D/F sizes is tiny; explicit vmem_limit_bytes below keeps
    # headroom on v7x's 64 MiB VMEM.
    if block_b is None:
        block_b = max(1, 256 // S_pad)
    block_b = min(block_b, B)
    if block_b < B:
        block_b = min(B, max(8, (block_b // 8) * 8))  # sublane-aligned output tile
    grid_b = (B + block_b - 1) // block_b
    B_pad = grid_b * block_b
    if B_pad != B:
        # Zero batch padding (not Pallas OOB padding) keeps padded rows NaN-free.
        x = jnp.pad(x, ((0, B_pad - B), (0, 0), (0, 0)))

    x = x.astype(cdt)  # halve the per-step input DMA; kernel upcasts to f32

    kern = functools.partial(_transformer_mlp_kernel, n_heads=n_heads,
                             s_real=S_real, use_cls_token=use_cls_token)

    out_padded = pl.pallas_call(
        kern,
        out_shape=jax.ShapeDtypeStruct((B_pad, O_pad), jnp.float32),
        grid_spec=pltpu.PrefetchScalarGridSpec(
            num_scalar_prefetch=0,
            grid=(grid_b,),
            in_specs=[
                pl.BlockSpec((block_b, S_pad, D), lambda b: (b, 0, 0)),   # x (batch tile)
                pl.BlockSpec((L, D, 3 * D), lambda b: (0, 0, 0)),         # wqkv
                pl.BlockSpec((L, 1, 3 * D), lambda b: (0, 0, 0)),         # bqkv
                pl.BlockSpec((L, D, D), lambda b: (0, 0, 0)),             # wo
                pl.BlockSpec((L, 1, D), lambda b: (0, 0, 0)),             # bo
                pl.BlockSpec((L, 1, D), lambda b: (0, 0, 0)),             # ln1_w
                pl.BlockSpec((L, 1, D), lambda b: (0, 0, 0)),             # ln1_b
                pl.BlockSpec((L, D, Fd), lambda b: (0, 0, 0)),            # wff1
                pl.BlockSpec((L, 1, Fd), lambda b: (0, 0, 0)),            # bff1
                pl.BlockSpec((L, Fd, D), lambda b: (0, 0, 0)),            # wff2
                pl.BlockSpec((L, 1, D), lambda b: (0, 0, 0)),             # bff2
                pl.BlockSpec((L, 1, D), lambda b: (0, 0, 0)),             # ln2_w
                pl.BlockSpec((L, 1, D), lambda b: (0, 0, 0)),             # ln2_b
                pl.BlockSpec((D, M), lambda b: (0, 0)),                   # head w1
                pl.BlockSpec((1, M), lambda b: (0, 0)),                   # head b1
                pl.BlockSpec((M, O_pad), lambda b: (0, 0)),               # head w2 (padded)
                pl.BlockSpec((1, O_pad), lambda b: (0, 0)),               # head b2 (padded)
            ],
            out_specs=pl.BlockSpec((block_b, O_pad), lambda b: (b, 0)),
        ),
        compiler_params=pltpu.CompilerParams(
            dimension_semantics=("parallel",),
            vmem_limit_bytes=48 * 1024 * 1024),   # v7x has 64 MiB physical VMEM
    )(x, wqkv, params["bqkv"], wo, params["bo"],
      params["ln1_w"], params["ln1_b"], wff1, params["bff1"],
      wff2, params["bff2"], params["ln2_w"], params["ln2_b"],
      wh1, params["bh1"], wh2, bh2)
    return out_padded[:B, :C]


def _reference_forward(x, params, *, n_heads=4, use_cls_token=True):
    """Pure-JAX f32 reference with identical math (same tanh-GELU)."""
    B, _, D = x.shape
    if use_cls_token:
        cls = jnp.broadcast_to(params["cls_token"], (B, 1, D))
        h = jnp.concatenate([cls, x], axis=1)
    else:
        h = x
    L = params["wqkv"].shape[0]
    Dh = D // n_heads
    scale = 1.0 / math.sqrt(Dh)
    for l in range(L):
        qkv = h @ params["wqkv"][l] + params["bqkv"][l]
        q, k, v = jnp.split(qkv, 3, axis=-1)

        def heads(t):
            return t.reshape(B, -1, n_heads, Dh).transpose(0, 2, 1, 3)

        qh, kh, vh = heads(q), heads(k), heads(v)
        s = jnp.einsum('bhqd,bhkd->bhqk', qh, kh) * scale
        p = jax.nn.softmax(s, axis=-1)
        o = jnp.einsum('bhqk,bhkd->bhqd', p, vh).transpose(0, 2, 1, 3).reshape(B, -1, D)
        attn = o @ params["wo"][l] + params["bo"][l]
        h = _layer_norm(h + attn, params["ln1_w"][l], params["ln1_b"][l])
        ff = _gelu_tanh(h @ params["wff1"][l] + params["bff1"][l]) @ params["wff2"][l] \
            + params["bff2"][l]
        h = _layer_norm(h + ff, params["ln2_w"][l], params["ln2_b"][l])
    pooled = h[:, 0] if use_cls_token else h.mean(axis=1)
    z = pooled @ params["wh1"] + params["bh1"]
    z = z * jax.nn.sigmoid(z)
    return z @ params["wh2"] + params["bh2"]


def init_params(key, feature_dim, *, n_heads=4, n_layers=2, ff_dim=256,
                mlp_hidden=256, num_classes=4):
    """Kernel-friendly layouts. Mapping from PyTorch:
       wqkv = in_proj_weight.T, wo = out_proj.weight.T, wff* = linear*.weight.T,
       wh*  = mlp_head Linear weight.T; biases reshaped to (…, 1, dim)."""
    D, Fd, M, C, L = feature_dim, ff_dim, mlp_hidden, num_classes, n_layers
    ks = jax.random.split(key, 16)
    r = lambda k, s, sc: jax.random.normal(k, s, jnp.float32) * sc
    return dict(
        cls_token=r(ks[0], (1, 1, D), 0.02),
        wqkv=r(ks[1], (L, D, 3 * D), 1.0 / math.sqrt(D)),
        bqkv=r(ks[2], (L, 1, 3 * D), 0.02),
        wo=r(ks[3], (L, D, D), 1.0 / math.sqrt(D)),
        bo=r(ks[4], (L, 1, D), 0.02),
        ln1_w=1.0 + r(ks[5], (L, 1, D), 0.05),
        ln1_b=r(ks[6], (L, 1, D), 0.05),
        wff1=r(ks[7], (L, D, Fd), 1.0 / math.sqrt(D)),
        bff1=r(ks[8], (L, 1, Fd), 0.02),
        wff2=r(ks[9], (L, Fd, D), 1.0 / math.sqrt(Fd)),
        bff2=r(ks[10], (L, 1, D), 0.02),
        ln2_w=1.0 + r(ks[11], (L, 1, D), 0.05),
        ln2_b=r(ks[12], (L, 1, D), 0.05),
        wh1=r(ks[13], (D, M), 1.0 / math.sqrt(D)),
        bh1=r(ks[14], (1, M), 0.02),
        wh2=r(ks[15], (M, C), 1.0 / math.sqrt(M)),
        bh2=jnp.zeros((1, C), jnp.float32),
    )


if __name__ == "__main__":
    # Small shapes consistent with the module defaults: x (batch, seq_len, feature_dim).
    batch, seq_len, feature_dim = 2, 8, 32
    n_heads, n_layers, ff_dim, mlp_hidden, num_classes = 4, 2, 256, 256, 4

    key = jax.random.PRNGKey(0)
    kx, kp = jax.random.split(key)
    x = jax.random.normal(kx, (batch, seq_len, feature_dim), jnp.float32)
    params = init_params(kp, feature_dim, n_heads=n_heads, n_layers=n_layers,
                         ff_dim=ff_dim, mlp_hidden=mlp_hidden,
                         num_classes=num_classes)

    ref = _reference_forward(x, params, n_heads=n_heads)

    # f32-operand path (tolerance conservatively covers reduced-precision MXU passes
    # and the approx-reciprocal softmax).
    out_f32 = jax.block_until_ready(
        transformer_mlp_forward(x, params, n_heads=n_heads,
                                compute_dtype=jnp.float32))
    assert out_f32.shape == (batch, num_classes)
    assert jnp.allclose(out_f32, ref, atol=5e-2, rtol=5e-2), "f32 mismatch vs reference"

    # bf16-operand fast path (production default): loose tolerance for bf16 operands.
    out_bf16 = jax.block_until_ready(
        transformer_mlp_forward(x, params, n_heads=n_heads,
                                compute_dtype=jnp.bfloat16))
    assert out_bf16.shape == (batch, num_classes)
    assert jnp.allclose(out_bf16, ref, atol=2e-1, rtol=2e-1), "bf16 mismatch vs reference"

    print("KERNEL_OK")
</pallas_src>

<mosaic_0001>
module attributes {stable_mosaic.version = 11 : i64} {
  func.func @_transformer_mlp_kernel(%arg0: i32, %arg1: memref<2x16x32xf32, #tpu.memory_space<vmem>>, %arg2: memref<2x32x96xf32, #tpu.memory_space<vmem>>, %arg3: memref<2x1x96xf32, #tpu.memory_space<vmem>>, %arg4: memref<2x32x32xf32, #tpu.memory_space<vmem>>, %arg5: memref<2x1x32xf32, #tpu.memory_space<vmem>>, %arg6: memref<2x1x32xf32, #tpu.memory_space<vmem>>, %arg7: memref<2x1x32xf32, #tpu.memory_space<vmem>>, %arg8: memref<2x32x256xf32, #tpu.memory_space<vmem>>, %arg9: memref<2x1x256xf32, #tpu.memory_space<vmem>>, %arg10: memref<2x256x32xf32, #tpu.memory_space<vmem>>, %arg11: memref<2x1x32xf32, #tpu.memory_space<vmem>>, %arg12: memref<2x1x32xf32, #tpu.memory_space<vmem>>, %arg13: memref<2x1x32xf32, #tpu.memory_space<vmem>>, %arg14: memref<32x256xf32, #tpu.memory_space<vmem>>, %arg15: memref<1x256xf32, #tpu.memory_space<vmem>>, %arg16: memref<256x128xf32, #tpu.memory_space<vmem>>, %arg17: memref<1x128xf32, #tpu.memory_space<vmem>>, %arg18: memref<2x128xf32, #tpu.memory_space<vmem>>) attributes {dimension_semantics = [#tpu.dimension_semantics<parallel>], iteration_bounds = array<i64: 1>, scalar_prefetch = 0 : i64, scratch_operands = 0 : i64, tpu.core_type = #tpu.core_type<tc>, window_params = [{transform_indices = @transform_0, window_bounds = array<i64: 2, 16, 32>}, {pipeline_mode = #tpu.pipeline_mode<synchronous>, transform_indices = @transform_1, window_bounds = array<i64: 2, 32, 96>}, {pipeline_mode = #tpu.pipeline_mode<synchronous>, transform_indices = @transform_2, window_bounds = array<i64: 2, 1, 96>}, {pipeline_mode = #tpu.pipeline_mode<synchronous>, transform_indices = @transform_3, window_bounds = array<i64: 2, 32, 32>}, {pipeline_mode = #tpu.pipeline_mode<synchronous>, transform_indices = @transform_4, window_bounds = array<i64: 2, 1, 32>}, {pipeline_mode = #tpu.pipeline_mode<synchronous>, transform_indices = @transform_5, window_bounds = array<i64: 2, 1, 32>}, {pipeline_mode = #tpu.pipeline_mode<synchronous>, transform_indices = @transform_6, window_bounds = array<i64: 2, 1, 32>}, {pipeline_mode = #tpu.pipeline_mode<synchronous>, transform_indices = @transform_7, window_bounds = array<i64: 2, 32, 256>}, {pipeline_mode = #tpu.pipeline_mode<synchronous>, transform_indices = @transform_8, window_bounds = array<i64: 2, 1, 256>}, {pipeline_mode = #tpu.pipeline_mode<synchronous>, transform_indices = @transform_9, window_bounds = array<i64: 2, 256, 32>}, {pipeline_mode = #tpu.pipeline_mode<synchronous>, transform_indices = @transform_10, window_bounds = array<i64: 2, 1, 32>}, {pipeline_mode = #tpu.pipeline_mode<synchronous>, transform_indices = @transform_11, window_bounds = array<i64: 2, 1, 32>}, {pipeline_mode = #tpu.pipeline_mode<synchronous>, transform_indices = @transform_12, window_bounds = array<i64: 2, 1, 32>}, {pipeline_mode = #tpu.pipeline_mode<synchronous>, transform_indices = @transform_13, window_bounds = array<i64: 32, 256>}, {pipeline_mode = #tpu.pipeline_mode<synchronous>, transform_indices = @transform_14, window_bounds = array<i64: 1, 256>}, {pipeline_mode = #tpu.pipeline_mode<synchronous>, transform_indices = @transform_15, window_bounds = array<i64: 256, 128>}, {pipeline_mode = #tpu.pipeline_mode<synchronous>, transform_indices = @transform_16, window_bounds = array<i64: 1, 128>}, {transform_indices = @transform_17, window_bounds = array<i64: 2, 128>}]} {
    %0 = tpu.iota {dimensions = array<i32: 2>} : vector<1x1x16xi32>
    %c9_i32 = arith.constant 9 : i32
    %1 = vector.broadcast %c9_i32 : i32 to vector<1x1x16xi32>
    %2 = arith.cmpi slt, %0, %1 : vector<1x1x16xi32>
    %cst = arith.constant 0.000000e+00 : f32
    %cst_0 = arith.constant -1.000000e+30 : f32
    %3 = vector.broadcast %cst : f32 to vector<1x1x16xf32>
    %4 = vector.broadcast %cst_0 : f32 to vector<1x1x16xf32>
    %5 = arith.select %2, %3, %4 : vector<1x1x16xi1>, vector<1x1x16xf32>
    %c0 = arith.constant 0 : index
    %c0_1 = arith.constant 0 : index
    %c0_2 = arith.constant 0 : index
    %6 = vector.load %arg1[%c0, %c0_1, %c0_2] : memref<2x16x32xf32, #tpu.memory_space<vmem>>, vector<2x16x32xf32>
    %7 = vector.shape_cast %6 : vector<2x16x32xf32> to vector<32x32xf32>
    %c0_3 = arith.constant 0 : index
    %c0_4 = arith.constant 0 : index
    %c0_5 = arith.constant 0 : index
    %8 = vector.load %arg2[%c0_3, %c0_4, %c0_5] : memref<2x32x96xf32, #tpu.memory_space<vmem>>, vector<1x32x96xf32>
    %9 = vector.shape_cast %8 : vector<1x32x96xf32> to vector<32x96xf32>
    %cst_6 = arith.constant dense<0.000000e+00> : vector<32x96xf32>
    %10 = tpu.matmul %7, %9, %cst_6 {dimension_numbers = #tpu.dot_dimension_numbers<[1], [0], [0], [1], [0, 0, 1, 1], [], []>} : vector<32x32xf32>, vector<32x96xf32>, vector<32x96xf32> -> vector<32x96xf32>
    %c0_7 = arith.constant 0 : index
    %c0_8 = arith.constant 0 : index
    %c0_9 = arith.constant 0 : index
    %11 = vector.load %arg3[%c0_7, %c0_8, %c0_9] : memref<2x1x96xf32, #tpu.memory_space<vmem>>, vector<1x1x96xf32>
    %12 = vector.shape_cast %11 : vector<1x1x96xf32> to vector<1x96xf32>
    %13 = vector.broadcast %12 : vector<1x96xf32> to vector<32x96xf32>
    %14 = arith.addf %10, %13 : vector<32x96xf32>
    %15 = vector.shape_cast %14 : vector<32x96xf32> to vector<2x16x96xf32>
    %16 = vector.extract_strided_slice %15 {offsets = [0, 0, 0], sizes = [2, 16, 8], strides = [1, 1, 1]} : vector<2x16x96xf32> to vector<2x16x8xf32>
    %17 = vector.extract_strided_slice %15 {offsets = [0, 0, 32], sizes = [2, 16, 8], strides = [1, 1, 1]} : vector<2x16x96xf32> to vector<2x16x8xf32>
    %18 = vector.extract_strided_slice %15 {offsets = [0, 0, 64], sizes = [2, 16, 8], strides = [1, 1, 1]} : vector<2x16x96xf32> to vector<2x16x8xf32>
    "tpu.trace_start"() <{level = 10 : i32, message = "bqd,bkd->bqk"}> : () -> ()
    %cst_10 = arith.constant dense<0.000000e+00> : vector<2x16x16xf32>
    %19 = tpu.matmul %16, %17, %cst_10 {dimension_numbers = #tpu.dot_dimension_numbers<[2], [2], [1], [1], [0, 0, 0, 1, 1, 1], [0], [0]>} : vector<2x16x8xf32>, vector<2x16x8xf32>, vector<2x16x16xf32> -> vector<2x16x16xf32>
    "tpu.trace_stop"() : () -> ()
    %cst_11 = arith.constant 0.353553385 : f32
    %20 = vector.broadcast %cst_11 : f32 to vector<2x16x16xf32>
    %21 = arith.mulf %19, %20 : vector<2x16x16xf32>
    %22 = vector.broadcast %5 : vector<1x1x16xf32> to vector<2x16x16xf32>
    %23 = arith.addf %21, %22 : vector<2x16x16xf32>
    %cst_12 = arith.constant dense<0xFF800000> : vector<2x16xf32>
    %24 = vector.multi_reduction <maximumf>, %23, %cst_12 [2] : vector<2x16x16xf32> to vector<2x16xf32>
    %25 = vector.shape_cast %24 : vector<2x16xf32> to vector<2x16x1xf32>
    %26 = vector.broadcast %25 : vector<2x16x1xf32> to vector<2x16x16xf32>
    %27 = arith.subf %23, %26 : vector<2x16x16xf32>
    %28 = math.exp %27 : vector<2x16x16xf32>
    %cst_13 = arith.constant dense<0.000000e+00> : vector<2x16xf32>
    %29 = vector.multi_reduction <add>, %28, %cst_13 [2] : vector<2x16x16xf32> to vector<2x16xf32>
    %30 = vector.shape_cast %29 : vector<2x16xf32> to vector<2x16x1xf32>
    %31 = tpu.reciprocal %30 {approx = true} : vector<2x16x1xf32> -> vector<2x16x1xf32>
    %32 = vector.broadcast %31 : vector<2x16x1xf32> to vector<2x16x16xf32>
    %33 = arith.mulf %28, %32 : vector<2x16x16xf32>
    "tpu.trace_start"() <{level = 10 : i32, message = "bqk,bkd->bqd"}> : () -> ()
    %cst_14 = arith.constant dense<0.000000e+00> : vector<2x16x8xf32>
    %34 = tpu.matmul %33, %18, %cst_14 {dimension_numbers = #tpu.dot_dimension_numbers<[2], [1], [1], [2], [0, 0, 0, 1, 1, 2], [0], [0]>} : vector<2x16x16xf32>, vector<2x16x8xf32>, vector<2x16x8xf32> -> vector<2x16x8xf32>
    "tpu.trace_stop"() : () -> ()
    %35 = vector.extract_strided_slice %15 {offsets = [0, 0, 8], sizes = [2, 16, 8], strides = [1, 1, 1]} : vector<2x16x96xf32> to vector<2x16x8xf32>
    %36 = vector.extract_strided_slice %15 {offsets = [0, 0, 40], sizes = [2, 16, 8], strides = [1, 1, 1]} : vector<2x16x96xf32> to vector<2x16x8xf32>
    %37 = vector.extract_strided_slice %15 {offsets = [0, 0, 72], sizes = [2, 16, 8], strides = [1, 1, 1]} : vector<2x16x96xf32> to vector<2x16x8xf32>
    "tpu.trace_start"() <{level = 10 : i32, message = "bqd,bkd->bqk"}> : () -> ()
    %cst_15 = arith.constant dense<0.000000e+00> : vector<2x16x16xf32>
    %38 = tpu.matmul %35, %36, %cst_15 {dimension_numbers = #tpu.dot_dimension_numbers<[2], [2], [1], [1], [0, 0, 0, 1, 1, 1], [0], [0]>} : vector<2x16x8xf32>, vector<2x16x8xf32>, vector<2x16x16xf32> -> vector<2x16x16xf32>
    "tpu.trace_stop"() : () -> ()
    %cst_16 = arith.constant 0.353553385 : f32
    %39 = vector.broadcast %cst_16 : f32 to vector<2x16x16xf32>
    %40 = arith.mulf %38, %39 : vector<2x16x16xf32>
    %41 = vector.broadcast %5 : vector<1x1x16xf32> to vector<2x16x16xf32>
    %42 = arith.addf %40, %41 : vector<2x16x16xf32>
    %cst_17 = arith.constant dense<0xFF800000> : vector<2x16xf32>
    %43 = vector.multi_reduction <maximumf>, %42, %cst_17 [2] : vector<2x16x16xf32> to vector<2x16xf32>
    %44 = vector.shape_cast %43 : vector<2x16xf32> to vector<2x16x1xf32>
    %45 = vector.broadcast %44 : vector<2x16x1xf32> to vector<2x16x16xf32>
    %46 = arith.subf %42, %45 : vector<2x16x16xf32>
    %47 = math.exp %46 : vector<2x16x16xf32>
    %cst_18 = arith.constant dense<0.000000e+00> : vector<2x16xf32>
    %48 = vector.multi_reduction <add>, %47, %cst_18 [2] : vector<2x16x16xf32> to vector<2x16xf32>
    %49 = vector.shape_cast %48 : vector<2x16xf32> to vector<2x16x1xf32>
    %50 = tpu.reciprocal %49 {approx = true} : vector<2x16x1xf32> -> vector<2x16x1xf32>
    %51 = vector.broadcast %50 : vector<2x16x1xf32> to vector<2x16x16xf32>
    %52 = arith.mulf %47, %51 : vector<2x16x16xf32>
    "tpu.trace_start"() <{level = 10 : i32, message = "bqk,bkd->bqd"}> : () -> ()
    %cst_19 = arith.constant dense<0.000000e+00> : vector<2x16x8xf32>
    %53 = tpu.matmul %52, %37, %cst_19 {dimension_numbers = #tpu.dot_dimension_numbers<[2], [1], [1], [2], [0, 0, 0, 1, 1, 2], [0], [0]>} : vector<2x16x16xf32>, vector<2x16x8xf32>, vector<2x16x8xf32> -> vector<2x16x8xf32>
    "tpu.trace_stop"() : () -> ()
    %54 = vector.extract_strided_slice %15 {offsets = [0, 0, 16], sizes = [2, 16, 8], strides = [1, 1, 1]} : vector<2x16x96xf32> to vector<2x16x8xf32>
    %55 = vector.extract_strided_slice %15 {offsets = [0, 0, 48], sizes = [2, 16, 8], strides = [1, 1, 1]} : vector<2x16x96xf32> to vector<2x16x8xf32>
    %56 = vector.extract_strided_slice %15 {offsets = [0, 0, 80], sizes = [2, 16, 8], strides = [1, 1, 1]} : vector<2x16x96xf32> to vector<2x16x8xf32>
    "tpu.trace_start"() <{level = 10 : i32, message = "bqd,bkd->bqk"}> : () -> ()
    %cst_20 = arith.constant dense<0.000000e+00> : vector<2x16x16xf32>
    %57 = tpu.matmul %54, %55, %cst_20 {dimension_numbers = #tpu.dot_dimension_numbers<[2], [2], [1], [1], [0, 0, 0, 1, 1, 1], [0], [0]>} : vector<2x16x8xf32>, vector<2x16x8xf32>, vector<2x16x16xf32> -> vector<2x16x16xf32>
    "tpu.trace_stop"() : () -> ()
    %cst_21 = arith.constant 0.353553385 : f32
    %58 = vector.broadcast %cst_21 : f32 to vector<2x16x16xf32>
    %59 = arith.mulf %57, %58 : vector<2x16x16xf32>
    %60 = vector.broadcast %5 : vector<1x1x16xf32> to vector<2x16x16xf32>
    %61 = arith.addf %59, %60 : vector<2x16x16xf32>
    %cst_22 = arith.constant dense<0xFF800000> : vector<2x16xf32>
    %62 = vector.multi_reduction <maximumf>, %61, %cst_22 [2] : vector<2x16x16xf32> to vector<2x16xf32>
    %63 = vector.shape_cast %62 : vector<2x16xf32> to vector<2x16x1xf32>
    %64 = vector.broadcast %63 : vector<2x16x1xf32> to vector<2x16x16xf32>
    %65 = arith.subf %61, %64 : vector<2x16x16xf32>
    %66 = math.exp %65 : vector<2x16x16xf32>
    %cst_23 = arith.constant dense<0.000000e+00> : vector<2x16xf32>
    %67 = vector.multi_reduction <add>, %66, %cst_23 [2] : vector<2x16x16xf32> to vector<2x16xf32>
    %68 = vector.shape_cast %67 : vector<2x16xf32> to vector<2x16x1xf32>
    %69 = tpu.reciprocal %68 {approx = true} : vector<2x16x1xf32> -> vector<2x16x1xf32>
    %70 = vector.broadcast %69 : vector<2x16x1xf32> to vector<2x16x16xf32>
    %71 = arith.mulf %66, %70 : vector<2x16x16xf32>
    "tpu.trace_start"() <{level = 10 : i32, message = "bqk,bkd->bqd"}> : () -> ()
    %cst_24 = arith.constant dense<0.000000e+00> : vector<2x16x8xf32>
    %72 = tpu.matmul %71, %56, %cst_24 {dimension_numbers = #tpu.dot_dimension_numbers<[2], [1], [1], [2], [0, 0, 0, 1, 1, 2], [0], [0]>} : vector<2x16x16xf32>, vector<2x16x8xf32>, vector<2x16x8xf32> -> vector<2x16x8xf32>
    "tpu.trace_stop"() : () -> ()
    %73 = vector.extract_strided_slice %15 {offsets = [0, 0, 24], sizes = [2, 16, 8], strides = [1, 1, 1]} : vector<2x16x96xf32> to vector<2x16x8xf32>
    %74 = vector.extract_strided_slice %15 {offsets = [0, 0, 56], sizes = [2, 16, 8], strides = [1, 1, 1]} : vector<2x16x96xf32> to vector<2x16x8xf32>
    %75 = vector.extract_strided_slice %15 {offsets = [0, 0, 88], sizes = [2, 16, 8], strides = [1, 1, 1]} : vector<2x16x96xf32> to vector<2x16x8xf32>
    "tpu.trace_start"() <{level = 10 : i32, message = "bqd,bkd->bqk"}> : () -> ()
    %cst_25 = arith.constant dense<0.000000e+00> : vector<2x16x16xf32>
    %76 = tpu.matmul %73, %74, %cst_25 {dimension_numbers = #tpu.dot_dimension_numbers<[2], [2], [1], [1], [0, 0, 0, 1, 1, 1], [0], [0]>} : vector<2x16x8xf32>, vector<2x16x8xf32>, vector<2x16x16xf32> -> vector<2x16x16xf32>
    "tpu.trace_stop"() : () -> ()
    %cst_26 = arith.constant 0.353553385 : f32
    %77 = vector.broadcast %cst_26 : f32 to vector<2x16x16xf32>
    %78 = arith.mulf %76, %77 : vector<2x16x16xf32>
    %79 = vector.broadcast %5 : vector<1x1x16xf32> to vector<2x16x16xf32>
    %80 = arith.addf %78, %79 : vector<2x16x16xf32>
    %cst_27 = arith.constant dense<0xFF800000> : vector<2x16xf32>
    %81 = vector.multi_reduction <maximumf>, %80, %cst_27 [2] : vector<2x16x16xf32> to vector<2x16xf32>
    %82 = vector.shape_cast %81 : vector<2x16xf32> to vector<2x16x1xf32>
    %83 = vector.broadcast %82 : vector<2x16x1xf32> to vector<2x16x16xf32>
    %84 = arith.subf %80, %83 : vector<2x16x16xf32>
    %85 = math.exp %84 : vector<2x16x16xf32>
    %cst_28 = arith.constant dense<0.000000e+00> : vector<2x16xf32>
    %86 = vector.multi_reduction <add>, %85, %cst_28 [2] : vector<2x16x16xf32> to vector<2x16xf32>
    %87 = vector.shape_cast %86 : vector<2x16xf32> to vector<2x16x1xf32>
    %88 = tpu.reciprocal %87 {approx = true} : vector<2x16x1xf32> -> vector<2x16x1xf32>
    %89 = vector.broadcast %88 : vector<2x16x1xf32> to vector<2x16x16xf32>
    %90 = arith.mulf %85, %89 : vector<2x16x16xf32>
    "tpu.trace_start"() <{level = 10 : i32, message = "bqk,bkd->bqd"}> : () -> ()
    %cst_29 = arith.constant dense<0.000000e+00> : vector<2x16x8xf32>
    %91 = tpu.matmul %90, %75, %cst_29 {dimension_numbers = #tpu.dot_dimension_numbers<[2], [1], [1], [2], [0, 0, 0, 1, 1, 2], [0], [0]>} : vector<2x16x16xf32>, vector<2x16x8xf32>, vector<2x16x8xf32> -> vector<2x16x8xf32>
    "tpu.trace_stop"() : () -> ()
    %92 = tpu.concatenate %34, %53, %72, %91 in 2 : vector<2x16x8xf32>, vector<2x16x8xf32>, vector<2x16x8xf32>, vector<2x16x8xf32> -> vector<2x16x32xf32>
    %93 = vector.shape_cast %92 : vector<2x16x32xf32> to vector<32x32xf32>
    %c0_30 = arith.constant 0 : index
    %c0_31 = arith.constant 0 : index
    %c0_32 = arith.constant 0 : index
    %94 = vector.load %arg4[%c0_30, %c0_31, %c0_32] : memref<2x32x32xf32, #tpu.memory_space<vmem>>, vector<1x32x32xf32>
    %95 = vector.shape_cast %94 : vector<1x32x32xf32> to vector<32x32xf32>
    %cst_33 = arith.constant dense<0.000000e+00> : vector<32x32xf32>
    %96 = tpu.matmul %93, %95, %cst_33 {dimension_numbers = #tpu.dot_dimension_numbers<[1], [0], [0], [1], [0, 0, 1, 1], [], []>} : vector<32x32xf32>, vector<32x32xf32>, vector<32x32xf32> -> vector<32x32xf32>
    %c0_34 = arith.constant 0 : index
    %c0_35 = arith.constant 0 : index
    %c0_36 = arith.constant 0 : index
    %97 = vector.load %arg5[%c0_34, %c0_35, %c0_36] : memref<2x1x32xf32, #tpu.memory_space<vmem>>, vector<1x1x32xf32>
    %98 = vector.shape_cast %97 : vector<1x1x32xf32> to vector<1x32xf32>
    %99 = vector.broadcast %98 : vector<1x32xf32> to vector<32x32xf32>
    %100 = arith.addf %96, %99 : vector<32x32xf32>
    %101 = arith.addf %7, %100 : vector<32x32xf32>
    %c0_37 = arith.constant 0 : index
    %c0_38 = arith.constant 0 : index
    %c0_39 = arith.constant 0 : index
    %102 = vector.load %arg6[%c0_37, %c0_38, %c0_39] : memref<2x1x32xf32, #tpu.memory_space<vmem>>, vector<1x1x32xf32>
    %103 = vector.shape_cast %102 : vector<1x1x32xf32> to vector<1x32xf32>
    %c0_40 = arith.constant 0 : index
    %c0_41 = arith.constant 0 : index
    %c0_42 = arith.constant 0 : index
    %104 = vector.load %arg7[%c0_40, %c0_41, %c0_42] : memref<2x1x32xf32, #tpu.memory_space<vmem>>, vector<1x1x32xf32>
    %105 = vector.shape_cast %104 : vector<1x1x32xf32> to vector<1x32xf32>
    %cst_43 = arith.constant dense<0.000000e+00> : vector<32xf32>
    %106 = vector.multi_reduction <add>, %101, %cst_43 [1] : vector<32x32xf32> to vector<32xf32>
    %107 = vector.shape_cast %106 : vector<32xf32> to vector<32x1xf32>
    %cst_44 = arith.constant 3.200000e+01 : f32
    %108 = vector.broadcast %cst_44 : f32 to vector<32x1xf32>
    %109 = arith.divf %107, %108 : vector<32x1xf32>
    %110 = vector.broadcast %109 : vector<32x1xf32> to vector<32x32xf32>
    %111 = arith.subf %101, %110 : vector<32x32xf32>
    %112 = arith.mulf %111, %111 : vector<32x32xf32>
    %cst_45 = arith.constant dense<0.000000e+00> : vector<32xf32>
    %113 = vector.multi_reduction <add>, %112, %cst_45 [1] : vector<32x32xf32> to vector<32xf32>
    %114 = vector.shape_cast %113 : vector<32xf32> to vector<32x1xf32>
    %cst_46 = arith.constant 3.200000e+01 : f32
    %115 = vector.broadcast %cst_46 : f32 to vector<32x1xf32>
    %116 = arith.divf %114, %115 : vector<32x1xf32>
    %cst_47 = arith.constant 9.99999974E-6 : f32
    %117 = vector.broadcast %cst_47 : f32 to vector<32x1xf32>
    %118 = arith.addf %116, %117 : vector<32x1xf32>
    %119 = math.rsqrt %118 : vector<32x1xf32>
    %120 = vector.broadcast %119 : vector<32x1xf32> to vector<32x32xf32>
    %121 = arith.mulf %111, %120 : vector<32x32xf32>
    %122 = vector.broadcast %103 : vector<1x32xf32> to vector<32x32xf32>
    %123 = arith.mulf %121, %122 : vector<32x32xf32>
    %124 = vector.broadcast %105 : vector<1x32xf32> to vector<32x32xf32>
    %125 = arith.addf %123, %124 : vector<32x32xf32>
    %c0_48 = arith.constant 0 : index
    %c0_49 = arith.constant 0 : index
    %c0_50 = arith.constant 0 : index
    %126 = vector.load %arg8[%c0_48, %c0_49, %c0_50] : memref<2x32x256xf32, #tpu.memory_space<vmem>>, vector<1x32x256xf32>
    %127 = vector.shape_cast %126 : vector<1x32x256xf32> to vector<32x256xf32>
    %cst_51 = arith.constant dense<0.000000e+00> : vector<32x256xf32>
    %128 = tpu.matmul %125, %127, %cst_51 {dimension_numbers = #tpu.dot_dimension_numbers<[1], [0], [0], [1], [0, 0, 1, 1], [], []>} : vector<32x32xf32>, vector<32x256xf32>, vector<32x256xf32> -> vector<32x256xf32>
    %c0_52 = arith.constant 0 : index
    %c0_53 = arith.constant 0 : index
    %c0_54 = arith.constant 0 : index
    %129 = vector.load %arg9[%c0_52, %c0_53, %c0_54] : memref<2x1x256xf32, #tpu.memory_space<vmem>>, vector<1x1x256xf32>
    %130 = vector.shape_cast %129 : vector<1x1x256xf32> to vector<1x256xf32>
    %131 = vector.broadcast %130 : vector<1x256xf32> to vector<32x256xf32>
    %132 = arith.addf %128, %131 : vector<32x256xf32>
    %cst_55 = arith.constant 5.000000e-01 : f32
    %133 = vector.broadcast %cst_55 : f32 to vector<32x256xf32>
    %134 = arith.mulf %133, %132 : vector<32x256xf32>
    %cst_56 = arith.constant 4.471500e-02 : f32
    %135 = vector.broadcast %cst_56 : f32 to vector<32x256xf32>
    %136 = arith.mulf %135, %132 : vector<32x256xf32>
    %137 = arith.mulf %136, %132 : vector<32x256xf32>
    %138 = arith.mulf %137, %132 : vector<32x256xf32>
    %139 = arith.addf %132, %138 : vector<32x256xf32>
    %cst_57 = arith.constant 0.797884583 : f32
    %140 = vector.broadcast %cst_57 : f32 to vector<32x256xf32>
    %141 = arith.mulf %140, %139 : vector<32x256xf32>
    %142 = math.tanh %141 : vector<32x256xf32>
    %cst_58 = arith.constant 1.000000e+00 : f32
    %143 = vector.broadcast %cst_58 : f32 to vector<32x256xf32>
    %144 = arith.addf %143, %142 : vector<32x256xf32>
    %145 = arith.mulf %134, %144 : vector<32x256xf32>
    %c0_59 = arith.constant 0 : index
    %c0_60 = arith.constant 0 : index
    %c0_61 = arith.constant 0 : index
    %146 = vector.load %arg10[%c0_59, %c0_60, %c0_61] : memref<2x256x32xf32, #tpu.memory_space<vmem>>, vector<1x256x32xf32>
    %147 = vector.shape_cast %146 : vector<1x256x32xf32> to vector<256x32xf32>
    %cst_62 = arith.constant dense<0.000000e+00> : vector<32x32xf32>
    %148 = tpu.matmul %145, %147, %cst_62 {dimension_numbers = #tpu.dot_dimension_numbers<[1], [0], [0], [1], [0, 0, 1, 1], [], []>} : vector<32x256xf32>, vector<256x32xf32>, vector<32x32xf32> -> vector<32x32xf32>
    %c0_63 = arith.constant 0 : index
    %c0_64 = arith.constant 0 : index
    %c0_65 = arith.constant 0 : index
    %149 = vector.load %arg11[%c0_63, %c0_64, %c0_65] : memref<2x1x32xf32, #tpu.memory_space<vmem>>, vector<1x1x32xf32>
    %150 = vector.shape_cast %149 : vector<1x1x32xf32> to vector<1x32xf32>
    %151 = vector.broadcast %150 : vector<1x32xf32> to vector<32x32xf32>
    %152 = arith.addf %148, %151 : vector<32x32xf32>
    %153 = arith.addf %125, %152 : vector<32x32xf32>
    %c0_66 = arith.constant 0 : index
    %c0_67 = arith.constant 0 : index
    %c0_68 = arith.constant 0 : index
    %154 = vector.load %arg12[%c0_66, %c0_67, %c0_68] : memref<2x1x32xf32, #tpu.memory_space<vmem>>, vector<1x1x32xf32>
    %155 = vector.shape_cast %154 : vector<1x1x32xf32> to vector<1x32xf32>
    %c0_69 = arith.constant 0 : index
    %c0_70 = arith.constant 0 : index
    %c0_71 = arith.constant 0 : index
    %156 = vector.load %arg13[%c0_69, %c0_70, %c0_71] : memref<2x1x32xf32, #tpu.memory_space<vmem>>, vector<1x1x32xf32>
    %157 = vector.shape_cast %156 : vector<1x1x32xf32> to vector<1x32xf32>
    %cst_72 = arith.constant dense<0.000000e+00> : vector<32xf32>
    %158 = vector.multi_reduction <add>, %153, %cst_72 [1] : vector<32x32xf32> to vector<32xf32>
    %159 = vector.shape_cast %158 : vector<32xf32> to vector<32x1xf32>
    %cst_73 = arith.constant 3.200000e+01 : f32
    %160 = vector.broadcast %cst_73 : f32 to vector<32x1xf32>
    %161 = arith.divf %159, %160 : vector<32x1xf32>
    %162 = vector.broadcast %161 : vector<32x1xf32> to vector<32x32xf32>
    %163 = arith.subf %153, %162 : vector<32x32xf32>
    %164 = arith.mulf %163, %163 : vector<32x32xf32>
    %cst_74 = arith.constant dense<0.000000e+00> : vector<32xf32>
    %165 = vector.multi_reduction <add>, %164, %cst_74 [1] : vector<32x32xf32> to vector<32xf32>
    %166 = vector.shape_cast %165 : vector<32xf32> to vector<32x1xf32>
    %cst_75 = arith.constant 3.200000e+01 : f32
    %167 = vector.broadcast %cst_75 : f32 to vector<32x1xf32>
    %168 = arith.divf %166, %167 : vector<32x1xf32>
    %cst_76 = arith.constant 9.99999974E-6 : f32
    %169 = vector.broadcast %cst_76 : f32 to vector<32x1xf32>
    %170 = arith.addf %168, %169 : vector<32x1xf32>
    %171 = math.rsqrt %170 : vector<32x1xf32>
    %172 = vector.broadcast %171 : vector<32x1xf32> to vector<32x32xf32>
    %173 = arith.mulf %163, %172 : vector<32x32xf32>
    %174 = vector.broadcast %155 : vector<1x32xf32> to vector<32x32xf32>
    %175 = arith.mulf %173, %174 : vector<32x32xf32>
    %176 = vector.broadcast %157 : vector<1x32xf32> to vector<32x32xf32>
    %177 = arith.addf %175, %176 : vector<32x32xf32>
    %c1 = arith.constant 1 : index
    %c0_77 = arith.constant 0 : index
    %c0_78 = arith.constant 0 : index
    %178 = vector.load %arg2[%c1, %c0_77, %c0_78] : memref<2x32x96xf32, #tpu.memory_space<vmem>>, vector<1x32x96xf32>
    %179 = vector.shape_cast %178 : vector<1x32x96xf32> to vector<32x96xf32>
    %cst_79 = arith.constant dense<0.000000e+00> : vector<32x96xf32>
    %180 = tpu.matmul %177, %179, %cst_79 {dimension_numbers = #tpu.dot_dimension_numbers<[1], [0], [0], [1], [0, 0, 1, 1], [], []>} : vector<32x32xf32>, vector<32x96xf32>, vector<32x96xf32> -> vector<32x96xf32>
    %c1_80 = arith.constant 1 : index
    %c0_81 = arith.constant 0 : index
    %c0_82 = arith.constant 0 : index
    %181 = vector.load %arg3[%c1_80, %c0_81, %c0_82] : memref<2x1x96xf32, #tpu.memory_space<vmem>>, vector<1x1x96xf32>
    %182 = vector.shape_cast %181 : vector<1x1x96xf32> to vector<1x96xf32>
    %183 = vector.broadcast %182 : vector<1x96xf32> to vector<32x96xf32>
    %184 = arith.addf %180, %183 : vector<32x96xf32>
    %185 = vector.shape_cast %184 : vector<32x96xf32> to vector<2x16x96xf32>
    %186 = vector.extract_strided_slice %185 {offsets = [0, 0, 0], sizes = [2, 16, 8], strides = [1, 1, 1]} : vector<2x16x96xf32> to vector<2x16x8xf32>
    %187 = vector.extract_strided_slice %185 {offsets = [0, 0, 32], sizes = [2, 16, 8], strides = [1, 1, 1]} : vector<2x16x96xf32> to vector<2x16x8xf32>
    %188 = vector.extract_strided_slice %185 {offsets = [0, 0, 64], sizes = [2, 16, 8], strides = [1, 1, 1]} : vector<2x16x96xf32> to vector<2x16x8xf32>
    "tpu.trace_start"() <{level = 10 : i32, message = "bqd,bkd->bqk"}> : () -> ()
    %cst_83 = arith.constant dense<0.000000e+00> : vector<2x16x16xf32>
    %189 = tpu.matmul %186, %187, %cst_83 {dimension_numbers = #tpu.dot_dimension_numbers<[2], [2], [1], [1], [0, 0, 0, 1, 1, 1], [0], [0]>} : vector<2x16x8xf32>, vector<2x16x8xf32>, vector<2x16x16xf32> -> vector<2x16x16xf32>
    "tpu.trace_stop"() : () -> ()
    %cst_84 = arith.constant 0.353553385 : f32
    %190 = vector.broadcast %cst_84 : f32 to vector<2x16x16xf32>
    %191 = arith.mulf %189, %190 : vector<2x16x16xf32>
    %192 = vector.broadcast %5 : vector<1x1x16xf32> to vector<2x16x16xf32>
    %193 = arith.addf %191, %192 : vector<2x16x16xf32>
    %cst_85 = arith.constant dense<0xFF800000> : vector<2x16xf32>
    %194 = vector.multi_reduction <maximumf>, %193, %cst_85 [2] : vector<2x16x16xf32> to vector<2x16xf32>
    %195 = vector.shape_cast %194 : vector<2x16xf32> to vector<2x16x1xf32>
    %196 = vector.broadcast %195 : vector<2x16x1xf32> to vector<2x16x16xf32>
    %197 = arith.subf %193, %196 : vector<2x16x16xf32>
    %198 = math.exp %197 : vector<2x16x16xf32>
    %cst_86 = arith.constant dense<0.000000e+00> : vector<2x16xf32>
    %199 = vector.multi_reduction <add>, %198, %cst_86 [2] : vector<2x16x16xf32> to vector<2x16xf32>
    %200 = vector.shape_cast %199 : vector<2x16xf32> to vector<2x16x1xf32>
    %201 = tpu.reciprocal %200 {approx = true} : vector<2x16x1xf32> -> vector<2x16x1xf32>
    %202 = vector.broadcast %201 : vector<2x16x1xf32> to vector<2x16x16xf32>
    %203 = arith.mulf %198, %202 : vector<2x16x16xf32>
    "tpu.trace_start"() <{level = 10 : i32, message = "bqk,bkd->bqd"}> : () -> ()
    %cst_87 = arith.constant dense<0.000000e+00> : vector<2x16x8xf32>
    %204 = tpu.matmul %203, %188, %cst_87 {dimension_numbers = #tpu.dot_dimension_numbers<[2], [1], [1], [2], [0, 0, 0, 1, 1, 2], [0], [0]>} : vector<2x16x16xf32>, vector<2x16x8xf32>, vector<2x16x8xf32> -> vector<2x16x8xf32>
    "tpu.trace_stop"() : () -> ()
    %205 = vector.extract_strided_slice %185 {offsets = [0, 0, 8], sizes = [2, 16, 8], strides = [1, 1, 1]} : vector<2x16x96xf32> to vector<2x16x8xf32>
    %206 = vector.extract_strided_slice %185 {offsets = [0, 0, 40], sizes = [2, 16, 8], strides = [1, 1, 1]} : vector<2x16x96xf32> to vector<2x16x8xf32>
    %207 = vector.extract_strided_slice %185 {offsets = [0, 0, 72], sizes = [2, 16, 8], strides = [1, 1, 1]} : vector<2x16x96xf32> to vector<2x16x8xf32>
    "tpu.trace_start"() <{level = 10 : i32, message = "bqd,bkd->bqk"}> : () -> ()
    %cst_88 = arith.constant dense<0.000000e+00> : vector<2x16x16xf32>
    %208 = tpu.matmul %205, %206, %cst_88 {dimension_numbers = #tpu.dot_dimension_numbers<[2], [2], [1], [1], [0, 0, 0, 1, 1, 1], [0], [0]>} : vector<2x16x8xf32>, vector<2x16x8xf32>, vector<2x16x16xf32> -> vector<2x16x16xf32>
    "tpu.trace_stop"() : () -> ()
    %cst_89 = arith.constant 0.353553385 : f32
    %209 = vector.broadcast %cst_89 : f32 to vector<2x16x16xf32>
    %210 = arith.mulf %208, %209 : vector<2x16x16xf32>
    %211 = vector.broadcast %5 : vector<1x1x16xf32> to vector<2x16x16xf32>
    %212 = arith.addf %210, %211 : vector<2x16x16xf32>
    %cst_90 = arith.constant dense<0xFF800000> : vector<2x16xf32>
    %213 = vector.multi_reduction <maximumf>, %212, %cst_90 [2] : vector<2x16x16xf32> to vector<2x16xf32>
    %214 = vector.shape_cast %213 : vector<2x16xf32> to vector<2x16x1xf32>
    %215 = vector.broadcast %214 : vector<2x16x1xf32> to vector<2x16x16xf32>
    %216 = arith.subf %212, %215 : vector<2x16x16xf32>
    %217 = math.exp %216 : vector<2x16x16xf32>
    %cst_91 = arith.constant dense<0.000000e+00> : vector<2x16xf32>
    %218 = vector.multi_reduction <add>, %217, %cst_91 [2] : vector<2x16x16xf32> to vector<2x16xf32>
    %219 = vector.shape_cast %218 : vector<2x16xf32> to vector<2x16x1xf32>
    %220 = tpu.reciprocal %219 {approx = true} : vector<2x16x1xf32> -> vector<2x16x1xf32>
    %221 = vector.broadcast %220 : vector<2x16x1xf32> to vector<2x16x16xf32>
    %222 = arith.mulf %217, %221 : vector<2x16x16xf32>
    "tpu.trace_start"() <{level = 10 : i32, message = "bqk,bkd->bqd"}> : () -> ()
    %cst_92 = arith.constant dense<0.000000e+00> : vector<2x16x8xf32>
    %223 = tpu.matmul %222, %207, %cst_92 {dimension_numbers = #tpu.dot_dimension_numbers<[2], [1], [1], [2], [0, 0, 0, 1, 1, 2], [0], [0]>} : vector<2x16x16xf32>, vector<2x16x8xf32>, vector<2x16x8xf32> -> vector<2x16x8xf32>
    "tpu.trace_stop"() : () -> ()
    %224 = vector.extract_strided_slice %185 {offsets = [0, 0, 16], sizes = [2, 16, 8], strides = [1, 1, 1]} : vector<2x16x96xf32> to vector<2x16x8xf32>
    %225 = vector.extract_strided_slice %185 {offsets = [0, 0, 48], sizes = [2, 16, 8], strides = [1, 1, 1]} : vector<2x16x96xf32> to vector<2x16x8xf32>
    %226 = vector.extract_strided_slice %185 {offsets = [0, 0, 80], sizes = [2, 16, 8], strides = [1, 1, 1]} : vector<2x16x96xf32> to vector<2x16x8xf32>
    "tpu.trace_start"() <{level = 10 : i32, message = "bqd,bkd->bqk"}> : () -> ()
    %cst_93 = arith.constant dense<0.000000e+00> : vector<2x16x16xf32>
    %227 = tpu.matmul %224, %225, %cst_93 {dimension_numbers = #tpu.dot_dimension_numbers<[2], [2], [1], [1], [0, 0, 0, 1, 1, 1], [0], [0]>} : vector<2x16x8xf32>, vector<2x16x8xf32>, vector<2x16x16xf32> -> vector<2x16x16xf32>
    "tpu.trace_stop"() : () -> ()
    %cst_94 = arith.constant 0.353553385 : f32
    %228 = vector.broadcast %cst_94 : f32 to vector<2x16x16xf32>
    %229 = arith.mulf %227, %228 : vector<2x16x16xf32>
    %230 = vector.broadcast %5 : vector<1x1x16xf32> to vector<2x16x16xf32>
    %231 = arith.addf %229, %230 : vector<2x16x16xf32>
    %cst_95 = arith.constant dense<0xFF800000> : vector<2x16xf32>
    %232 = vector.multi_reduction <maximumf>, %231, %cst_95 [2] : vector<2x16x16xf32> to vector<2x16xf32>
    %233 = vector.shape_cast %232 : vector<2x16xf32> to vector<2x16x1xf32>
    %234 = vector.broadcast %233 : vector<2x16x1xf32> to vector<2x16x16xf32>
    %235 = arith.subf %231, %234 : vector<2x16x16xf32>
    %236 = math.exp %235 : vector<2x16x16xf32>
    %cst_96 = arith.constant dense<0.000000e+00> : vector<2x16xf32>
    %237 = vector.multi_reduction <add>, %236, %cst_96 [2] : vector<2x16x16xf32> to vector<2x16xf32>
    %238 = vector.shape_cast %237 : vector<2x16xf32> to vector<2x16x1xf32>
    %239 = tpu.reciprocal %238 {approx = true} : vector<2x16x1xf32> -> vector<2x16x1xf32>
    %240 = vector.broadcast %239 : vector<2x16x1xf32> to vector<2x16x16xf32>
    %241 = arith.mulf %236, %240 : vector<2x16x16xf32>
    "tpu.trace_start"() <{level = 10 : i32, message = "bqk,bkd->bqd"}> : () -> ()
    %cst_97 = arith.constant dense<0.000000e+00> : vector<2x16x8xf32>
    %242 = tpu.matmul %241, %226, %cst_97 {dimension_numbers = #tpu.dot_dimension_numbers<[2], [1], [1], [2], [0, 0, 0, 1, 1, 2], [0], [0]>} : vector<2x16x16xf32>, vector<2x16x8xf32>, vector<2x16x8xf32> -> vector<2x16x8xf32>
    "tpu.trace_stop"() : () -> ()
    %243 = vector.extract_strided_slice %185 {offsets = [0, 0, 24], sizes = [2, 16, 8], strides = [1, 1, 1]} : vector<2x16x96xf32> to vector<2x16x8xf32>
    %244 = vector.extract_strided_slice %185 {offsets = [0, 0, 56], sizes = [2, 16, 8], strides = [1, 1, 1]} : vector<2x16x96xf32> to vector<2x16x8xf32>
    %245 = vector.extract_strided_slice %185 {offsets = [0, 0, 88], sizes = [2, 16, 8], strides = [1, 1, 1]} : vector<2x16x96xf32> to vector<2x16x8xf32>
    "tpu.trace_start"() <{level = 10 : i32, message = "bqd,bkd->bqk"}> : () -> ()
    %cst_98 = arith.constant dense<0.000000e+00> : vector<2x16x16xf32>
    %246 = tpu.matmul %243, %244, %cst_98 {dimension_numbers = #tpu.dot_dimension_numbers<[2], [2], [1], [1], [0, 0, 0, 1, 1, 1], [0], [0]>} : vector<2x16x8xf32>, vector<2x16x8xf32>, vector<2x16x16xf32> -> vector<2x16x16xf32>
    "tpu.trace_stop"() : () -> ()
    %cst_99 = arith.constant 0.353553385 : f32
    %247 = vector.broadcast %cst_99 : f32 to vector<2x16x16xf32>
    %248 = arith.mulf %246, %247 : vector<2x16x16xf32>
    %249 = vector.broadcast %5 : vector<1x1x16xf32> to vector<2x16x16xf32>
    %250 = arith.addf %248, %249 : vector<2x16x16xf32>
    %cst_100 = arith.constant dense<0xFF800000> : vector<2x16xf32>
    %251 = vector.multi_reduction <maximumf>, %250, %cst_100 [2] : vector<2x16x16xf32> to vector<2x16xf32>
    %252 = vector.shape_cast %251 : vector<2x16xf32> to vector<2x16x1xf32>
    %253 = vector.broadcast %252 : vector<2x16x1xf32> to vector<2x16x16xf32>
    %254 = arith.subf %250, %253 : vector<2x16x16xf32>
    %255 = math.exp %254 : vector<2x16x16xf32>
    %cst_101 = arith.constant dense<0.000000e+00> : vector<2x16xf32>
    %256 = vector.multi_reduction <add>, %255, %cst_101 [2] : vector<2x16x16xf32> to vector<2x16xf32>
    %257 = vector.shape_cast %256 : vector<2x16xf32> to vector<2x16x1xf32>
    %258 = tpu.reciprocal %257 {approx = true} : vector<2x16x1xf32> -> vector<2x16x1xf32>
    %259 = vector.broadcast %258 : vector<2x16x1xf32> to vector<2x16x16xf32>
    %260 = arith.mulf %255, %259 : vector<2x16x16xf32>
    "tpu.trace_start"() <{level = 10 : i32, message = "bqk,bkd->bqd"}> : () -> ()
    %cst_102 = arith.constant dense<0.000000e+00> : vector<2x16x8xf32>
    %261 = tpu.matmul %260, %245, %cst_102 {dimension_numbers = #tpu.dot_dimension_numbers<[2], [1], [1], [2], [0, 0, 0, 1, 1, 2], [0], [0]>} : vector<2x16x16xf32>, vector<2x16x8xf32>, vector<2x16x8xf32> -> vector<2x16x8xf32>
    "tpu.trace_stop"() : () -> ()
    %262 = tpu.concatenate %204, %223, %242, %261 in 2 : vector<2x16x8xf32>, vector<2x16x8xf32>, vector<2x16x8xf32>, vector<2x16x8xf32> -> vector<2x16x32xf32>
    %263 = vector.shape_cast %262 : vector<2x16x32xf32> to vector<32x32xf32>
    %c1_103 = arith.constant 1 : index
    %c0_104 = arith.constant 0 : index
    %c0_105 = arith.constant 0 : index
    %264 = vector.load %arg4[%c1_103, %c0_104, %c0_105] : memref<2x32x32xf32, #tpu.memory_space<vmem>>, vector<1x32x32xf32>
    %265 = vector.shape_cast %264 : vector<1x32x32xf32> to vector<32x32xf32>
    %cst_106 = arith.constant dense<0.000000e+00> : vector<32x32xf32>
    %266 = tpu.matmul %263, %265, %cst_106 {dimension_numbers = #tpu.dot_dimension_numbers<[1], [0], [0], [1], [0, 0, 1, 1], [], []>} : vector<32x32xf32>, vector<32x32xf32>, vector<32x32xf32> -> vector<32x32xf32>
    %c1_107 = arith.constant 1 : index
    %c0_108 = arith.constant 0 : index
    %c0_109 = arith.constant 0 : index
    %267 = vector.load %arg5[%c1_107, %c0_108, %c0_109] : memref<2x1x32xf32, #tpu.memory_space<vmem>>, vector<1x1x32xf32>
    %268 = vector.shape_cast %267 : vector<1x1x32xf32> to vector<1x32xf32>
    %269 = vector.broadcast %268 : vector<1x32xf32> to vector<32x32xf32>
    %270 = arith.addf %266, %269 : vector<32x32xf32>
    %271 = arith.addf %177, %270 : vector<32x32xf32>
    %c1_110 = arith.constant 1 : index
    %c0_111 = arith.constant 0 : index
    %c0_112 = arith.constant 0 : index
    %272 = vector.load %arg6[%c1_110, %c0_111, %c0_112] : memref<2x1x32xf32, #tpu.memory_space<vmem>>, vector<1x1x32xf32>
    %273 = vector.shape_cast %272 : vector<1x1x32xf32> to vector<1x32xf32>
    %c1_113 = arith.constant 1 : index
    %c0_114 = arith.constant 0 : index
    %c0_115 = arith.constant 0 : index
    %274 = vector.load %arg7[%c1_113, %c0_114, %c0_115] : memref<2x1x32xf32, #tpu.memory_space<vmem>>, vector<1x1x32xf32>
    %275 = vector.shape_cast %274 : vector<1x1x32xf32> to vector<1x32xf32>
    %cst_116 = arith.constant dense<0.000000e+00> : vector<32xf32>
    %276 = vector.multi_reduction <add>, %271, %cst_116 [1] : vector<32x32xf32> to vector<32xf32>
    %277 = vector.shape_cast %276 : vector<32xf32> to vector<32x1xf32>
    %cst_117 = arith.constant 3.200000e+01 : f32
    %278 = vector.broadcast %cst_117 : f32 to vector<32x1xf32>
    %279 = arith.divf %277, %278 : vector<32x1xf32>
    %280 = vector.broadcast %279 : vector<32x1xf32> to vector<32x32xf32>
    %281 = arith.subf %271, %280 : vector<32x32xf32>
    %282 = arith.mulf %281, %281 : vector<32x32xf32>
    %cst_118 = arith.constant dense<0.000000e+00> : vector<32xf32>
    %283 = vector.multi_reduction <add>, %282, %cst_118 [1] : vector<32x32xf32> to vector<32xf32>
    %284 = vector.shape_cast %283 : vector<32xf32> to vector<32x1xf32>
    %cst_119 = arith.constant 3.200000e+01 : f32
    %285 = vector.broadcast %cst_119 : f32 to vector<32x1xf32>
    %286 = arith.divf %284, %285 : vector<32x1xf32>
    %cst_120 = arith.constant 9.99999974E-6 : f32
    %287 = vector.broadcast %cst_120 : f32 to vector<32x1xf32>
    %288 = arith.addf %286, %287 : vector<32x1xf32>
    %289 = math.rsqrt %288 : vector<32x1xf32>
    %290 = vector.broadcast %289 : vector<32x1xf32> to vector<32x32xf32>
    %291 = arith.mulf %281, %290 : vector<32x32xf32>
    %292 = vector.broadcast %273 : vector<1x32xf32> to vector<32x32xf32>
    %293 = arith.mulf %291, %292 : vector<32x32xf32>
    %294 = vector.broadcast %275 : vector<1x32xf32> to vector<32x32xf32>
    %295 = arith.addf %293, %294 : vector<32x32xf32>
    %c1_121 = arith.constant 1 : index
    %c0_122 = arith.constant 0 : index
    %c0_123 = arith.constant 0 : index
    %296 = vector.load %arg8[%c1_121, %c0_122, %c0_123] : memref<2x32x256xf32, #tpu.memory_space<vmem>>, vector<1x32x256xf32>
    %297 = vector.shape_cast %296 : vector<1x32x256xf32> to vector<32x256xf32>
    %cst_124 = arith.constant dense<0.000000e+00> : vector<32x256xf32>
    %298 = tpu.matmul %295, %297, %cst_124 {dimension_numbers = #tpu.dot_dimension_numbers<[1], [0], [0], [1], [0, 0, 1, 1], [], []>} : vector<32x32xf32>, vector<32x256xf32>, vector<32x256xf32> -> vector<32x256xf32>
    %c1_125 = arith.constant 1 : index
    %c0_126 = arith.constant 0 : index
    %c0_127 = arith.constant 0 : index
    %299 = vector.load %arg9[%c1_125, %c0_126, %c0_127] : memref<2x1x256xf32, #tpu.memory_space<vmem>>, vector<1x1x256xf32>
    %300 = vector.shape_cast %299 : vector<1x1x256xf32> to vector<1x256xf32>
    %301 = vector.broadcast %300 : vector<1x256xf32> to vector<32x256xf32>
    %302 = arith.addf %298, %301 : vector<32x256xf32>
    %cst_128 = arith.constant 5.000000e-01 : f32
    %303 = vector.broadcast %cst_128 : f32 to vector<32x256xf32>
    %304 = arith.mulf %303, %302 : vector<32x256xf32>
    %cst_129 = arith.constant 4.471500e-02 : f32
    %305 = vector.broadcast %cst_129 : f32 to vector<32x256xf32>
    %306 = arith.mulf %305, %302 : vector<32x256xf32>
    %307 = arith.mulf %306, %302 : vector<32x256xf32>
    %308 = arith.mulf %307, %302 : vector<32x256xf32>
    %309 = arith.addf %302, %308 : vector<32x256xf32>
    %cst_130 = arith.constant 0.797884583 : f32
    %310 = vector.broadcast %cst_130 : f32 to vector<32x256xf32>
    %311 = arith.mulf %310, %309 : vector<32x256xf32>
    %312 = math.tanh %311 : vector<32x256xf32>
    %cst_131 = arith.constant 1.000000e+00 : f32
    %313 = vector.broadcast %cst_131 : f32 to vector<32x256xf32>
    %314 = arith.addf %313, %312 : vector<32x256xf32>
    %315 = arith.mulf %304, %314 : vector<32x256xf32>
    %c1_132 = arith.constant 1 : index
    %c0_133 = arith.constant 0 : index
    %c0_134 = arith.constant 0 : index
    %316 = vector.load %arg10[%c1_132, %c0_133, %c0_134] : memref<2x256x32xf32, #tpu.memory_space<vmem>>, vector<1x256x32xf32>
    %317 = vector.shape_cast %316 : vector<1x256x32xf32> to vector<256x32xf32>
    %cst_135 = arith.constant dense<0.000000e+00> : vector<32x32xf32>
    %318 = tpu.matmul %315, %317, %cst_135 {dimension_numbers = #tpu.dot_dimension_numbers<[1], [0], [0], [1], [0, 0, 1, 1], [], []>} : vector<32x256xf32>, vector<256x32xf32>, vector<32x32xf32> -> vector<32x32xf32>
    %c1_136 = arith.constant 1 : index
    %c0_137 = arith.constant 0 : index
    %c0_138 = arith.constant 0 : index
    %319 = vector.load %arg11[%c1_136, %c0_137, %c0_138] : memref<2x1x32xf32, #tpu.memory_space<vmem>>, vector<1x1x32xf32>
    %320 = vector.shape_cast %319 : vector<1x1x32xf32> to vector<1x32xf32>
    %321 = vector.broadcast %320 : vector<1x32xf32> to vector<32x32xf32>
    %322 = arith.addf %318, %321 : vector<32x32xf32>
    %323 = arith.addf %295, %322 : vector<32x32xf32>
    %c1_139 = arith.constant 1 : index
    %c0_140 = arith.constant 0 : index
    %c0_141 = arith.constant 0 : index
    %324 = vector.load %arg12[%c1_139, %c0_140, %c0_141] : memref<2x1x32xf32, #tpu.memory_space<vmem>>, vector<1x1x32xf32>
    %325 = vector.shape_cast %324 : vector<1x1x32xf32> to vector<1x32xf32>
    %c1_142 = arith.constant 1 : index
    %c0_143 = arith.constant 0 : index
    %c0_144 = arith.constant 0 : index
    %326 = vector.load %arg13[%c1_142, %c0_143, %c0_144] : memref<2x1x32xf32, #tpu.memory_space<vmem>>, vector<1x1x32xf32>
    %327 = vector.shape_cast %326 : vector<1x1x32xf32> to vector<1x32xf32>
    %cst_145 = arith.constant dense<0.000000e+00> : vector<32xf32>
    %328 = vector.multi_reduction <add>, %323, %cst_145 [1] : vector<32x32xf32> to vector<32xf32>
    %329 = vector.shape_cast %328 : vector<32xf32> to vector<32x1xf32>
    %cst_146 = arith.constant 3.200000e+01 : f32
    %330 = vector.broadcast %cst_146 : f32 to vector<32x1xf32>
    %331 = arith.divf %329, %330 : vector<32x1xf32>
    %332 = vector.broadcast %331 : vector<32x1xf32> to vector<32x32xf32>
    %333 = arith.subf %323, %332 : vector<32x32xf32>
    %334 = arith.mulf %333, %333 : vector<32x32xf32>
    %cst_147 = arith.constant dense<0.000000e+00> : vector<32xf32>
    %335 = vector.multi_reduction <add>, %334, %cst_147 [1] : vector<32x32xf32> to vector<32xf32>
    %336 = vector.shape_cast %335 : vector<32xf32> to vector<32x1xf32>
    %cst_148 = arith.constant 3.200000e+01 : f32
    %337 = vector.broadcast %cst_148 : f32 to vector<32x1xf32>
    %338 = arith.divf %336, %337 : vector<32x1xf32>
    %cst_149 = arith.constant 9.99999974E-6 : f32
    %339 = vector.broadcast %cst_149 : f32 to vector<32x1xf32>
    %340 = arith.addf %338, %339 : vector<32x1xf32>
    %341 = math.rsqrt %340 : vector<32x1xf32>
    %342 = vector.broadcast %341 : vector<32x1xf32> to vector<32x32xf32>
    %343 = arith.mulf %333, %342 : vector<32x32xf32>
    %344 = vector.broadcast %325 : vector<1x32xf32> to vector<32x32xf32>
    %345 = arith.mulf %343, %344 : vector<32x32xf32>
    %346 = vector.broadcast %327 : vector<1x32xf32> to vector<32x32xf32>
    %347 = arith.addf %345, %346 : vector<32x32xf32>
    %348 = vector.shape_cast %347 : vector<32x32xf32> to vector<2x16x32xf32>
    %349 = vector.extract_strided_slice %348 {offsets = [0, 0, 0], sizes = [2, 1, 32], strides = [1, 1, 1]} : vector<2x16x32xf32> to vector<2x1x32xf32>
    %350 = vector.shape_cast %349 : vector<2x1x32xf32> to vector<2x32xf32>
    %c0_150 = arith.constant 0 : index
    %c0_151 = arith.constant 0 : index
    %351 = vector.load %arg14[%c0_150, %c0_151] : memref<32x256xf32, #tpu.memory_space<vmem>>, vector<32x256xf32>
    %cst_152 = arith.constant dense<0.000000e+00> : vector<2x256xf32>
    %352 = tpu.matmul %350, %351, %cst_152 {dimension_numbers = #tpu.dot_dimension_numbers<[1], [0], [0], [1], [0, 0, 1, 1], [], []>} : vector<2x32xf32>, vector<32x256xf32>, vector<2x256xf32> -> vector<2x256xf32>
    %c0_153 = arith.constant 0 : index
    %c0_154 = arith.constant 0 : index
    %353 = vector.load %arg15[%c0_153, %c0_154] : memref<1x256xf32, #tpu.memory_space<vmem>>, vector<1x256xf32>
    %354 = vector.broadcast %353 : vector<1x256xf32> to vector<2x256xf32>
    %355 = arith.addf %352, %354 : vector<2x256xf32>
    %cst_155 = arith.constant 0.000000e+00 : f32
    %356 = vector.broadcast %cst_155 : f32 to vector<2x256xf32>
    %357 = arith.subf %356, %355 : vector<2x256xf32>
    %358 = math.exp %357 : vector<2x256xf32>
    %cst_156 = arith.constant 1.000000e+00 : f32
    %359 = vector.broadcast %cst_156 : f32 to vector<2x256xf32>
    %360 = arith.addf %359, %358 : vector<2x256xf32>
    %cst_157 = arith.constant 1.000000e+00 : f32
    %361 = vector.broadcast %cst_157 : f32 to vector<2x256xf32>
    %362 = arith.divf %361, %360 : vector<2x256xf32>
    %363 = arith.mulf %355, %362 : vector<2x256xf32>
    %c0_158 = arith.constant 0 : index
    %c0_159 = arith.constant 0 : index
    %364 = vector.load %arg16[%c0_158, %c0_159] : memref<256x128xf32, #tpu.memory_space<vmem>>, vector<256x128xf32>
    %cst_160 = arith.constant dense<0.000000e+00> : vector<2x128xf32>
    %365 = tpu.matmul %363, %364, %cst_160 {dimension_numbers = #tpu.dot_dimension_numbers<[1], [0], [0], [1], [0, 0, 1, 1], [], []>} : vector<2x256xf32>, vector<256x128xf32>, vector<2x128xf32> -> vector<2x128xf32>
    %c0_161 = arith.constant 0 : index
    %c0_162 = arith.constant 0 : index
    %366 = vector.load %arg17[%c0_161, %c0_162] : memref<1x128xf32, #tpu.memory_space<vmem>>, vector<1x128xf32>
    %367 = vector.broadcast %366 : vector<1x128xf32> to vector<2x128xf32>
    %368 = arith.addf %365, %367 : vector<2x128xf32>
    %c0_163 = arith.constant 0 : index
    %c0_164 = arith.constant 0 : index
    %369 = vector.load %arg18[%c0_163, %c0_164] : memref<2x128xf32, #tpu.memory_space<vmem>>, vector<2x128xf32>
    tpu.vector_store %arg18[%c0_163, %c0_164], %368 {strides = array<i32>} : memref<2x128xf32, #tpu.memory_space<vmem>>, vector<2x128xf32>,
    return
  }
  func.func @transform_0(%arg0: i32) -> (i32, i32, i32) {
    %c0_i32 = arith.constant 0 : i32
    %c0_i32_0 = arith.constant 0 : i32
    %c0_i32_1 = arith.constant 0 : i32
    return %arg0, %c0_i32, %c0_i32_0 : i32, i32, i32
  }
  func.func @transform_1(%arg0: i32) -> (i32, i32, i32) {
    %c0_i32 = arith.constant 0 : i32
    %c0_i32_0 = arith.constant 0 : i32
    %c0_i32_1 = arith.constant 0 : i32
    %c0_i32_2 = arith.constant 0 : i32
    return %c0_i32, %c0_i32_0, %c0_i32_1 : i32, i32, i32
  }
  func.func @transform_2(%arg0: i32) -> (i32, i32, i32) {
    %c0_i32 = arith.constant 0 : i32
    %c0_i32_0 = arith.constant 0 : i32
    %c0_i32_1 = arith.constant 0 : i32
    %c0_i32_2 = arith.constant 0 : i32
    return %c0_i32, %c0_i32_0, %c0_i32_1 : i32, i32, i32
  }
  func.func @transform_3(%arg0: i32) -> (i32, i32, i32) {
    %c0_i32 = arith.constant 0 : i32
    %c0_i32_0 = arith.constant 0 : i32
    %c0_i32_1 = arith.constant 0 : i32
    %c0_i32_2 = arith.constant 0 : i32
    return %c0_i32, %c0_i32_0, %c0_i32_1 : i32, i32, i32
  }
  func.func @transform_4(%arg0: i32) -> (i32, i32, i32) {
    %c0_i32 = arith.constant 0 : i32
    %c0_i32_0 = arith.constant 0 : i32
    %c0_i32_1 = arith.constant 0 : i32
    %c0_i32_2 = arith.constant 0 : i32
    return %c0_i32, %c0_i32_0, %c0_i32_1 : i32, i32, i32
  }
  func.func @transform_5(%arg0: i32) -> (i32, i32, i32) {
    %c0_i32 = arith.constant 0 : i32
    %c0_i32_0 = arith.constant 0 : i32
    %c0_i32_1 = arith.constant 0 : i32
    %c0_i32_2 = arith.constant 0 : i32
    return %c0_i32, %c0_i32_0, %c0_i32_1 : i32, i32, i32
  }
  func.func @transform_6(%arg0: i32) -> (i32, i32, i32) {
    %c0_i32 = arith.constant 0 : i32
    %c0_i32_0 = arith.constant 0 : i32
    %c0_i32_1 = arith.constant 0 : i32
    %c0_i32_2 = arith.constant 0 : i32
    return %c0_i32, %c0_i32_0, %c0_i32_1 : i32, i32, i32
  }
  func.func @transform_7(%arg0: i32) -> (i32, i32, i32) {
    %c0_i32 = arith.constant 0 : i32
    %c0_i32_0 = arith.constant 0 : i32
    %c0_i32_1 = arith.constant 0 : i32
    %c0_i32_2 = arith.constant 0 : i32
    return %c0_i32, %c0_i32_0, %c0_i32_1 : i32, i32, i32
  }
  func.func @transform_8(%arg0: i32) -> (i32, i32, i32) {
    %c0_i32 = arith.constant 0 : i32
    %c0_i32_0 = arith.constant 0 : i32
    %c0_i32_1 = arith.constant 0 : i32
    %c0_i32_2 = arith.constant 0 : i32
    return %c0_i32, %c0_i32_0, %c0_i32_1 : i32, i32, i32
  }
  func.func @transform_9(%arg0: i32) -> (i32, i32, i32) {
    %c0_i32 = arith.constant 0 : i32
    %c0_i32_0 = arith.constant 0 : i32
    %c0_i32_1 = arith.constant 0 : i32
    %c0_i32_2 = arith.constant 0 : i32
    return %c0_i32, %c0_i32_0, %c0_i32_1 : i32, i32, i32
  }
  func.func @transform_10(%arg0: i32) -> (i32, i32, i32) {
    %c0_i32 = arith.constant 0 : i32
    %c0_i32_0 = arith.constant 0 : i32
    %c0_i32_1 = arith.constant 0 : i32
    %c0_i32_2 = arith.constant 0 : i32
    return %c0_i32, %c0_i32_0, %c0_i32_1 : i32, i32, i32
  }
  func.func @transform_11(%arg0: i32) -> (i32, i32, i32) {
    %c0_i32 = arith.constant 0 : i32
    %c0_i32_0 = arith.constant 0 : i32
    %c0_i32_1 = arith.constant 0 : i32
    %c0_i32_2 = arith.constant 0 : i32
    return %c0_i32, %c0_i32_0, %c0_i32_1 : i32, i32, i32
  }
  func.func @transform_12(%arg0: i32) -> (i32, i32, i32) {
    %c0_i32 = arith.constant 0 : i32
    %c0_i32_0 = arith.constant 0 : i32
    %c0_i32_1 = arith.constant 0 : i32
    %c0_i32_2 = arith.constant 0 : i32
    return %c0_i32, %c0_i32_0, %c0_i32_1 : i32, i32, i32
  }
  func.func @transform_13(%arg0: i32) -> (i32, i32) {
    %c0_i32 = arith.constant 0 : i32
    %c0_i32_0 = arith.constant 0 : i32
    %c0_i32_1 = arith.constant 0 : i32
    return %c0_i32, %c0_i32_0 : i32, i32
  }
  func.func @transform_14(%arg0: i32) -> (i32, i32) {
    %c0_i32 = arith.constant 0 : i32
    %c0_i32_0 = arith.constant 0 : i32
    %c0_i32_1 = arith.constant 0 : i32
    return %c0_i32, %c0_i32_0 : i32, i32
  }
  func.func @transform_15(%arg0: i32) -> (i32, i32) {
    %c0_i32 = arith.constant 0 : i32
    %c0_i32_0 = arith.constant 0 : i32
    %c0_i32_1 = arith.constant 0 : i32
    return %c0_i32, %c0_i32_0 : i32, i32
  }
  func.func @transform_16(%arg0: i32) -> (i32, i32) {
    %c0_i32 = arith.constant 0 : i32
    %c0_i32_0 = arith.constant 0 : i32
    %c0_i32_1 = arith.constant 0 : i32
    return %c0_i32, %c0_i32_0 : i32, i32
  }
  func.func @transform_17(%arg0: i32) -> (i32, i32) {
    %c0_i32 = arith.constant 0 : i32
    %c0_i32_0 = arith.constant 0 : i32
    return %arg0, %c0_i32 : i32, i32
  }
}

</mosaic_0001>

<llo_original>
// kernel: tpu_custom_call.1
$region0: #{tpu_custom_call.1}
  #allocation0 [shape = 'u32[]', space=smem, size = 0x4, offset = 0x4, fixed_abs, tag = 'smem constant byte address 0x4 - core index']
  #allocation1 [shape = 'u32[144,128]{1,0:T(1,128)}', space=vmem, size = 0x12000, scoped, tag = 'internal scratch']
  %s0 = inlined_call_operand.vmem [shape: f32[2,16,32], index: 0, kind: input, shape index: {}]
  %s1 = inlined_call_operand.vmem [shape: f32[2,32,96], index: 1, kind: input, shape index: {}]
  %s2 = inlined_call_operand.vmem [shape: f32[2,1,96], index: 2, kind: input, shape index: {}]
  %s3 = inlined_call_operand.vmem [shape: f32[2,32,32], index: 3, kind: input, shape index: {}]
  %s4 = inlined_call_operand.vmem [shape: f32[2,1,32], index: 4, kind: input, shape index: {}]
  %s5 = inlined_call_operand.vmem [shape: f32[2,1,32], index: 5, kind: input, shape index: {}]
  %s6 = inlined_call_operand.vmem [shape: f32[2,1,32], index: 6, kind: input, shape index: {}]
  %s7 = inlined_call_operand.vmem [shape: f32[2,32,256], index: 7, kind: input, shape index: {}]
  %s8 = inlined_call_operand.vmem [shape: f32[2,1,256], index: 8, kind: input, shape index: {}]
  %s9 = inlined_call_operand.vmem [shape: f32[2,256,32], index: 9, kind: input, shape index: {}]
  %s10 = inlined_call_operand.vmem [shape: f32[2,1,32], index: 10, kind: input, shape index: {}]
  %s11 = inlined_call_operand.vmem [shape: f32[2,1,32], index: 11, kind: input, shape index: {}]
  %s12 = inlined_call_operand.vmem [shape: f32[2,1,32], index: 12, kind: input, shape index: {}]
  %s13 = inlined_call_operand.vmem [shape: f32[32,256], index: 13, kind: input, shape index: {}]
  %s14 = inlined_call_operand.vmem [shape: f32[1,256], index: 14, kind: input, shape index: {}]
  %s15 = inlined_call_operand.vmem [shape: f32[256,128], index: 15, kind: input, shape index: {}]
  %s16 = inlined_call_operand.vmem [shape: f32[1,128], index: 16, kind: input, shape index: {}]
  %s17 = inlined_call_operand.hbm [shape: f32[2,128], index: 17, kind: output, shape index: {}]
  %s18 = sld [smem:[#allocation0]]
  $region78: #{tpu_custom_call.1} parent=0
    _
  %s20 = ssub.s32 1, %s18
  %s21 = scalar_select 0, %s20, %s18
  $region1: #{tpu_custom_call.1} parent=0
    #allocation2 [shape = 'u8[1024]{0}', space=vmem, size = 0x400, scoped, tag = 'output window, operand 0, single buffered']
    #allocation3 [shape = 's32[1]{0}', space=sflag, size = 0x4, scoped, tag = 'scoped memory for tpu_custom_call.1']
    %22 = vsyncpa [#allocation3], 0
    // Predicated region
    $region2: #{tpu_custom_call.1} parent=1 // pred_check
      _
    $region3: #{tpu_custom_call.1} parent=1 // pred_check_branch
      %24 = sbr.rel (0) target = $region5
    $region4: #{tpu_custom_call.1} parent=1 // pred_region
      _
    $region5: #{tpu_custom_call.1} parent=1 // pred_fallthru
      _
    // Predicated region
    $region6: #{tpu_custom_call.1} parent=1 // pred_check
      _
    $region7: #{tpu_custom_call.1} parent=1 // pred_check_branch
      %26 = sbr.rel (0) target = $region9
    $region8: #{tpu_custom_call.1} parent=1 // pred_region
      _
    $region9: #{tpu_custom_call.1} parent=1 // pred_fallthru
      _
    // Predicated region
    $region10: #{tpu_custom_call.1} parent=1 // pred_check
      _
    $region11: #{tpu_custom_call.1} parent=1 // pred_check_branch
      %28 = sbr.rel (0) target = $region13
    $region12: #{tpu_custom_call.1} parent=1 // pred_region
      _
    $region13: #{tpu_custom_call.1} parent=1 // pred_fallthru
      _
    // Predicated region
    $region14: #{tpu_custom_call.1} parent=1 // pred_check
      _
    $region15: #{tpu_custom_call.1} parent=1 // pred_check_branch
      %30 = sbr.rel (0) target = $region17
    $region16: #{tpu_custom_call.1} parent=1 // pred_region
      _
    $region17: #{tpu_custom_call.1} parent=1 // pred_fallthru
      _
    // Predicated region
    $region18: #{tpu_custom_call.1} parent=1 // pred_check
      _
    $region19: #{tpu_custom_call.1} parent=1 // pred_check_branch
      %32 = sbr.rel (0) target = $region21
    $region20: #{tpu_custom_call.1} parent=1 // pred_region
      _
    $region21: #{tpu_custom_call.1} parent=1 // pred_fallthru
      _
    // Predicated region
    $region22: #{tpu_custom_call.1} parent=1 // pred_check
      _
    $region23: #{tpu_custom_call.1} parent=1 // pred_check_branch
      %34 = sbr.rel (0) target = $region25
    $region24: #{tpu_custom_call.1} parent=1 // pred_region
      _
    $region25: #{tpu_custom_call.1} parent=1 // pred_fallthru
      _
    // Predicated region
    $region26: #{tpu_custom_call.1} parent=1 // pred_check
      _
    $region27: #{tpu_custom_call.1} parent=1 // pred_check_branch
      %36 = sbr.rel (0) target = $region29
    $region28: #{tpu_custom_call.1} parent=1 // pred_region
      _
    $region29: #{tpu_custom_call.1} parent=1 // pred_fallthru
      _
    // Predicated region
    $region30: #{tpu_custom_call.1} parent=1 // pred_check
      _
    $region31: #{tpu_custom_call.1} parent=1 // pred_check_branch
      %38 = sbr.rel (0) target = $region33
    $region32: #{tpu_custom_call.1} parent=1 // pred_region
      _
    $region33: #{tpu_custom_call.1} parent=1 // pred_fallthru
      _
    // Predicated region
    $region34: #{tpu_custom_call.1} parent=1 // pred_check
      _
    $region35: #{tpu_custom_call.1} parent=1 // pred_check_branch
      %40 = sbr.rel (0) target = $region37
    $region36: #{tpu_custom_call.1} parent=1 // pred_region
      _
    $region37: #{tpu_custom_call.1} parent=1 // pred_fallthru
      _
    // Predicated region
    $region38: #{tpu_custom_call.1} parent=1 // pred_check
      _
    $region39: #{tpu_custom_call.1} parent=1 // pred_check_branch
      %42 = sbr.rel (0) target = $region41
    $region40: #{tpu_custom_call.1} parent=1 // pred_region
      _
    $region41: #{tpu_custom_call.1} parent=1 // pred_fallthru
      _
    // Predicated region
    $region42: #{tpu_custom_call.1} parent=1 // pred_check
      _
    $region43: #{tpu_custom_call.1} parent=1 // pred_check_branch
      %44 = sbr.rel (0) target = $region45
    $region44: #{tpu_custom_call.1} parent=1 // pred_region
      _
    $region45: #{tpu_custom_call.1} parent=1 // pred_fallthru
      _
    // Predicated region
    $region46: #{tpu_custom_call.1} parent=1 // pred_check
      _
    $region47: #{tpu_custom_call.1} parent=1 // pred_check_branch
      %46 = sbr.rel (0) target = $region49
    $region48: #{tpu_custom_call.1} parent=1 // pred_region
      _
    $region49: #{tpu_custom_call.1} parent=1 // pred_fallthru
      _
    // Predicated region
    $region50: #{tpu_custom_call.1} parent=1 // pred_check
      _
    $region51: #{tpu_custom_call.1} parent=1 // pred_check_branch
      %48 = sbr.rel (0) target = $region53
    $region52: #{tpu_custom_call.1} parent=1 // pred_region
      _
    $region53: #{tpu_custom_call.1} parent=1 // pred_fallthru
      _
    // Predicated region
    $region54: #{tpu_custom_call.1} parent=1 // pred_check
      _
    $region55: #{tpu_custom_call.1} parent=1 // pred_check_branch
      %50 = sbr.rel (0) target = $region57
    $region56: #{tpu_custom_call.1} parent=1 // pred_region
      _
    $region57: #{tpu_custom_call.1} parent=1 // pred_fallthru
      _
    // Predicated region
    $region58: #{tpu_custom_call.1} parent=1 // pred_check
      _
    $region59: #{tpu_custom_call.1} parent=1 // pred_check_branch
      %52 = sbr.rel (0) target = $region61
    $region60: #{tpu_custom_call.1} parent=1 // pred_region
      _
    $region61: #{tpu_custom_call.1} parent=1 // pred_fallthru
      _
    // Predicated region
    $region62: #{tpu_custom_call.1} parent=1 // pred_check
      _
    $region63: #{tpu_custom_call.1} parent=1 // pred_check_branch
      %54 = sbr.rel (0) target = $region65
    $region64: #{tpu_custom_call.1} parent=1 // pred_region
      _
    $region65: #{tpu_custom_call.1} parent=1 // pred_fallthru
      _
    // Predicated region
    $region66: #{tpu_custom_call.1} parent=1 // pred_check
      _
    $region67: #{tpu_custom_call.1} parent=1 // pred_check_branch
      %56 = sbr.rel (0) target = $region69
    $region68: #{tpu_custom_call.1} parent=1 // pred_region
      _
    $region69: #{tpu_custom_call.1} parent=1 // pred_fallthru
      _
    %v57 = vlaneseq
    %v58 = vand.u32 %v57, 127
    %vm59 = vcmp.lt.s32.totalorder %v58, 9
    %v60 = vsel %vm59, 0.0, -1e+30
    %v61 = vld [vmem:[%s0] sm:$0xff]
    %v62 = vld [vmem:[%s0 + $0x8] sm:$0xff]
    %v63 = vld [vmem:[%s0 + $0x10] sm:$0xff]
    %v64 = vld [vmem:[%s0 + $0x18] sm:$0xff]
    %v65 = vld [vmem:[%s1] sm:$0xff]
    %v66 = vld [vmem:[%s1 + $0x8] sm:$0xff]
    %v67 = vld [vmem:[%s1 + $0x10] sm:$0xff]
    %v68 = vld [vmem:[%s1 + $0x18] sm:$0xff]
    %v69 = vld [vmem:[%s2] sm:$0x1]
    %v71 = vlaneseq
    %v72 = vshrl.u32 %v71, 7
    %v73 = vsub.s32 0, %v72
    %v74 = vrot.slane %v69, %v73
    %vm76 = vcmask 261120
    %v78 = vsel %vm76, %v61, 0
    %v81 = vsel %vm76, %v62, 0
    %v84 = vsel %vm76, %v63, 0
    %v87 = vsel %vm76, %v64, 0
    %89 = vmatprep.subr.mxu0 0.0
    %90 = vmatpush1.msra.mxu0 %v65
    %91 = vmatprep.subr.mxu0 0.0
    %92 = vmatpush1.msra.mxu0 %v66
    %93 = vmatprep.subr.mxu0 0.0
    %94 = vmatpush1.msra.mxu0 %v67
    %95 = vmatprep.subr.mxu0 0.0
    %96 = vmatpush1.msra.mxu0 %v68
    %97 = vmatprep.subr.mxu0 0.0
    %98 = vmatpush1.msra.mxu0 0.0
    %99 = vmatprep.subr.mxu0 0.0
    %100 = vmatpush1.msra.mxu0 0.0
    %101 = vmatprep.subr.mxu0 0.0
    %102 = vmatpush1.msra.mxu0 0.0
    %103 = vmatprep.subr.mxu0 0.0
    %104 = vmatpush1.msra.mxu0 0.0
    %105 = vmatprep.subr.mxu0 0.0
    %106 = vmatpush1.msra.mxu0 0.0
    %107 = vmatprep.subr.mxu0 0.0
    %108 = vmatpush1.msra.mxu0 0.0
    %109 = vmatprep.subr.mxu0 0.0
    %110 = vmatpush1.msra.mxu0 0.0
    %111 = vmatprep.subr.mxu0 0.0
    %112 = vmatpush1.msra.mxu0 0.0
    %113 = vmatprep.subr.mxu0 0.0
    %114 = vmatpush1.msra.mxu0 0.0
    %115 = vmatprep.subr.mxu0 0.0
    %116 = vmatpush1.msra.mxu0 0.0
    %117 = vmatprep.subr.mxu0 0.0
    %118 = vmatpush1.msra.mxu0 0.0
    %119 = vmatprep.subr.mxu0 0.0
    %120 = vmatpush1.msra.mxu0 0.0
    %121 = vmatprep.subr.mxu0 0.0
    %122 = vmatpush1.msra.mxu0 0.0
    %123 = vmatprep.subr.mxu0 0.0
    %124 = vmatpush1.msra.mxu0 0.0
    %125 = vmatprep.subr.mxu0 0.0
    %126 = vmatpush1.msra.mxu0 0.0
    %127 = vmatprep.subr.mxu0 0.0
    %128 = vmatpush1.msra.mxu0 0.0
    %129 = vmatprep.subr.mxu0 0.0
    %130 = vmatpush1.msra.mxu0 0.0
    %131 = vmatprep.subr.mxu0 0.0
    %132 = vmatpush1.msra.mxu0 0.0
    %133 = vmatprep.subr.mxu0 0.0
    %134 = vmatpush1.msra.mxu0 0.0
    %135 = vmatprep.subr.mxu0 0.0
    %136 = vmatpush1.msra.mxu0 0.0
    %137 = vmatprep.subr.mxu0 0.0
    %138 = vmatpush1.msra.mxu0 0.0
    %139 = vmatprep.subr.mxu0 0.0
    %140 = vmatpush1.msra.mxu0 0.0
    %141 = vmatprep.subr.mxu0 0.0
    %142 = vmatpush1.msra.mxu0 0.0
    %143 = vmatprep.subr.mxu0 0.0
    %144 = vmatpush1.msra.mxu0 0.0
    %145 = vmatprep.subr.mxu0 0.0
    %146 = vmatpush1.msra.mxu0 0.0
    %147 = vmatprep.subr.mxu0 0.0
    %148 = vmatpush1.msra.mxu0 0.0
    %149 = vmatprep.subr.mxu0 0.0
    %150 = vmatpush1.msra.mxu0 0.0
    %151 = vmatprep.subr.mxu0 0.0
    %152 = vmatpush1.msra.mxu0 0.0
    %153 = vmatprep.mubr.f32.mxu0 0.0
    %154 = vmatmul.mubr.f32.gmra.mrb[0].mxu0 %v78
    %v155 = vpop.f32.mrb[0].mxu0
    %v156 = vadd.f32 %v74, %v155
    %v157 = vpop.f32.mrb[0].mxu0
    %158 = vmatprep.mubr.f32.mxu0 0.0
    %159 = vmatmul.mubr.f32.gmra.mrb[0].mxu0 %v81
    %v160 = vpop.f32.mrb[0].mxu0
    %v161 = vadd.f32 %v74, %v160
    %v162 = vpop.f32.mrb[0].mxu0
    %163 = vmatprep.mubr.f32.mxu0 0.0
    %164 = vmatmul.mubr.f32.gmra.mrb[0].mxu0 %v84
    %v165 = vpop.f32.mrb[0].mxu0
    %v166 = vadd.f32 %v74, %v165
    %v167 = vpop.f32.mrb[0].mxu0
    %168 = vmatprep.mubr.f32.mxu0 0.0
    %169 = vmatmul.mubr.f32.gmra.mrb[0].mxu0 %v87
    %v170 = vpop.f32.mrb[0].mxu0
    %v171 = vadd.f32 %v74, %v170
    %v172 = vpop.f32.mrb[0].mxu0
    %173 = vdwg.mxu0
    %176 = vrot.lane.b32.xlu0 %v156, 96
    %v177 = vpop.permute.xlu0 %176
    %178 = vrot.lane.b32.xlu0 %v161, 96
    %v179 = vpop.permute.xlu0 %178
    %vm180 = vcmask 64512
    %v181 = vsel %vm180, %v156, 0
    %v183 = vsel %vm180, %v161, 0
    %v185 = vsel %vm180, %v177, 0
    %v187 = vsel %vm180, %v179, 0
    %189 = vmatprep.subr.mxu0 0.0
    %190 = vmatpush1.xpose.msra.mxu0 %v185
    %191 = vmatprep.subr.mxu0 0.0
    %192 = vmatpush1.xpose.msra.mxu0 %v187
    %193 = vmatprep.subr.mxu0 0.0
    %194 = vmatpush1.xpose.msra.mxu0 0.0
    %195 = vmatprep.subr.mxu0 0.0
    %196 = vmatpush1.xpose.msra.mxu0 0.0
    %197 = vmatprep.subr.mxu0 0.0
    %198 = vmatpush1.xpose.msra.mxu0 0.0
    %199 = vmatprep.subr.mxu0 0.0
    %200 = vmatpush1.xpose.msra.mxu0 0.0
    %201 = vmatprep.subr.mxu0 0.0
    %202 = vmatpush1.xpose.msra.mxu0 0.0
    %203 = vmatprep.subr.mxu0 0.0
    %204 = vmatpush1.xpose.msra.mxu0 0.0
    %205 = vmatprep.subr.mxu0 0.0
    %206 = vmatpush1.xpose.msra.mxu0 0.0
    %207 = vmatprep.subr.mxu0 0.0
    %208 = vmatpush1.xpose.msra.mxu0 0.0
    %209 = vmatprep.subr.mxu0 0.0
    %210 = vmatpush1.xpose.msra.mxu0 0.0
    %211 = vmatprep.subr.mxu0 0.0
    %212 = vmatpush1.xpose.msra.mxu0 0.0
    %213 = vmatprep.subr.mxu0 0.0
    %214 = vmatpush1.xpose.msra.mxu0 0.0
    %215 = vmatprep.subr.mxu0 0.0
    %216 = vmatpush1.xpose.msra.mxu0 0.0
    %217 = vmatprep.subr.mxu0 0.0
    %218 = vmatpush1.xpose.msra.mxu0 0.0
    %219 = vmatprep.subr.mxu0 0.0
    %220 = vmatpush1.xpose.msra.mxu0 0.0
    %221 = vmatprep.subr.mxu0 0.0
    %222 = vmatpush1.xpose.msra.mxu0 0.0
    %223 = vmatprep.subr.mxu0 0.0
    %224 = vmatpush1.xpose.msra.mxu0 0.0
    %225 = vmatprep.subr.mxu0 0.0
    %226 = vmatpush1.xpose.msra.mxu0 0.0
    %227 = vmatprep.subr.mxu0 0.0
    %228 = vmatpush1.xpose.msra.mxu0 0.0
    %229 = vmatprep.subr.mxu0 0.0
    %230 = vmatpush1.xpose.msra.mxu0 0.0
    %231 = vmatprep.subr.mxu0 0.0
    %232 = vmatpush1.xpose.msra.mxu0 0.0
    %233 = vmatprep.subr.mxu0 0.0
    %234 = vmatpush1.xpose.msra.mxu0 0.0
    %235 = vmatprep.subr.mxu0 0.0
    %236 = vmatpush1.xpose.msra.mxu0 0.0
    %237 = vmatprep.subr.mxu0 0.0
    %238 = vmatpush1.xpose.msra.mxu0 0.0
    %239 = vmatprep.subr.mxu0 0.0
    %240 = vmatpush1.xpose.msra.mxu0 0.0
    %241 = vmatprep.subr.mxu0 0.0
    %242 = vmatpush1.xpose.msra.mxu0 0.0
    %243 = vmatprep.subr.mxu0 0.0
    %244 = vmatpush1.xpose.msra.mxu0 0.0
    %245 = vmatprep.subr.mxu0 0.0
    %246 = vmatpush1.xpose.msra.mxu0 0.0
    %247 = vmatprep.subr.mxu0 0.0
    %248 = vmatpush1.xpose.msra.mxu0 0.0
    %249 = vmatprep.subr.mxu0 0.0
    %250 = vmatpush1.xpose.msra.mxu0 0.0
    %251 = vmatprep.subr.mxu0 0.0
    %252 = vmatpush1.xpose.msra.mxu0 0.0
    %253 = vmatprep.mubr.f32.mxu0 0.0
    %254 = vmatmul.mubr.f32.gmra.mrb[0].mxu0 %v181
    %v255 = vpop.f32.mrb[0].mxu0
    %v256 = vadd.f32 0.0, %v255
    %v257 = vpop.f32.mrb[0].mxu0
    %258 = vmatprep.mubr.f32.mxu0 0.0
    %259 = vmatmul.mubr.f32.gmra.mrb[0].mxu0 %v183
    %v260 = vpop.f32.mrb[0].mxu0
    %v261 = vadd.f32 0.0, %v260
    %v262 = vpop.f32.mrb[0].mxu0
    %263 = vdwg.mxu0
    %266 = vrot.lane.b32.xlu0 %v166, 96
    %v267 = vpop.permute.xlu0 %266
    %268 = vrot.lane.b32.xlu0 %v171, 96
    %v269 = vpop.permute.xlu0 %268
    %v270 = vsel %vm180, %v166, 0
    %v272 = vsel %vm180, %v171, 0
    %v274 = vsel %vm180, %v267, 0
    %v276 = vsel %vm180, %v269, 0
    %278 = vmatprep.subr.mxu0 0.0
    %279 = vmatpush1.xpose.msra.mxu0 %v274
    %280 = vmatprep.subr.mxu0 0.0
    %281 = vmatpush1.xpose.msra.mxu0 %v276
    %282 = vmatprep.subr.mxu0 0.0
    %283 = vmatpush1.xpose.msra.mxu0 0.0
    %284 = vmatprep.subr.mxu0 0.0
    %285 = vmatpush1.xpose.msra.mxu0 0.0
    %286 = vmatprep.subr.mxu0 0.0
    %287 = vmatpush1.xpose.msra.mxu0 0.0
    %288 = vmatprep.subr.mxu0 0.0
    %289 = vmatpush1.xpose.msra.mxu0 0.0
    %290 = vmatprep.subr.mxu0 0.0
    %291 = vmatpush1.xpose.msra.mxu0 0.0
    %292 = vmatprep.subr.mxu0 0.0
    %293 = vmatpush1.xpose.msra.mxu0 0.0
    %294 = vmatprep.subr.mxu0 0.0
    %295 = vmatpush1.xpose.msra.mxu0 0.0
    %296 = vmatprep.subr.mxu0 0.0
    %297 = vmatpush1.xpose.msra.mxu0 0.0
    %298 = vmatprep.subr.mxu0 0.0
    %299 = vmatpush1.xpose.msra.mxu0 0.0
    %300 = vmatprep.subr.mxu0 0.0
    %301 = vmatpush1.xpose.msra.mxu0 0.0
    %302 = vmatprep.subr.mxu0 0.0
    %303 = vmatpush1.xpose.msra.mxu0 0.0
    %304 = vmatprep.subr.mxu0 0.0
    %305 = vmatpush1.xpose.msra.mxu0 0.0
    %306 = vmatprep.subr.mxu0 0.0
    %307 = vmatpush1.xpose.msra.mxu0 0.0
    %308 = vmatprep.subr.mxu0 0.0
    %309 = vmatpush1.xpose.msra.mxu0 0.0
    %310 = vmatprep.subr.mxu0 0.0
    %311 = vmatpush1.xpose.msra.mxu0 0.0
    %312 = vmatprep.subr.mxu0 0.0
    %313 = vmatpush1.xpose.msra.mxu0 0.0
    %314 = vmatprep.subr.mxu0 0.0
    %315 = vmatpush1.xpose.msra.mxu0 0.0
    %316 = vmatprep.subr.mxu0 0.0
    %317 = vmatpush1.xpose.msra.mxu0 0.0
    %318 = vmatprep.subr.mxu0 0.0
    %319 = vmatpush1.xpose.msra.mxu0 0.0
    %320 = vmatprep.subr.mxu0 0.0
    %321 = vmatpush1.xpose.msra.mxu0 0.0
    %322 = vmatprep.subr.mxu0 0.0
    %323 = vmatpush1.xpose.msra.mxu0 0.0
    %324 = vmatprep.subr.mxu0 0.0
    %325 = vmatpush1.xpose.msra.mxu0 0.0
    %326 = vmatprep.subr.mxu0 0.0
    %327 = vmatpush1.xpose.msra.mxu0 0.0
    %328 = vmatprep.subr.mxu0 0.0
    %329 = vmatpush1.xpose.msra.mxu0 0.0
    %330 = vmatprep.subr.mxu0 0.0
    %331 = vmatpush1.xpose.msra.mxu0 0.0
    %332 = vmatprep.subr.mxu0 0.0
    %333 = vmatpush1.xpose.msra.mxu0 0.0
    %334 = vmatprep.subr.mxu0 0.0
    %335 = vmatpush1.xpose.msra.mxu0 0.0
    %336 = vmatprep.subr.mxu0 0.0
    %337 = vmatpush1.xpose.msra.mxu0 0.0
    %338 = vmatprep.subr.mxu0 0.0
    %339 = vmatpush1.xpose.msra.mxu0 0.0
    %340 = vmatprep.subr.mxu0 0.0
    %341 = vmatpush1.xpose.msra.mxu0 0.0
    %342 = vmatprep.mubr.f32.mxu0 0.0
    %343 = vmatmul.mubr.f32.gmra.mrb[0].mxu0 %v270
    %v344 = vpop.f32.mrb[0].mxu0
    %v345 = vadd.f32 0.0, %v344
    %v346 = vpop.f32.mrb[0].mxu0
    %347 = vmatprep.mubr.f32.mxu0 0.0
    %348 = vmatmul.mubr.f32.gmra.mrb[0].mxu0 %v272
    %v349 = vpop.f32.mrb[0].mxu0
    %v350 = vadd.f32 0.0, %v349
    %v351 = vpop.f32.mrb[0].mxu0
    %352 = vdwg.mxu0
    %v353 = vmul.f32 %v256, 0.35355338
    %v354 = vmul.f32 %v261, 0.35355338
    %v355 = vmul.f32 %v345, 0.35355338
    %v356 = vmul.f32 %v350, 0.35355338
    %v357 = vadd.f32 %v353, %v60
    %v358 = vadd.f32 %v354, %v60
    %v359 = vadd.f32 %v355, %v60
    %v360 = vadd.f32 %v356, %v60
    %vm361 = vcmask 130048
    %v362 = vsel %vm361, %v357, -inf
    %363 = vmax.xlane.f32.xlu0 %v362
    %v364 = vpop.xlane.xlu0 %363
    %v365 = vsel %vm361, %v358, -inf
    %366 = vmax.xlane.f32.xlu0 %v365
    %v367 = vpop.xlane.xlu0 %366
    %v368 = vsel %vm361, %v359, -inf
    %369 = vmax.xlane.f32.xlu0 %v368
    %v370 = vpop.xlane.xlu0 %369
    %v371 = vsel %vm361, %v360, -inf
    %372 = vmax.xlane.f32.xlu0 %v371
    %v373 = vpop.xlane.xlu0 %372
    %v374 = vsub.f32 %v357, %v364
    %v375 = vsub.f32 %v358, %v367
    %v376 = vsub.f32 %v359, %v370
    %v377 = vsub.f32 %v360, %v373
    %v378 = vmul.f32 %v374, 1.442695
    %v379 = vpow.pop %v378
    %v380 = vmul.f32 %v375, 1.442695
    %v381 = vpow.pop %v380
    %v382 = vmul.f32 %v376, 1.442695
    %v383 = vpow.pop %v382
    %v384 = vmul.f32 %v377, 1.442695
    %v385 = vpow.pop %v384
    %v386 = vsel %vm361, %v379, 0.0
    %387 = vadd.xlane.f32.xlu0 %v386
    %v388 = vpop.xlane.xlu0 %387
    %v389 = vsel %vm361, %v381, 0.0
    %390 = vadd.xlane.f32.xlu0 %v389
    %v391 = vpop.xlane.xlu0 %390
    %v392 = vsel %vm361, %v383, 0.0
    %393 = vadd.xlane.f32.xlu0 %v392
    %v394 = vpop.xlane.xlu0 %393
    %v395 = vsel %vm361, %v385, 0.0
    %396 = vadd.xlane.f32.xlu0 %v395
    %v397 = vpop.xlane.xlu0 %396
    %v398 = vrcp.pop %v388
    %v399 = vrcp.pop %v391
    %v400 = vrcp.pop %v394
    %v401 = vrcp.pop %v397
    %v402 = vmul.f32 %v379, %v398
    %v403 = vmul.f32 %v381, %v399
    %v404 = vmul.f32 %v383, %v400
    %v405 = vmul.f32 %v385, %v401
    %406 = vrot.lane.b32.xlu0 %v156, 64
    %v407 = vpop.permute.xlu0 %406
    %408 = vrot.lane.b32.xlu0 %v161, 64
    %v409 = vpop.permute.xlu0 %408
    %v413 = vsel %vm361, %v402, 0
    %v416 = vsel %vm361, %v403, 0
    %418 = vmatprep.subr.mxu0 0.0
    %419 = vmatpush1.msra.mxu0 %v407
    %420 = vmatprep.subr.mxu0 0.0
    %421 = vmatpush1.msra.mxu0 %v409
    %422 = vmatprep.subr.mxu0 0.0
    %423 = vmatpush1.msra.mxu0 0.0
    %424 = vmatprep.subr.mxu0 0.0
    %425 = vmatpush1.msra.mxu0 0.0
    %426 = vmatprep.subr.mxu0 0.0
    %427 = vmatpush1.msra.mxu0 0.0
    %428 = vmatprep.subr.mxu0 0.0
    %429 = vmatpush1.msra.mxu0 0.0
    %430 = vmatprep.subr.mxu0 0.0
    %431 = vmatpush1.msra.mxu0 0.0
    %432 = vmatprep.subr.mxu0 0.0
    %433 = vmatpush1.msra.mxu0 0.0
    %434 = vmatprep.subr.mxu0 0.0
    %435 = vmatpush1.msra.mxu0 0.0
    %436 = vmatprep.subr.mxu0 0.0
    %437 = vmatpush1.msra.mxu0 0.0
    %438 = vmatprep.subr.mxu0 0.0
    %439 = vmatpush1.msra.mxu0 0.0
    %440 = vmatprep.subr.mxu0 0.0
    %441 = vmatpush1.msra.mxu0 0.0
    %442 = vmatprep.subr.mxu0 0.0
    %443 = vmatpush1.msra.mxu0 0.0
    %444 = vmatprep.subr.mxu0 0.0
    %445 = vmatpush1.msra.mxu0 0.0
    %446 = vmatprep.subr.mxu0 0.0
    %447 = vmatpush1.msra.mxu0 0.0
    %448 = vmatprep.subr.mxu0 0.0
    %449 = vmatpush1.msra.mxu0 0.0
    %450 = vmatprep.subr.mxu0 0.0
    %451 = vmatpush1.msra.mxu0 0.0
    %452 = vmatprep.subr.mxu0 0.0
    %453 = vmatpush1.msra.mxu0 0.0
    %454 = vmatprep.subr.mxu0 0.0
    %455 = vmatpush1.msra.mxu0 0.0
    %456 = vmatprep.subr.mxu0 0.0
    %457 = vmatpush1.msra.mxu0 0.0
    %458 = vmatprep.subr.mxu0 0.0
    %459 = vmatpush1.msra.mxu0 0.0
    %460 = vmatprep.subr.mxu0 0.0
    %461 = vmatpush1.msra.mxu0 0.0
    %462 = vmatprep.subr.mxu0 0.0
    %463 = vmatpush1.msra.mxu0 0.0
    %464 = vmatprep.subr.mxu0 0.0
    %465 = vmatpush1.msra.mxu0 0.0
    %466 = vmatprep.subr.mxu0 0.0
    %467 = vmatpush1.msra.mxu0 0.0
    %468 = vmatprep.subr.mxu0 0.0
    %469 = vmatpush1.msra.mxu0 0.0
    %470 = vmatprep.subr.mxu0 0.0
    %471 = vmatpush1.msra.mxu0 0.0
    %472 = vmatprep.subr.mxu0 0.0
    %473 = vmatpush1.msra.mxu0 0.0
    %474 = vmatprep.subr.mxu0 0.0
    %475 = vmatpush1.msra.mxu0 0.0
    %476 = vmatprep.subr.mxu0 0.0
    %477 = vmatpush1.msra.mxu0 0.0
    %478 = vmatprep.subr.mxu0 0.0
    %479 = vmatpush1.msra.mxu0 0.0
    %480 = vmatprep.subr.mxu0 0.0
    %481 = vmatpush1.msra.mxu0 0.0
    %482 = vmatprep.mubr.f32.mxu0 0.0
    %483 = vmatmul.mubr.f32.gmra.mrb[0].mxu0 %v413
    %v484 = vpop.f32.mrb[0].mxu0
    %v485 = vadd.f32 0.0, %v484
    %v486 = vpop.f32.mrb[0].mxu0
    %487 = vmatprep.mubr.f32.mxu0 0.0
    %488 = vmatmul.mubr.f32.gmra.mrb[0].mxu0 %v416
    %v489 = vpop.f32.mrb[0].mxu0
    %v490 = vadd.f32 0.0, %v489
    %v491 = vpop.f32.mrb[0].mxu0
    %492 = vdwg.mxu0
    %493 = vrot.lane.b32.xlu0 %v166, 64
    %v494 = vpop.permute.xlu0 %493
    %495 = vrot.lane.b32.xlu0 %v171, 64
    %v496 = vpop.permute.xlu0 %495
    %v500 = vsel %vm361, %v404, 0
    %v503 = vsel %vm361, %v405, 0
    %505 = vmatprep.subr.mxu0 0.0
    %506 = vmatpush1.msra.mxu0 %v494
    %507 = vmatprep.subr.mxu0 0.0
    %508 = vmatpush1.msra.mxu0 %v496
    %509 = vmatprep.subr.mxu0 0.0
    %510 = vmatpush1.msra.mxu0 0.0
    %511 = vmatprep.subr.mxu0 0.0
    %512 = vmatpush1.msra.mxu0 0.0
    %513 = vmatprep.subr.mxu0 0.0
    %514 = vmatpush1.msra.mxu0 0.0
    %515 = vmatprep.subr.mxu0 0.0
    %516 = vmatpush1.msra.mxu0 0.0
    %517 = vmatprep.subr.mxu0 0.0
    %518 = vmatpush1.msra.mxu0 0.0
    %519 = vmatprep.subr.mxu0 0.0
    %520 = vmatpush1.msra.mxu0 0.0
    %521 = vmatprep.subr.mxu0 0.0
    %522 = vmatpush1.msra.mxu0 0.0
    %523 = vmatprep.subr.mxu0 0.0
    %524 = vmatpush1.msra.mxu0 0.0
    %525 = vmatprep.subr.mxu0 0.0
    %526 = vmatpush1.msra.mxu0 0.0
    %527 = vmatprep.subr.mxu0 0.0
    %528 = vmatpush1.msra.mxu0 0.0
    %529 = vmatprep.subr.mxu0 0.0
    %530 = vmatpush1.msra.mxu0 0.0
    %531 = vmatprep.subr.mxu0 0.0
    %532 = vmatpush1.msra.mxu0 0.0
    %533 = vmatprep.subr.mxu0 0.0
    %534 = vmatpush1.msra.mxu0 0.0
    %535 = vmatprep.subr.mxu0 0.0
    %536 = vmatpush1.msra.mxu0 0.0
    %537 = vmatprep.subr.mxu0 0.0
    %538 = vmatpush1.msra.mxu0 0.0
    %539 = vmatprep.subr.mxu0 0.0
    %540 = vmatpush1.msra.mxu0 0.0
    %541 = vmatprep.subr.mxu0 0.0
    %542 = vmatpush1.msra.mxu0 0.0
    %543 = vmatprep.subr.mxu0 0.0
    %544 = vmatpush1.msra.mxu0 0.0
    %545 = vmatprep.subr.mxu0 0.0
    %546 = vmatpush1.msra.mxu0 0.0
    %547 = vmatprep.subr.mxu0 0.0
    %548 = vmatpush1.msra.mxu0 0.0
    %549 = vmatprep.subr.mxu0 0.0
    %550 = vmatpush1.msra.mxu0 0.0
    %551 = vmatprep.subr.mxu0 0.0
    %552 = vmatpush1.msra.mxu0 0.0
    %553 = vmatprep.subr.mxu0 0.0
    %554 = vmatpush1.msra.mxu0 0.0
    %555 = vmatprep.subr.mxu0 0.0
    %556 = vmatpush1.msra.mxu0 0.0
    %557 = vmatprep.subr.mxu0 0.0
    %558 = vmatpush1.msra.mxu0 0.0
    %559 = vmatprep.subr.mxu0 0.0
    %560 = vmatpush1.msra.mxu0 0.0
    %561 = vmatprep.subr.mxu0 0.0
    %562 = vmatpush1.msra.mxu0 0.0
    %563 = vmatprep.subr.mxu0 0.0
    %564 = vmatpush1.msra.mxu0 0.0
    %565 = vmatprep.subr.mxu0 0.0
    %566 = vmatpush1.msra.mxu0 0.0
    %567 = vmatprep.subr.mxu0 0.0
    %568 = vmatpush1.msra.mxu0 0.0
    %569 = vmatprep.mubr.f32.mxu0 0.0
    %570 = vmatmul.mubr.f32.gmra.mrb[0].mxu0 %v500
    %v571 = vpop.f32.mrb[0].mxu0
    %v572 = vadd.f32 0.0, %v571
    %v573 = vpop.f32.mrb[0].mxu0
    %574 = vmatprep.mubr.f32.mxu0 0.0
    %575 = vmatmul.mubr.f32.gmra.mrb[0].mxu0 %v503
    %v576 = vpop.f32.mrb[0].mxu0
    %v577 = vadd.f32 0.0, %v576
    %v578 = vpop.f32.mrb[0].mxu0
    %579 = vdwg.mxu0
    %580 = vrot.lane.b32.xlu0 %v156, 120
    %v581 = vpop.permute.xlu0 %580
    %582 = vrot.lane.b32.xlu0 %v161, 120
    %v583 = vpop.permute.xlu0 %582
    %584 = vrot.lane.b32.xlu0 %v156, 88
    %v585 = vpop.permute.xlu0 %584
    %586 = vrot.lane.b32.xlu0 %v161, 88
    %v587 = vpop.permute.xlu0 %586
    %v588 = vsel %vm180, %v581, 0
    %v590 = vsel %vm180, %v583, 0
    %v592 = vsel %vm180, %v585, 0
    %v594 = vsel %vm180, %v587, 0
    %596 = vmatprep.subr.mxu0 0.0
    %597 = vmatpush1.xpose.msra.mxu0 %v592
    %598 = vmatprep.subr.mxu0 0.0
    %599 = vmatpush1.xpose.msra.mxu0 %v594
    %600 = vmatprep.subr.mxu0 0.0
    %601 = vmatpush1.xpose.msra.mxu0 0.0
    %602 = vmatprep.subr.mxu0 0.0
    %603 = vmatpush1.xpose.msra.mxu0 0.0
    %604 = vmatprep.subr.mxu0 0.0
    %605 = vmatpush1.xpose.msra.mxu0 0.0
    %606 = vmatprep.subr.mxu0 0.0
    %607 = vmatpush1.xpose.msra.mxu0 0.0
    %608 = vmatprep.subr.mxu0 0.0
    %609 = vmatpush1.xpose.msra.mxu0 0.0
    %610 = vmatprep.subr.mxu0 0.0
    %611 = vmatpush1.xpose.msra.mxu0 0.0
    %612 = vmatprep.subr.mxu0 0.0
    %613 = vmatpush1.xpose.msra.mxu0 0.0
    %614 = vmatprep.subr.mxu0 0.0
    %615 = vmatpush1.xpose.msra.mxu0 0.0
    %616 = vmatprep.subr.mxu0 0.0
    %617 = vmatpush1.xpose.msra.mxu0 0.0
    %618 = vmatprep.subr.mxu0 0.0
    %619 = vmatpush1.xpose.msra.mxu0 0.0
    %620 = vmatprep.subr.mxu0 0.0
    %621 = vmatpush1.xpose.msra.mxu0 0.0
    %622 = vmatprep.subr.mxu0 0.0
    %623 = vmatpush1.xpose.msra.mxu0 0.0
    %624 = vmatprep.subr.mxu0 0.0
    %625 = vmatpush1.xpose.msra.mxu0 0.0
    %626 = vmatprep.subr.mxu0 0.0
    %627 = vmatpush1.xpose.msra.mxu0 0.0
    %628 = vmatprep.subr.mxu0 0.0
    %629 = vmatpush1.xpose.msra.mxu0 0.0
    %630 = vmatprep.subr.mxu0 0.0
    %631 = vmatpush1.xpose.msra.mxu0 0.0
    %632 = vmatprep.subr.mxu0 0.0
    %633 = vmatpush1.xpose.msra.mxu0 0.0
    %634 = vmatprep.subr.mxu0 0.0
    %635 = vmatpush1.xpose.msra.mxu0 0.0
    %636 = vmatprep.subr.mxu0 0.0
    %637 = vmatpush1.xpose.msra.mxu0 0.0
    %638 = vmatprep.subr.mxu0 0.0
    %639 = vmatpush1.xpose.msra.mxu0 0.0
    %640 = vmatprep.subr.mxu0 0.0
    %641 = vmatpush1.xpose.msra.mxu0 0.0
    %642 = vmatprep.subr.mxu0 0.0
    %643 = vmatpush1.xpose.msra.mxu0 0.0
    %644 = vmatprep.subr.mxu0 0.0
    %645 = vmatpush1.xpose.msra.mxu0 0.0
    %646 = vmatprep.subr.mxu0 0.0
    %647 = vmatpush1.xpose.msra.mxu0 0.0
    %648 = vmatprep.subr.mxu0 0.0
    %649 = vmatpush1.xpose.msra.mxu0 0.0
    %650 = vmatprep.subr.mxu0 0.0
    %651 = vmatpush1.xpose.msra.mxu0 0.0
    %652 = vmatprep.subr.mxu0 0.0
    %653 = vmatpush1.xpose.msra.mxu0 0.0
    %654 = vmatprep.subr.mxu0 0.0
    %655 = vmatpush1.xpose.msra.mxu0 0.0
    %656 = vmatprep.subr.mxu0 0.0
    %657 = vmatpush1.xpose.msra.mxu0 0.0
    %658 = vmatprep.subr.mxu0 0.0
    %659 = vmatpush1.xpose.msra.mxu0 0.0
    %660 = vmatprep.mubr.f32.mxu0 0.0
    %661 = vmatmul.mubr.f32.gmra.mrb[0].mxu0 %v588
    %v662 = vpop.f32.mrb[0].mxu0
    %v663 = vadd.f32 0.0, %v662
    %v664 = vpop.f32.mrb[0].mxu0
    %665 = vmatprep.mubr.f32.mxu0 0.0
    %666 = vmatmul.mubr.f32.gmra.mrb[0].mxu0 %v590
    %v667 = vpop.f32.mrb[0].mxu0
    %v668 = vadd.f32 0.0, %v667
    %v669 = vpop.f32.mrb[0].mxu0
    %670 = vdwg.mxu0
    %671 = vrot.lane.b32.xlu0 %v166, 120
    %v672 = vpop.permute.xlu0 %671
    %673 = vrot.lane.b32.xlu0 %v171, 120
    %v674 = vpop.permute.xlu0 %673
    %675 = vrot.lane.b32.xlu0 %v166, 88
    %v676 = vpop.permute.xlu0 %675
    %677 = vrot.lane.b32.xlu0 %v171, 88
    %v678 = vpop.permute.xlu0 %677
    %v679 = vsel %vm180, %v672, 0
    %v681 = vsel %vm180, %v674, 0
    %v683 = vsel %vm180, %v676, 0
    %v685 = vsel %vm180, %v678, 0
    %687 = vmatprep.subr.mxu0 0.0
    %688 = vmatpush1.xpose.msra.mxu0 %v683
    %689 = vmatprep.subr.mxu0 0.0
    %690 = vmatpush1.xpose.msra.mxu0 %v685
    %691 = vmatprep.subr.mxu0 0.0
    %692 = vmatpush1.xpose.msra.mxu0 0.0
    %693 = vmatprep.subr.mxu0 0.0
    %694 = vmatpush1.xpose.msra.mxu0 0.0
    %695 = vmatprep.subr.mxu0 0.0
    %696 = vmatpush1.xpose.msra.mxu0 0.0
    %697 = vmatprep.subr.mxu0 0.0
    %698 = vmatpush1.xpose.msra.mxu0 0.0
    %699 = vmatprep.subr.mxu0 0.0
    %700 = vmatpush1.xpose.msra.mxu0 0.0
    %701 = vmatprep.subr.mxu0 0.0
    %702 = vmatpush1.xpose.msra.mxu0 0.0
    %703 = vmatprep.subr.mxu0 0.0
    %704 = vmatpush1.xpose.msra.mxu0 0.0
    %705 = vmatprep.subr.mxu0 0.0
    %706 = vmatpush1.xpose.msra.mxu0 0.0
    %707 = vmatprep.subr.mxu0 0.0
    %708 = vmatpush1.xpose.msra.mxu0 0.0
    %709 = vmatprep.subr.mxu0 0.0
    %710 = vmatpush1.xpose.msra.mxu0 0.0
    %711 = vmatprep.subr.mxu0 0.0
    %712 = vmatpush1.xpose.msra.mxu0 0.0
    %713 = vmatprep.subr.mxu0 0.0
    %714 = vmatpush1.xpose.msra.mxu0 0.0
    %715 = vmatprep.subr.mxu0 0.0
    %716 = vmatpush1.xpose.msra.mxu0 0.0
    %717 = vmatprep.subr.mxu0 0.0
    %718 = vmatpush1.xpose.msra.mxu0 0.0
    %719 = vmatprep.subr.mxu0 0.0
    %720 = vmatpush1.xpose.msra.mxu0 0.0
    %721 = vmatprep.subr.mxu0 0.0
    %722 = vmatpush1.xpose.msra.mxu0 0.0
    %723 = vmatprep.subr.mxu0 0.0
    %724 = vmatpush1.xpose.msra.mxu0 0.0
    %725 = vmatprep.subr.mxu0 0.0
    %726 = vmatpush1.xpose.msra.mxu0 0.0
    %727 = vmatprep.subr.mxu0 0.0
    %728 = vmatpush1.xpose.msra.mxu0 0.0
    %729 = vmatprep.subr.mxu0 0.0
    %730 = vmatpush1.xpose.msra.mxu0 0.0
    %731 = vmatprep.subr.mxu0 0.0
    %732 = vmatpush1.xpose.msra.mxu0 0.0
    %733 = vmatprep.subr.mxu0 0.0
    %734 = vmatpush1.xpose.msra.mxu0 0.0
    %735 = vmatprep.subr.mxu0 0.0
    %736 = vmatpush1.xpose.msra.mxu0 0.0
    %737 = vmatprep.subr.mxu0 0.0
    %738 = vmatpush1.xpose.msra.mxu0 0.0
    %739 = vmatprep.subr.mxu0 0.0
    %740 = vmatpush1.xpose.msra.mxu0 0.0
    %741 = vmatprep.subr.mxu0 0.0
    %742 = vmatpush1.xpose.msra.mxu0 0.0
    %743 = vmatprep.subr.mxu0 0.0
    %744 = vmatpush1.xpose.msra.mxu0 0.0
    %745 = vmatprep.subr.mxu0 0.0
    %746 = vmatpush1.xpose.msra.mxu0 0.0
    %747 = vmatprep.subr.mxu0 0.0
    %748 = vmatpush1.xpose.msra.mxu0 0.0
    %749 = vmatprep.subr.mxu0 0.0
    %750 = vmatpush1.xpose.msra.mxu0 0.0
    %751 = vmatprep.mubr.f32.mxu0 0.0
    %752 = vmatmul.mubr.f32.gmra.mrb[0].mxu0 %v679
    %v753 = vpop.f32.mrb[0].mxu0
    %v754 = vadd.f32 0.0, %v753
    %v755 = vpop.f32.mrb[0].mxu0
    %756 = vmatprep.mubr.f32.mxu0 0.0
    %757 = vmatmul.mubr.f32.gmra.mrb[0].mxu0 %v681
    %v758 = vpop.f32.mrb[0].mxu0
    %v759 = vadd.f32 0.0, %v758
    %v760 = vpop.f32.mrb[0].mxu0
    %761 = vdwg.mxu0
    %v762 = vmul.f32 %v663, 0.35355338
    %v763 = vmul.f32 %v668, 0.35355338
    %v764 = vmul.f32 %v754, 0.35355338
    %v765 = vmul.f32 %v759, 0.35355338
    %v766 = vadd.f32 %v762, %v60
    %v767 = vadd.f32 %v763, %v60
    %v768 = vadd.f32 %v764, %v60
    %v769 = vadd.f32 %v765, %v60
    %v770 = vsel %vm361, %v766, -inf
    %771 = vmax.xlane.f32.xlu0 %v770
    %v772 = vpop.xlane.xlu0 %771
    %v773 = vsel %vm361, %v767, -inf
    %774 = vmax.xlane.f32.xlu0 %v773
    %v775 = vpop.xlane.xlu0 %774
    %v776 = vsel %vm361, %v768, -inf
    %777 = vmax.xlane.f32.xlu0 %v776
    %v778 = vpop.xlane.xlu0 %777
    %v779 = vsel %vm361, %v769, -inf
    %780 = vmax.xlane.f32.xlu0 %v779
    %v781 = vpop.xlane.xlu0 %780
    %v782 = vsub.f32 %v766, %v772
    %v783 = vsub.f32 %v767, %v775
    %v784 = vsub.f32 %v768, %v778
    %v785 = vsub.f32 %v769, %v781
    %v786 = vmul.f32 %v782, 1.442695
    %v787 = vpow.pop %v786
    %v788 = vmul.f32 %v783, 1.442695
    %v789 = vpow.pop %v788
    %v790 = vmul.f32 %v784, 1.442695
    %v791 = vpow.pop %v790
    %v792 = vmul.f32 %v785, 1.442695
    %v793 = vpow.pop %v792
    %v794 = vsel %vm361, %v787, 0.0
    %795 = vadd.xlane.f32.xlu0 %v794
    %v796 = vpop.xlane.xlu0 %795
    %v797 = vsel %vm361, %v789, 0.0
    %798 = vadd.xlane.f32.xlu0 %v797
    %v799 = vpop.xlane.xlu0 %798
    %v800 = vsel %vm361, %v791, 0.0
    %801 = vadd.xlane.f32.xlu0 %v800
    %v802 = vpop.xlane.xlu0 %801
    %v803 = vsel %vm361, %v793, 0.0
    %804 = vadd.xlane.f32.xlu0 %v803
    %v805 = vpop.xlane.xlu0 %804
    %v806 = vrcp.pop %v796
    %v807 = vrcp.pop %v799
    %v808 = vrcp.pop %v802
    %v809 = vrcp.pop %v805
    %v810 = vmul.f32 %v787, %v806
    %v811 = vmul.f32 %v789, %v807
    %v812 = vmul.f32 %v791, %v808
    %v813 = vmul.f32 %v793, %v809
    %814 = vrot.lane.b32.xlu0 %v156, 56
    %v815 = vpop.permute.xlu0 %814
    %816 = vrot.lane.b32.xlu0 %v161, 56
    %v817 = vpop.permute.xlu0 %816
    %v821 = vsel %vm361, %v810, 0
    %v824 = vsel %vm361, %v811, 0
    %826 = vmatprep.subr.mxu0 0.0
    %827 = vmatpush1.msra.mxu0 %v815
    %828 = vmatprep.subr.mxu0 0.0
    %829 = vmatpush1.msra.mxu0 %v817
    %830 = vmatprep.subr.mxu0 0.0
    %831 = vmatpush1.msra.mxu0 0.0
    %832 = vmatprep.subr.mxu0 0.0
    %833 = vmatpush1.msra.mxu0 0.0
    %834 = vmatprep.subr.mxu0 0.0
    %835 = vmatpush1.msra.mxu0 0.0
    %836 = vmatprep.subr.mxu0 0.0
    %837 = vmatpush1.msra.mxu0 0.0
    %838 = vmatprep.subr.mxu0 0.0
    %839 = vmatpush1.msra.mxu0 0.0
    %840 = vmatprep.subr.mxu0 0.0
    %841 = vmatpush1.msra.mxu0 0.0
    %842 = vmatprep.subr.mxu0 0.0
    %843 = vmatpush1.msra.mxu0 0.0
    %844 = vmatprep.subr.mxu0 0.0
    %845 = vmatpush1.msra.mxu0 0.0
    %846 = vmatprep.subr.mxu0 0.0
    %847 = vmatpush1.msra.mxu0 0.0
    %848 = vmatprep.subr.mxu0 0.0
    %849 = vmatpush1.msra.mxu0 0.0
    %850 = vmatprep.subr.mxu0 0.0
    %851 = vmatpush1.msra.mxu0 0.0
    %852 = vmatprep.subr.mxu0 0.0
    %853 = vmatpush1.msra.mxu0 0.0
    %854 = vmatprep.subr.mxu0 0.0
    %855 = vmatpush1.msra.mxu0 0.0
    %856 = vmatprep.subr.mxu0 0.0
    %857 = vmatpush1.msra.mxu0 0.0
    %858 = vmatprep.subr.mxu0 0.0
    %859 = vmatpush1.msra.mxu0 0.0
    %860 = vmatprep.subr.mxu0 0.0
    %861 = vmatpush1.msra.mxu0 0.0
    %862 = vmatprep.subr.mxu0 0.0
    %863 = vmatpush1.msra.mxu0 0.0
    %864 = vmatprep.subr.mxu0 0.0
    %865 = vmatpush1.msra.mxu0 0.0
    %866 = vmatprep.subr.mxu0 0.0
    %867 = vmatpush1.msra.mxu0 0.0
    %868 = vmatprep.subr.mxu0 0.0
    %869 = vmatpush1.msra.mxu0 0.0
    %870 = vmatprep.subr.mxu0 0.0
    %871 = vmatpush1.msra.mxu0 0.0
    %872 = vmatprep.subr.mxu0 0.0
    %873 = vmatpush1.msra.mxu0 0.0
    %874 = vmatprep.subr.mxu0 0.0
    %875 = vmatpush1.msra.mxu0 0.0
    %876 = vmatprep.subr.mxu0 0.0
    %877 = vmatpush1.msra.mxu0 0.0
    %878 = vmatprep.subr.mxu0 0.0
    %879 = vmatpush1.msra.mxu0 0.0
    %880 = vmatprep.subr.mxu0 0.0
    %881 = vmatpush1.msra.mxu0 0.0
    %882 = vmatprep.subr.mxu0 0.0
    %883 = vmatpush1.msra.mxu0 0.0
    %884 = vmatprep.subr.mxu0 0.0
    %885 = vmatpush1.msra.mxu0 0.0
    %886 = vmatprep.subr.mxu0 0.0
    %887 = vmatpush1.msra.mxu0 0.0
    %888 = vmatprep.subr.mxu0 0.0
    %889 = vmatpush1.msra.mxu0 0.0
    %890 = vmatprep.mubr.f32.mxu0 0.0
    %891 = vmatmul.mubr.f32.gmra.mrb[0].mxu0 %v821
    %v892 = vpop.f32.mrb[0].mxu0
    %v893 = vadd.f32 0.0, %v892
    %v894 = vpop.f32.mrb[0].mxu0
    %895 = vmatprep.mubr.f32.mxu0 0.0
    %896 = vmatmul.mubr.f32.gmra.mrb[0].mxu0 %v824
    %v897 = vpop.f32.mrb[0].mxu0
    %v898 = vadd.f32 0.0, %v897
    %v899 = vpop.f32.mrb[0].mxu0
    %900 = vdwg.mxu0
    %901 = vrot.lane.b32.xlu0 %v166, 56
    %v902 = vpop.permute.xlu0 %901
    %903 = vrot.lane.b32.xlu0 %v171, 56
    %v904 = vpop.permute.xlu0 %903
    %v908 = vsel %vm361, %v812, 0
    %v911 = vsel %vm361, %v813, 0
    %913 = vmatprep.subr.mxu0 0.0
    %914 = vmatpush1.msra.mxu0 %v902
    %915 = vmatprep.subr.mxu0 0.0
    %916 = vmatpush1.msra.mxu0 %v904
    %917 = vmatprep.subr.mxu0 0.0
    %918 = vmatpush1.msra.mxu0 0.0
    %919 = vmatprep.subr.mxu0 0.0
    %920 = vmatpush1.msra.mxu0 0.0
    %921 = vmatprep.subr.mxu0 0.0
    %922 = vmatpush1.msra.mxu0 0.0
    %923 = vmatprep.subr.mxu0 0.0
    %924 = vmatpush1.msra.mxu0 0.0
    %925 = vmatprep.subr.mxu0 0.0
    %926 = vmatpush1.msra.mxu0 0.0
    %927 = vmatprep.subr.mxu0 0.0
    %928 = vmatpush1.msra.mxu0 0.0
    %929 = vmatprep.subr.mxu0 0.0
    %930 = vmatpush1.msra.mxu0 0.0
    %931 = vmatprep.subr.mxu0 0.0
    %932 = vmatpush1.msra.mxu0 0.0
    %933 = vmatprep.subr.mxu0 0.0
    %934 = vmatpush1.msra.mxu0 0.0
    %935 = vmatprep.subr.mxu0 0.0
    %936 = vmatpush1.msra.mxu0 0.0
    %937 = vmatprep.subr.mxu0 0.0
    %938 = vmatpush1.msra.mxu0 0.0
    %939 = vmatprep.subr.mxu0 0.0
    %940 = vmatpush1.msra.mxu0 0.0
    %941 = vmatprep.subr.mxu0 0.0
    %942 = vmatpush1.msra.mxu0 0.0
    %943 = vmatprep.subr.mxu0 0.0
    %944 = vmatpush1.msra.mxu0 0.0
    %945 = vmatprep.subr.mxu0 0.0
    %946 = vmatpush1.msra.mxu0 0.0
    %947 = vmatprep.subr.mxu0 0.0
    %948 = vmatpush1.msra.mxu0 0.0
    %949 = vmatprep.subr.mxu0 0.0
    %950 = vmatpush1.msra.mxu0 0.0
    %951 = vmatprep.subr.mxu0 0.0
    %952 = vmatpush1.msra.mxu0 0.0
    %953 = vmatprep.subr.mxu0 0.0
    %954 = vmatpush1.msra.mxu0 0.0
    %955 = vmatprep.subr.mxu0 0.0
    %956 = vmatpush1.msra.mxu0 0.0
    %957 = vmatprep.subr.mxu0 0.0
    %958 = vmatpush1.msra.mxu0 0.0
    %959 = vmatprep.subr.mxu0 0.0
    %960 = vmatpush1.msra.mxu0 0.0
    %961 = vmatprep.subr.mxu0 0.0
    %962 = vmatpush1.msra.mxu0 0.0
    %963 = vmatprep.subr.mxu0 0.0
    %964 = vmatpush1.msra.mxu0 0.0
    %965 = vmatprep.subr.mxu0 0.0
    %966 = vmatpush1.msra.mxu0 0.0
    %967 = vmatprep.subr.mxu0 0.0
    %968 = vmatpush1.msra.mxu0 0.0
    %969 = vmatprep.subr.mxu0 0.0
    %970 = vmatpush1.msra.mxu0 0.0
    %971 = vmatprep.subr.mxu0 0.0
    %972 = vmatpush1.msra.mxu0 0.0
    %973 = vmatprep.subr.mxu0 0.0
    %974 = vmatpush1.msra.mxu0 0.0
    %975 = vmatprep.subr.mxu0 0.0
    %976 = vmatpush1.msra.mxu0 0.0
    %977 = vmatprep.mubr.f32.mxu0 0.0
    %978 = vmatmul.mubr.f32.gmra.mrb[0].mxu0 %v908
    %v979 = vpop.f32.mrb[0].mxu0
    %v980 = vadd.f32 0.0, %v979
    %v981 = vpop.f32.mrb[0].mxu0
    %982 = vmatprep.mubr.f32.mxu0 0.0
    %983 = vmatmul.mubr.f32.gmra.mrb[0].mxu0 %v911
    %v984 = vpop.f32.mrb[0].mxu0
    %v985 = vadd.f32 0.0, %v984
    %v986 = vpop.f32.mrb[0].mxu0
    %987 = vdwg.mxu0
    %988 = vrot.lane.b32.xlu0 %v156, 112
    %v989 = vpop.permute.xlu0 %988
    %990 = vrot.lane.b32.xlu0 %v161, 112
    %v991 = vpop.permute.xlu0 %990
    %992 = vrot.lane.b32.xlu0 %v156, 80
    %v993 = vpop.permute.xlu0 %992
    %994 = vrot.lane.b32.xlu0 %v161, 80
    %v995 = vpop.permute.xlu0 %994
    %v996 = vsel %vm180, %v989, 0
    %v998 = vsel %vm180, %v991, 0
    %v1000 = vsel %vm180, %v993, 0
    %v1002 = vsel %vm180, %v995, 0
    %1004 = vmatprep.subr.mxu0 0.0
    %1005 = vmatpush1.xpose.msra.mxu0 %v1000
    %1006 = vmatprep.subr.mxu0 0.0
    %1007 = vmatpush1.xpose.msra.mxu0 %v1002
    %1008 = vmatprep.subr.mxu0 0.0
    %1009 = vmatpush1.xpose.msra.mxu0 0.0
    %1010 = vmatprep.subr.mxu0 0.0
    %1011 = vmatpush1.xpose.msra.mxu0 0.0
    %1012 = vmatprep.subr.mxu0 0.0
    %1013 = vmatpush1.xpose.msra.mxu0 0.0
    %1014 = vmatprep.subr.mxu0 0.0
    %1015 = vmatpush1.xpose.msra.mxu0 0.0
    %1016 = vmatprep.subr.mxu0 0.0
    %1017 = vmatpush1.xpose.msra.mxu0 0.0
    %1018 = vmatprep.subr.mxu0 0.0
    %1019 = vmatpush1.xpose.msra.mxu0 0.0
    %1020 = vmatprep.subr.mxu0 0.0
    %1021 = vmatpush1.xpose.msra.mxu0 0.0
    %1022 = vmatprep.subr.mxu0 0.0
    %1023 = vmatpush1.xpose.msra.mxu0 0.0
    %1024 = vmatprep.subr.mxu0 0.0
    %1025 = vmatpush1.xpose.msra.mxu0 0.0
    %1026 = vmatprep.subr.mxu0 0.0
    %1027 = vmatpush1.xpose.msra.mxu0 0.0
    %1028 = vmatprep.subr.mxu0 0.0
    %1029 = vmatpush1.xpose.msra.mxu0 0.0
    %1030 = vmatprep.subr.mxu0 0.0
    %1031 = vmatpush1.xpose.msra.mxu0 0.0
    %1032 = vmatprep.subr.mxu0 0.0
    %1033 = vmatpush1.xpose.msra.mxu0 0.0
    %1034 = vmatprep.subr.mxu0 0.0
    %1035 = vmatpush1.xpose.msra.mxu0 0.0
    %1036 = vmatprep.subr.mxu0 0.0
    %1037 = vmatpush1.xpose.msra.mxu0 0.0
    %1038 = vmatprep.subr.mxu0 0.0
    %1039 = vmatpush1.xpose.msra.mxu0 0.0
    %1040 = vmatprep.subr.mxu0 0.0
    %1041 = vmatpush1.xpose.msra.mxu0 0.0
    %1042 = vmatprep.subr.mxu0 0.0
    %1043 = vmatpush1.xpose.msra.mxu0 0.0
    %1044 = vmatprep.subr.mxu0 0.0
    %1045 = vmatpush1.xpose.msra.mxu0 0.0
    %1046 = vmatprep.subr.mxu0 0.0
    %1047 = vmatpush1.xpose.msra.mxu0 0.0
    %1048 = vmatprep.subr.mxu0 0.0
    %1049 = vmatpush1.xpose.msra.mxu0 0.0
    %1050 = vmatprep.subr.mxu0 0.0
    %1051 = vmatpush1.xpose.msra.mxu0 0.0
    %1052 = vmatprep.subr.mxu0 0.0
    %1053 = vmatpush1.xpose.msra.mxu0 0.0
    %1054 = vmatprep.subr.mxu0 0.0
    %1055 = vmatpush1.xpose.msra.mxu0 0.0
    %1056 = vmatprep.subr.mxu0 0.0
    %1057 = vmatpush1.xpose.msra.mxu0 0.0
    %1058 = vmatprep.subr.mxu0 0.0
    %1059 = vmatpush1.xpose.msra.mxu0 0.0
    %1060 = vmatprep.subr.mxu0 0.0
    %1061 = vmatpush1.xpose.msra.mxu0 0.0
    %1062 = vmatprep.subr.mxu0 0.0
    %1063 = vmatpush1.xpose.msra.mxu0 0.0
    %1064 = vmatprep.subr.mxu0 0.0
    %1065 = vmatpush1.xpose.msra.mxu0 0.0
    %1066 = vmatprep.subr.mxu0 0.0
    %1067 = vmatpush1.xpose.msra.mxu0 0.0
    %1068 = vmatprep.mubr.f32.mxu0 0.0
    %1069 = vmatmul.mubr.f32.gmra.mrb[0].mxu0 %v996
    %v1070 = vpop.f32.mrb[0].mxu0
    %v1071 = vadd.f32 0.0, %v1070
    %v1072 = vpop.f32.mrb[0].mxu0
    %1073 = vmatprep.mubr.f32.mxu0 0.0
    %1074 = vmatmul.mubr.f32.gmra.mrb[0].mxu0 %v998
    %v1075 = vpop.f32.mrb[0].mxu0
    %v1076 = vadd.f32 0.0, %v1075
    %v1077 = vpop.f32.mrb[0].mxu0
    %1078 = vdwg.mxu0
    %1079 = vrot.lane.b32.xlu0 %v166, 112
    %v1080 = vpop.permute.xlu0 %1079
    %1081 = vrot.lane.b32.xlu0 %v171, 112
    %v1082 = vpop.permute.xlu0 %1081
    %1083 = vrot.lane.b32.xlu0 %v166, 80
    %v1084 = vpop.permute.xlu0 %1083
    %1085 = vrot.lane.b32.xlu0 %v171, 80
    %v1086 = vpop.permute.xlu0 %1085
    %v1087 = vsel %vm180, %v1080, 0
    %v1089 = vsel %vm180, %v1082, 0
    %v1091 = vsel %vm180, %v1084, 0
    %v1093 = vsel %vm180, %v1086, 0
    %1095 = vmatprep.subr.mxu0 0.0
    %1096 = vmatpush1.xpose.msra.mxu0 %v1091
    %1097 = vmatprep.subr.mxu0 0.0
    %1098 = vmatpush1.xpose.msra.mxu0 %v1093
    %1099 = vmatprep.subr.mxu0 0.0
    %1100 = vmatpush1.xpose.msra.mxu0 0.0
    %1101 = vmatprep.subr.mxu0 0.0
    %1102 = vmatpush1.xpose.msra.mxu0 0.0
    %1103 = vmatprep.subr.mxu0 0.0
    %1104 = vmatpush1.xpose.msra.mxu0 0.0
    %1105 = vmatprep.subr.mxu0 0.0
    %1106 = vmatpush1.xpose.msra.mxu0 0.0
    %1107 = vmatprep.subr.mxu0 0.0
    %1108 = vmatpush1.xpose.msra.mxu0 0.0
    %1109 = vmatprep.subr.mxu0 0.0
    %1110 = vmatpush1.xpose.msra.mxu0 0.0
    %1111 = vmatprep.subr.mxu0 0.0
    %1112 = vmatpush1.xpose.msra.mxu0 0.0
    %1113 = vmatprep.subr.mxu0 0.0
    %1114 = vmatpush1.xpose.msra.mxu0 0.0
    %1115 = vmatprep.subr.mxu0 0.0
    %1116 = vmatpush1.xpose.msra.mxu0 0.0
    %1117 = vmatprep.subr.mxu0 0.0
    %1118 = vmatpush1.xpose.msra.mxu0 0.0
    %1119 = vmatprep.subr.mxu0 0.0
    %1120 = vmatpush1.xpose.msra.mxu0 0.0
    %1121 = vmatprep.subr.mxu0 0.0
    %1122 = vmatpush1.xpose.msra.mxu0 0.0
    %1123 = vmatprep.subr.mxu0 0.0
    %1124 = vmatpush1.xpose.msra.mxu0 0.0
    %1125 = vmatprep.subr.mxu0 0.0
    %1126 = vmatpush1.xpose.msra.mxu0 0.0
    %1127 = vmatprep.subr.mxu0 0.0
    %1128 = vmatpush1.xpose.msra.mxu0 0.0
    %1129 = vmatprep.subr.mxu0 0.0
    %1130 = vmatpush1.xpose.msra.mxu0 0.0
    %1131 = vmatprep.subr.mxu0 0.0
    %1132 = vmatpush1.xpose.msra.mxu0 0.0
    %1133 = vmatprep.subr.mxu0 0.0
    %1134 = vmatpush1.xpose.msra.mxu0 0.0
    %1135 = vmatprep.subr.mxu0 0.0
    %1136 = vmatpush1.xpose.msra.mxu0 0.0
    %1137 = vmatprep.subr.mxu0 0.0
    %1138 = vmatpush1.xpose.msra.mxu0 0.0
    %1139 = vmatprep.subr.mxu0 0.0
    %1140 = vmatpush1.xpose.msra.mxu0 0.0
    %1141 = vmatprep.subr.mxu0 0.0
    %1142 = vmatpush1.xpose.msra.mxu0 0.0
    %1143 = vmatprep.subr.mxu0 0.0
    %1144 = vmatpush1.xpose.msra.mxu0 0.0
    %1145 = vmatprep.subr.mxu0 0.0
    %1146 = vmatpush1.xpose.msra.mxu0 0.0
    %1147 = vmatprep.subr.mxu0 0.0
    %1148 = vmatpush1.xpose.msra.mxu0 0.0
    %1149 = vmatprep.subr.mxu0 0.0
    %1150 = vmatpush1.xpose.msra.mxu0 0.0
    %1151 = vmatprep.subr.mxu0 0.0
    %1152 = vmatpush1.xpose.msra.mxu0 0.0
    %1153 = vmatprep.subr.mxu0 0.0
    %1154 = vmatpush1.xpose.msra.mxu0 0.0
    %1155 = vmatprep.subr.mxu0 0.0
    %1156 = vmatpush1.xpose.msra.mxu0 0.0
    %1157 = vmatprep.subr.mxu0 0.0
    %1158 = vmatpush1.xpose.msra.mxu0 0.0
    %1159 = vmatprep.mubr.f32.mxu0 0.0
    %1160 = vmatmul.mubr.f32.gmra.mrb[0].mxu0 %v1087
    %v1161 = vpop.f32.mrb[0].mxu0
    %v1162 = vadd.f32 0.0, %v1161
    %v1163 = vpop.f32.mrb[0].mxu0
    %1164 = vmatprep.mubr.f32.mxu0 0.0
    %1165 = vmatmul.mubr.f32.gmra.mrb[0].mxu0 %v1089
    %v1166 = vpop.f32.mrb[0].mxu0
    %v1167 = vadd.f32 0.0, %v1166
    %v1168 = vpop.f32.mrb[0].mxu0
    %1169 = vdwg.mxu0
    %v1170 = vmul.f32 %v1071, 0.35355338
    %v1171 = vmul.f32 %v1076, 0.35355338
    %v1172 = vmul.f32 %v1162, 0.35355338
    %v1173 = vmul.f32 %v1167, 0.35355338
    %v1174 = vadd.f32 %v1170, %v60
    %v1175 = vadd.f32 %v1171, %v60
    %v1176 = vadd.f32 %v1172, %v60
    %v1177 = vadd.f32 %v1173, %v60
    %v1178 = vsel %vm361, %v1174, -inf
    %1179 = vmax.xlane.f32.xlu0 %v1178
    %v1180 = vpop.xlane.xlu0 %1179
    %v1181 = vsel %vm361, %v1175, -inf
    %1182 = vmax.xlane.f32.xlu0 %v1181
    %v1183 = vpop.xlane.xlu0 %1182
    %v1184 = vsel %vm361, %v1176, -inf
    %1185 = vmax.xlane.f32.xlu0 %v1184
    %v1186 = vpop.xlane.xlu0 %1185
    %v1187 = vsel %vm361, %v1177, -inf
    %1188 = vmax.xlane.f32.xlu0 %v1187
    %v1189 = vpop.xlane.xlu0 %1188
    %v1190 = vsub.f32 %v1174, %v1180
    %v1191 = vsub.f32 %v1175, %v1183
    %v1192 = vsub.f32 %v1176, %v1186
    %v1193 = vsub.f32 %v1177, %v1189
    %v1194 = vmul.f32 %v1190, 1.442695
    %v1195 = vpow.pop %v1194
    %v1196 = vmul.f32 %v1191, 1.442695
    %v1197 = vpow.pop %v1196
    %v1198 = vmul.f32 %v1192, 1.442695
    %v1199 = vpow.pop %v1198
    %v1200 = vmul.f32 %v1193, 1.442695
    %v1201 = vpow.pop %v1200
    %v1202 = vsel %vm361, %v1195, 0.0
    %1203 = vadd.xlane.f32.xlu0 %v1202
    %v1204 = vpop.xlane.xlu0 %1203
    %v1205 = vsel %vm361, %v1197, 0.0
    %1206 = vadd.xlane.f32.xlu0 %v1205
    %v1207 = vpop.xlane.xlu0 %1206
    %v1208 = vsel %vm361, %v1199, 0.0
    %1209 = vadd.xlane.f32.xlu0 %v1208
    %v1210 = vpop.xlane.xlu0 %1209
    %v1211 = vsel %vm361, %v1201, 0.0
    %1212 = vadd.xlane.f32.xlu0 %v1211
    %v1213 = vpop.xlane.xlu0 %1212
    %v1214 = vrcp.pop %v1204
    %v1215 = vrcp.pop %v1207
    %v1216 = vrcp.pop %v1210
    %v1217 = vrcp.pop %v1213
    %v1218 = vmul.f32 %v1195, %v1214
    %v1219 = vmul.f32 %v1197, %v1215
    %v1220 = vmul.f32 %v1199, %v1216
    %v1221 = vmul.f32 %v1201, %v1217
    %1222 = vrot.lane.b32.xlu0 %v156, 48
    %v1223 = vpop.permute.xlu0 %1222
    %1224 = vrot.lane.b32.xlu0 %v161, 48
    %v1225 = vpop.permute.xlu0 %1224
    %v1229 = vsel %vm361, %v1218, 0
    %v1232 = vsel %vm361, %v1219, 0
    %1234 = vmatprep.subr.mxu0 0.0
    %1235 = vmatpush1.msra.mxu0 %v1223
    %1236 = vmatprep.subr.mxu0 0.0
    %1237 = vmatpush1.msra.mxu0 %v1225
    %1238 = vmatprep.subr.mxu0 0.0
    %1239 = vmatpush1.msra.mxu0 0.0
    %1240 = vmatprep.subr.mxu0 0.0
    %1241 = vmatpush1.msra.mxu0 0.0
    %1242 = vmatprep.subr.mxu0 0.0
    %1243 = vmatpush1.msra.mxu0 0.0
    %1244 = vmatprep.subr.mxu0 0.0
    %1245 = vmatpush1.msra.mxu0 0.0
    %1246 = vmatprep.subr.mxu0 0.0
    %1247 = vmatpush1.msra.mxu0 0.0
    %1248 = vmatprep.subr.mxu0 0.0
    %1249 = vmatpush1.msra.mxu0 0.0
    %1250 = vmatprep.subr.mxu0 0.0
    %1251 = vmatpush1.msra.mxu0 0.0
    %1252 = vmatprep.subr.mxu0 0.0
    %1253 = vmatpush1.msra.mxu0 0.0
    %1254 = vmatprep.subr.mxu0 0.0
    %1255 = vmatpush1.msra.mxu0 0.0
    %1256 = vmatprep.subr.mxu0 0.0
    %1257 = vmatpush1.msra.mxu0 0.0
    %1258 = vmatprep.subr.mxu0 0.0
    %1259 = vmatpush1.msra.mxu0 0.0
    %1260 = vmatprep.subr.mxu0 0.0
    %1261 = vmatpush1.msra.mxu0 0.0
    %1262 = vmatprep.subr.mxu0 0.0
    %1263 = vmatpush1.msra.mxu0 0.0
    %1264 = vmatprep.subr.mxu0 0.0
    %1265 = vmatpush1.msra.mxu0 0.0
    %1266 = vmatprep.subr.mxu0 0.0
    %1267 = vmatpush1.msra.mxu0 0.0
    %1268 = vmatprep.subr.mxu0 0.0
    %1269 = vmatpush1.msra.mxu0 0.0
    %1270 = vmatprep.subr.mxu0 0.0
    %1271 = vmatpush1.msra.mxu0 0.0
    %1272 = vmatprep.subr.mxu0 0.0
    %1273 = vmatpush1.msra.mxu0 0.0
    %1274 = vmatprep.subr.mxu0 0.0
    %1275 = vmatpush1.msra.mxu0 0.0
    %1276 = vmatprep.subr.mxu0 0.0
    %1277 = vmatpush1.msra.mxu0 0.0
    %1278 = vmatprep.subr.mxu0 0.0
    %1279 = vmatpush1.msra.mxu0 0.0
    %1280 = vmatprep.subr.mxu0 0.0
    %1281 = vmatpush1.msra.mxu0 0.0
    %1282 = vmatprep.subr.mxu0 0.0
    %1283 = vmatpush1.msra.mxu0 0.0
    %1284 = vmatprep.subr.mxu0 0.0
    %1285 = vmatpush1.msra.mxu0 0.0
    %1286 = vmatprep.subr.mxu0 0.0
    %1287 = vmatpush1.msra.mxu0 0.0
    %1288 = vmatprep.subr.mxu0 0.0
    %1289 = vmatpush1.msra.mxu0 0.0
    %1290 = vmatprep.subr.mxu0 0.0
    %1291 = vmatpush1.msra.mxu0 0.0
    %1292 = vmatprep.subr.mxu0 0.0
    %1293 = vmatpush1.msra.mxu0 0.0
    %1294 = vmatprep.subr.mxu0 0.0
    %1295 = vmatpush1.msra.mxu0 0.0
    %1296 = vmatprep.subr.mxu0 0.0
    %1297 = vmatpush1.msra.mxu0 0.0
    %1298 = vmatprep.mubr.f32.mxu0 0.0
    %1299 = vmatmul.mubr.f32.gmra.mrb[0].mxu0 %v1229
    %v1300 = vpop.f32.mrb[0].mxu0
    %v1301 = vadd.f32 0.0, %v1300
    %v1302 = vpop.f32.mrb[0].mxu0
    %1303 = vmatprep.mubr.f32.mxu0 0.0
    %1304 = vmatmul.mubr.f32.gmra.mrb[0].mxu0 %v1232
    %v1305 = vpop.f32.mrb[0].mxu0
    %v1306 = vadd.f32 0.0, %v1305
    %v1307 = vpop.f32.mrb[0].mxu0
    %1308 = vdwg.mxu0
    %1309 = vrot.lane.b32.xlu0 %v166, 48
    %v1310 = vpop.permute.xlu0 %1309
    %1311 = vrot.lane.b32.xlu0 %v171, 48
    %v1312 = vpop.permute.xlu0 %1311
    %v1316 = vsel %vm361, %v1220, 0
    %v1319 = vsel %vm361, %v1221, 0
    %1321 = vmatprep.subr.mxu0 0.0
    %1322 = vmatpush1.msra.mxu0 %v1310
    %1323 = vmatprep.subr.mxu0 0.0
    %1324 = vmatpush1.msra.mxu0 %v1312
    %1325 = vmatprep.subr.mxu0 0.0
    %1326 = vmatpush1.msra.mxu0 0.0
    %1327 = vmatprep.subr.mxu0 0.0
    %1328 = vmatpush1.msra.mxu0 0.0
    %1329 = vmatprep.subr.mxu0 0.0
    %1330 = vmatpush1.msra.mxu0 0.0
    %1331 = vmatprep.subr.mxu0 0.0
    %1332 = vmatpush1.msra.mxu0 0.0
    %1333 = vmatprep.subr.mxu0 0.0
    %1334 = vmatpush1.msra.mxu0 0.0
    %1335 = vmatprep.subr.mxu0 0.0
    %1336 = vmatpush1.msra.mxu0 0.0
    %1337 = vmatprep.subr.mxu0 0.0
    %1338 = vmatpush1.msra.mxu0 0.0
    %1339 = vmatprep.subr.mxu0 0.0
    %1340 = vmatpush1.msra.mxu0 0.0
    %1341 = vmatprep.subr.mxu0 0.0
    %1342 = vmatpush1.msra.mxu0 0.0
    %1343 = vmatprep.subr.mxu0 0.0
    %1344 = vmatpush1.msra.mxu0 0.0
    %1345 = vmatprep.subr.mxu0 0.0
    %1346 = vmatpush1.msra.mxu0 0.0
    %1347 = vmatprep.subr.mxu0 0.0
    %1348 = vmatpush1.msra.mxu0 0.0
    %1349 = vmatprep.subr.mxu0 0.0
    %1350 = vmatpush1.msra.mxu0 0.0
    %1351 = vmatprep.subr.mxu0 0.0
    %1352 = vmatpush1.msra.mxu0 0.0
    %1353 = vmatprep.subr.mxu0 0.0
    %1354 = vmatpush1.msra.mxu0 0.0
    %1355 = vmatprep.subr.mxu0 0.0
    %1356 = vmatpush1.msra.mxu0 0.0
    %1357 = vmatprep.subr.mxu0 0.0
    %1358 = vmatpush1.msra.mxu0 0.0
    %1359 = vmatprep.subr.mxu0 0.0
    %1360 = vmatpush1.msra.mxu0 0.0
    %1361 = vmatprep.subr.mxu0 0.0
    %1362 = vmatpush1.msra.mxu0 0.0
    %1363 = vmatprep.subr.mxu0 0.0
    %1364 = vmatpush1.msra.mxu0 0.0
    %1365 = vmatprep.subr.mxu0 0.0
    %1366 = vmatpush1.msra.mxu0 0.0
    %1367 = vmatprep.subr.mxu0 0.0
    %1368 = vmatpush1.msra.mxu0 0.0
    %1369 = vmatprep.subr.mxu0 0.0
    %1370 = vmatpush1.msra.mxu0 0.0
    %1371 = vmatprep.subr.mxu0 0.0
    %1372 = vmatpush1.msra.mxu0 0.0
    %1373 = vmatprep.subr.mxu0 0.0
    %1374 = vmatpush1.msra.mxu0 0.0
    %1375 = vmatprep.subr.mxu0 0.0
    %1376 = vmatpush1.msra.mxu0 0.0
    %1377 = vmatprep.subr.mxu0 0.0
    %1378 = vmatpush1.msra.mxu0 0.0
    %1379 = vmatprep.subr.mxu0 0.0
    %1380 = vmatpush1.msra.mxu0 0.0
    %1381 = vmatprep.subr.mxu0 0.0
    %1382 = vmatpush1.msra.mxu0 0.0
    %1383 = vmatprep.subr.mxu0 0.0
    %1384 = vmatpush1.msra.mxu0 0.0
    %1385 = vmatprep.mubr.f32.mxu0 0.0
    %1386 = vmatmul.mubr.f32.gmra.mrb[0].mxu0 %v1316
    %v1387 = vpop.f32.mrb[0].mxu0
    %v1388 = vadd.f32 0.0, %v1387
    %v1389 = vpop.f32.mrb[0].mxu0
    %1390 = vmatprep.mubr.f32.mxu0 0.0
    %1391 = vmatmul.mubr.f32.gmra.mrb[0].mxu0 %v1319
    %v1392 = vpop.f32.mrb[0].mxu0
    %v1393 = vadd.f32 0.0, %v1392
    %v1394 = vpop.f32.mrb[0].mxu0
    %1395 = vdwg.mxu0
    %1396 = vrot.lane.b32.xlu0 %v156, 104
    %v1397 = vpop.permute.xlu0 %1396
    %1398 = vrot.lane.b32.xlu0 %v161, 104
    %v1399 = vpop.permute.xlu0 %1398
    %1400 = vrot.lane.b32.xlu0 %v156, 72
    %v1401 = vpop.permute.xlu0 %1400
    %1402 = vrot.lane.b32.xlu0 %v161, 72
    %v1403 = vpop.permute.xlu0 %1402
    %v1404 = vsel %vm180, %v1397, 0
    %v1406 = vsel %vm180, %v1399, 0
    %v1408 = vsel %vm180, %v1401, 0
    %v1410 = vsel %vm180, %v1403, 0
    %1412 = vmatprep.subr.mxu0 0.0
    %1413 = vmatpush1.xpose.msra.mxu0 %v1408
    %1414 = vmatprep.subr.mxu0 0.0
    %1415 = vmatpush1.xpose.msra.mxu0 %v1410
    %1416 = vmatprep.subr.mxu0 0.0
    %1417 = vmatpush1.xpose.msra.mxu0 0.0
    %1418 = vmatprep.subr.mxu0 0.0
    %1419 = vmatpush1.xpose.msra.mxu0 0.0
    %1420 = vmatprep.subr.mxu0 0.0
    %1421 = vmatpush1.xpose.msra.mxu0 0.0
    %1422 = vmatprep.subr.mxu0 0.0
    %1423 = vmatpush1.xpose.msra.mxu0 0.0
    %1424 = vmatprep.subr.mxu0 0.0
    %1425 = vmatpush1.xpose.msra.mxu0 0.0
    %1426 = vmatprep.subr.mxu0 0.0
    %1427 = vmatpush1.xpose.msra.mxu0 0.0
    %1428 = vmatprep.subr.mxu0 0.0
    %1429 = vmatpush1.xpose.msra.mxu0 0.0
    %1430 = vmatprep.subr.mxu0 0.0
    %1431 = vmatpush1.xpose.msra.mxu0 0.0
    %1432 = vmatprep.subr.mxu0 0.0
    %1433 = vmatpush1.xpose.msra.mxu0 0.0
    %1434 = vmatprep.subr.mxu0 0.0
    %1435 = vmatpush1.xpose.msra.mxu0 0.0
    %1436 = vmatprep.subr.mxu0 0.0
    %1437 = vmatpush1.xpose.msra.mxu0 0.0
    %1438 = vmatprep.subr.mxu0 0.0
    %1439 = vmatpush1.xpose.msra.mxu0 0.0
    %1440 = vmatprep.subr.mxu0 0.0
    %1441 = vmatpush1.xpose.msra.mxu0 0.0
    %1442 = vmatprep.subr.mxu0 0.0
    %1443 = vmatpush1.xpose.msra.mxu0 0.0
    %1444 = vmatprep.subr.mxu0 0.0
    %1445 = vmatpush1.xpose.msra.mxu0 0.0
    %1446 = vmatprep.subr.mxu0 0.0
    %1447 = vmatpush1.xpose.msra.mxu0 0.0
    %1448 = vmatprep.subr.mxu0 0.0
    %1449 = vmatpush1.xpose.msra.mxu0 0.0
    %1450 = vmatprep.subr.mxu0 0.0
    %1451 = vmatpush1.xpose.msra.mxu0 0.0
    %1452 = vmatprep.subr.mxu0 0.0
    %1453 = vmatpush1.xpose.msra.mxu0 0.0
    %1454 = vmatprep.subr.mxu0 0.0
    %1455 = vmatpush1.xpose.msra.mxu0 0.0
    %1456 = vmatprep.subr.mxu0 0.0
    %1457 = vmatpush1.xpose.msra.mxu0 0.0
    %1458 = vmatprep.subr.mxu0 0.0
    %1459 = vmatpush1.xpose.msra.mxu0 0.0
    %1460 = vmatprep.subr.mxu0 0.0
    %1461 = vmatpush1.xpose.msra.mxu0 0.0
    %1462 = vmatprep.subr.mxu0 0.0
    %1463 = vmatpush1.xpose.msra.mxu0 0.0
    %1464 = vmatprep.subr.mxu0 0.0
    %1465 = vmatpush1.xpose.msra.mxu0 0.0
    %1466 = vmatprep.subr.mxu0 0.0
    %1467 = vmatpush1.xpose.msra.mxu0 0.0
    %1468 = vmatprep.subr.mxu0 0.0
    %1469 = vmatpush1.xpose.msra.mxu0 0.0
    %1470 = vmatprep.subr.mxu0 0.0
    %1471 = vmatpush1.xpose.msra.mxu0 0.0
    %1472 = vmatprep.subr.mxu0 0.0
    %1473 = vmatpush1.xpose.msra.mxu0 0.0
    %1474 = vmatprep.subr.mxu0 0.0
    %1475 = vmatpush1.xpose.msra.mxu0 0.0
    %1476 = vmatprep.mubr.f32.mxu0 0.0
    %1477 = vmatmul.mubr.f32.gmra.mrb[0].mxu0 %v1404
    %v1478 = vpop.f32.mrb[0].mxu0
    %v1479 = vadd.f32 0.0, %v1478
    %v1480 = vpop.f32.mrb[0].mxu0
    %1481 = vmatprep.mubr.f32.mxu0 0.0
    %1482 = vmatmul.mubr.f32.gmra.mrb[0].mxu0 %v1406
    %v1483 = vpop.f32.mrb[0].mxu0
    %v1484 = vadd.f32 0.0, %v1483
    %v1485 = vpop.f32.mrb[0].mxu0
    %1486 = vdwg.mxu0
    %1487 = vrot.lane.b32.xlu0 %v166, 104
    %v1488 = vpop.permute.xlu0 %1487
    %1489 = vrot.lane.b32.xlu0 %v171, 104
    %v1490 = vpop.permute.xlu0 %1489
    %1491 = vrot.lane.b32.xlu0 %v166, 72
    %v1492 = vpop.permute.xlu0 %1491
    %1493 = vrot.lane.b32.xlu0 %v171, 72
    %v1494 = vpop.permute.xlu0 %1493
    %v1495 = vsel %vm180, %v1488, 0
    %v1497 = vsel %vm180, %v1490, 0
    %v1499 = vsel %vm180, %v1492, 0
    %v1501 = vsel %vm180, %v1494, 0
    %1503 = vmatprep.subr.mxu0 0.0
    %1504 = vmatpush1.xpose.msra.mxu0 %v1499
    %1505 = vmatprep.subr.mxu0 0.0
    %1506 = vmatpush1.xpose.msra.mxu0 %v1501
    %1507 = vmatprep.subr.mxu0 0.0
    %1508 = vmatpush1.xpose.msra.mxu0 0.0
    %1509 = vmatprep.subr.mxu0 0.0
    %1510 = vmatpush1.xpose.msra.mxu0 0.0
    %1511 = vmatprep.subr.mxu0 0.0
    %1512 = vmatpush1.xpose.msra.mxu0 0.0
    %1513 = vmatprep.subr.mxu0 0.0
    %1514 = vmatpush1.xpose.msra.mxu0 0.0
    %1515 = vmatprep.subr.mxu0 0.0
    %1516 = vmatpush1.xpose.msra.mxu0 0.0
    %1517 = vmatprep.subr.mxu0 0.0
    %1518 = vmatpush1.xpose.msra.mxu0 0.0
    %1519 = vmatprep.subr.mxu0 0.0
    %1520 = vmatpush1.xpose.msra.mxu0 0.0
    %1521 = vmatprep.subr.mxu0 0.0
    %1522 = vmatpush1.xpose.msra.mxu0 0.0
    %1523 = vmatprep.subr.mxu0 0.0
    %1524 = vmatpush1.xpose.msra.mxu0 0.0
    %1525 = vmatprep.subr.mxu0 0.0
    %1526 = vmatpush1.xpose.msra.mxu0 0.0
    %1527 = vmatprep.subr.mxu0 0.0
    %1528 = vmatpush1.xpose.msra.mxu0 0.0
    %1529 = vmatprep.subr.mxu0 0.0
    %1530 = vmatpush1.xpose.msra.mxu0 0.0
    %1531 = vmatprep.subr.mxu0 0.0
    %1532 = vmatpush1.xpose.msra.mxu0 0.0
    %1533 = vmatprep.subr.mxu0 0.0
    %1534 = vmatpush1.xpose.msra.mxu0 0.0
    %1535 = vmatprep.subr.mxu0 0.0
    %1536 = vmatpush1.xpose.msra.mxu0 0.0
    %1537 = vmatprep.subr.mxu0 0.0
    %1538 = vmatpush1.xpose.msra.mxu0 0.0
    %1539 = vmatprep.subr.mxu0 0.0
    %1540 = vmatpush1.xpose.msra.mxu0 0.0
    %1541 = vmatprep.subr.mxu0 0.0
    %1542 = vmatpush1.xpose.msra.mxu0 0.0
    %1543 = vmatprep.subr.mxu0 0.0
    %1544 = vmatpush1.xpose.msra.mxu0 0.0
    %1545 = vmatprep.subr.mxu0 0.0
    %1546 = vmatpush1.xpose.msra.mxu0 0.0
    %1547 = vmatprep.subr.mxu0 0.0
    %1548 = vmatpush1.xpose.msra.mxu0 0.0
    %1549 = vmatprep.subr.mxu0 0.0
    %1550 = vmatpush1.xpose.msra.mxu0 0.0
    %1551 = vmatprep.subr.mxu0 0.0
    %1552 = vmatpush1.xpose.msra.mxu0 0.0
    %1553 = vmatprep.subr.mxu0 0.0
    %1554 = vmatpush1.xpose.msra.mxu0 0.0
    %1555 = vmatprep.subr.mxu0 0.0
    %1556 = vmatpush1.xpose.msra.mxu0 0.0
    %1557 = vmatprep.subr.mxu0 0.0
    %1558 = vmatpush1.xpose.msra.mxu0 0.0
    %1559 = vmatprep.subr.mxu0 0.0
    %1560 = vmatpush1.xpose.msra.mxu0 0.0
    %1561 = vmatprep.subr.mxu0 0.0
    %1562 = vmatpush1.xpose.msra.mxu0 0.0
    %1563 = vmatprep.subr.mxu0 0.0
    %1564 = vmatpush1.xpose.msra.mxu0 0.0
    %1565 = vmatprep.subr.mxu0 0.0
    %1566 = vmatpush1.xpose.msra.mxu0 0.0
    %1567 = vmatprep.mubr.f32.mxu0 0.0
    %1568 = vmatmul.mubr.f32.gmra.mrb[0].mxu0 %v1495
    %v1569 = vpop.f32.mrb[0].mxu0
    %v1570 = vadd.f32 0.0, %v1569
    %v1571 = vpop.f32.mrb[0].mxu0
    %1572 = vmatprep.mubr.f32.mxu0 0.0
    %1573 = vmatmul.mubr.f32.gmra.mrb[0].mxu0 %v1497
    %v1574 = vpop.f32.mrb[0].mxu0
    %v1575 = vadd.f32 0.0, %v1574
    %v1576 = vpop.f32.mrb[0].mxu0
    %1577 = vdwg.mxu0
    %v1578 = vmul.f32 %v1479, 0.35355338
    %v1579 = vmul.f32 %v1484, 0.35355338
    %v1580 = vmul.f32 %v1570, 0.35355338
    %v1581 = vmul.f32 %v1575, 0.35355338
    %v1582 = vadd.f32 %v1578, %v60
    %v1583 = vadd.f32 %v1579, %v60
    %v1584 = vadd.f32 %v1580, %v60
    %v1585 = vadd.f32 %v1581, %v60
    %v1586 = vsel %vm361, %v1582, -inf
    %1587 = vmax.xlane.f32.xlu0 %v1586
    %v1588 = vpop.xlane.xlu0 %1587
    %v1589 = vsel %vm361, %v1583, -inf
    %1590 = vmax.xlane.f32.xlu0 %v1589
    %v1591 = vpop.xlane.xlu0 %1590
    %v1592 = vsel %vm361, %v1584, -inf
    %1593 = vmax.xlane.f32.xlu0 %v1592
    %v1594 = vpop.xlane.xlu0 %1593
    %v1595 = vsel %vm361, %v1585, -inf
    %1596 = vmax.xlane.f32.xlu0 %v1595
    %v1597 = vpop.xlane.xlu0 %1596
    %v1598 = vsub.f32 %v1582, %v1588
    %v1599 = vsub.f32 %v1583, %v1591
    %v1600 = vsub.f32 %v1584, %v1594
    %v1601 = vsub.f32 %v1585, %v1597
    %v1602 = vmul.f32 %v1598, 1.442695
    %v1603 = vpow.pop %v1602
    %v1604 = vmul.f32 %v1599, 1.442695
    %v1605 = vpow.pop %v1604
    %v1606 = vmul.f32 %v1600, 1.442695
    %v1607 = vpow.pop %v1606
    %v1608 = vmul.f32 %v1601, 1.442695
    %v1609 = vpow.pop %v1608
    %v1610 = vsel %vm361, %v1603, 0.0
    %1611 = vadd.xlane.f32.xlu0 %v1610
    %v1612 = vpop.xlane.xlu0 %1611
    %v1613 = vsel %vm361, %v1605, 0.0
    %1614 = vadd.xlane.f32.xlu0 %v1613
    %v1615 = vpop.xlane.xlu0 %1614
    %v1616 = vsel %vm361, %v1607, 0.0
    %1617 = vadd.xlane.f32.xlu0 %v1616
    %v1618 = vpop.xlane.xlu0 %1617
    %v1619 = vsel %vm361, %v1609, 0.0
    %1620 = vadd.xlane.f32.xlu0 %v1619
    %v1621 = vpop.xlane.xlu0 %1620
    %v1622 = vrcp.pop %v1612
    %v1623 = vrcp.pop %v1615
    %v1624 = vrcp.pop %v1618
    %v1625 = vrcp.pop %v1621
    %v1626 = vmul.f32 %v1603, %v1622
    %v1627 = vmul.f32 %v1605, %v1623
    %v1628 = vmul.f32 %v1607, %v1624
    %v1629 = vmul.f32 %v1609, %v1625
    %1630 = vrot.lane.b32.xlu0 %v156, 40
    %v1631 = vpop.permute.xlu0 %1630
    %1632 = vrot.lane.b32.xlu0 %v161, 40
    %v1633 = vpop.permute.xlu0 %1632
    %v1637 = vsel %vm361, %v1626, 0
    %v1640 = vsel %vm361, %v1627, 0
    %1642 = vmatprep.subr.mxu0 0.0
    %1643 = vmatpush1.msra.mxu0 %v1631
    %1644 = vmatprep.subr.mxu0 0.0
    %1645 = vmatpush1.msra.mxu0 %v1633
    %1646 = vmatprep.subr.mxu0 0.0
    %1647 = vmatpush1.msra.mxu0 0.0
    %1648 = vmatprep.subr.mxu0 0.0
    %1649 = vmatpush1.msra.mxu0 0.0
    %1650 = vmatprep.subr.mxu0 0.0
    %1651 = vmatpush1.msra.mxu0 0.0
    %1652 = vmatprep.subr.mxu0 0.0
    %1653 = vmatpush1.msra.mxu0 0.0
    %1654 = vmatprep.subr.mxu0 0.0
    %1655 = vmatpush1.msra.mxu0 0.0
    %1656 = vmatprep.subr.mxu0 0.0
    %1657 = vmatpush1.msra.mxu0 0.0
    %1658 = vmatprep.subr.mxu0 0.0
    %1659 = vmatpush1.msra.mxu0 0.0
    %1660 = vmatprep.subr.mxu0 0.0
    %1661 = vmatpush1.msra.mxu0 0.0
    %1662 = vmatprep.subr.mxu0 0.0
    %1663 = vmatpush1.msra.mxu0 0.0
    %1664 = vmatprep.subr.mxu0 0.0
    %1665 = vmatpush1.msra.mxu0 0.0
    %1666 = vmatprep.subr.mxu0 0.0
    %1667 = vmatpush1.msra.mxu0 0.0
    %1668 = vmatprep.subr.mxu0 0.0
    %1669 = vmatpush1.msra.mxu0 0.0
    %1670 = vmatprep.subr.mxu0 0.0
    %1671 = vmatpush1.msra.mxu0 0.0
    %1672 = vmatprep.subr.mxu0 0.0
    %1673 = vmatpush1.msra.mxu0 0.0
    %1674 = vmatprep.subr.mxu0 0.0
    %1675 = vmatpush1.msra.mxu0 0.0
    %1676 = vmatprep.subr.mxu0 0.0
    %1677 = vmatpush1.msra.mxu0 0.0
    %1678 = vmatprep.subr.mxu0 0.0
    %1679 = vmatpush1.msra.mxu0 0.0
    %1680 = vmatprep.subr.mxu0 0.0
    %1681 = vmatpush1.msra.mxu0 0.0
    %1682 = vmatprep.subr.mxu0 0.0
    %1683 = vmatpush1.msra.mxu0 0.0
    %1684 = vmatprep.subr.mxu0 0.0
    %1685 = vmatpush1.msra.mxu0 0.0
    %1686 = vmatprep.subr.mxu0 0.0
    %1687 = vmatpush1.msra.mxu0 0.0
    %1688 = vmatprep.subr.mxu0 0.0
    %1689 = vmatpush1.msra.mxu0 0.0
    %1690 = vmatprep.subr.mxu0 0.0
    %1691 = vmatpush1.msra.mxu0 0.0
    %1692 = vmatprep.subr.mxu0 0.0
    %1693 = vmatpush1.msra.mxu0 0.0
    %1694 = vmatprep.subr.mxu0 0.0
    %1695 = vmatpush1.msra.mxu0 0.0
    %1696 = vmatprep.subr.mxu0 0.0
    %1697 = vmatpush1.msra.mxu0 0.0
    %1698 = vmatprep.subr.mxu0 0.0
    %1699 = vmatpush1.msra.mxu0 0.0
    %1700 = vmatprep.subr.mxu0 0.0
    %1701 = vmatpush1.msra.mxu0 0.0
    %1702 = vmatprep.subr.mxu0 0.0
    %1703 = vmatpush1.msra.mxu0 0.0
    %1704 = vmatprep.subr.mxu0 0.0
    %1705 = vmatpush1.msra.mxu0 0.0
    %1706 = vmatprep.mubr.f32.mxu0 0.0
    %1707 = vmatmul.mubr.f32.gmra.mrb[0].mxu0 %v1637
    %v1708 = vpop.f32.mrb[0].mxu0
    %v1709 = vadd.f32 0.0, %v1708
    %v1710 = vpop.f32.mrb[0].mxu0
    %1711 = vmatprep.mubr.f32.mxu0 0.0
    %1712 = vmatmul.mubr.f32.gmra.mrb[0].mxu0 %v1640
    %v1713 = vpop.f32.mrb[0].mxu0
    %v1714 = vadd.f32 0.0, %v1713
    %v1715 = vpop.f32.mrb[0].mxu0
    %1716 = vdwg.mxu0
    %1717 = vrot.lane.b32.xlu0 %v166, 40
    %v1718 = vpop.permute.xlu0 %1717
    %1719 = vrot.lane.b32.xlu0 %v171, 40
    %v1720 = vpop.permute.xlu0 %1719
    %v1724 = vsel %vm361, %v1628, 0
    %v1727 = vsel %vm361, %v1629, 0
    %1729 = vmatprep.subr.mxu0 0.0
    %1730 = vmatpush1.msra.mxu0 %v1718
    %1731 = vmatprep.subr.mxu0 0.0
    %1732 = vmatpush1.msra.mxu0 %v1720
    %1733 = vmatprep.subr.mxu0 0.0
    %1734 = vmatpush1.msra.mxu0 0.0
    %1735 = vmatprep.subr.mxu0 0.0
    %1736 = vmatpush1.msra.mxu0 0.0
    %1737 = vmatprep.subr.mxu0 0.0
    %1738 = vmatpush1.msra.mxu0 0.0
    %1739 = vmatprep.subr.mxu0 0.0
    %1740 = vmatpush1.msra.mxu0 0.0
    %1741 = vmatprep.subr.mxu0 0.0
    %1742 = vmatpush1.msra.mxu0 0.0
    %1743 = vmatprep.subr.mxu0 0.0
    %1744 = vmatpush1.msra.mxu0 0.0
    %1745 = vmatprep.subr.mxu0 0.0
    %1746 = vmatpush1.msra.mxu0 0.0
    %1747 = vmatprep.subr.mxu0 0.0
    %1748 = vmatpush1.msra.mxu0 0.0
    %1749 = vmatprep.subr.mxu0 0.0
    %1750 = vmatpush1.msra.mxu0 0.0
    %1751 = vmatprep.subr.mxu0 0.0
    %1752 = vmatpush1.msra.mxu0 0.0
    %1753 = vmatprep.subr.mxu0 0.0
    %1754 = vmatpush1.msra.mxu0 0.0
    %1755 = vmatprep.subr.mxu0 0.0
    %1756 = vmatpush1.msra.mxu0 0.0
    %1757 = vmatprep.subr.mxu0 0.0
    %1758 = vmatpush1.msra.mxu0 0.0
    %1759 = vmatprep.subr.mxu0 0.0
    %1760 = vmatpush1.msra.mxu0 0.0
    %1761 = vmatprep.subr.mxu0 0.0
    %1762 = vmatpush1.msra.mxu0 0.0
    %1763 = vmatprep.subr.mxu0 0.0
    %1764 = vmatpush1.msra.mxu0 0.0
    %1765 = vmatprep.subr.mxu0 0.0
    %1766 = vmatpush1.msra.mxu0 0.0
    %1767 = vmatprep.subr.mxu0 0.0
    %1768 = vmatpush1.msra.mxu0 0.0
    %1769 = vmatprep.subr.mxu0 0.0
    %1770 = vmatpush1.msra.mxu0 0.0
    %1771 = vmatprep.subr.mxu0 0.0
    %1772 = vmatpush1.msra.mxu0 0.0
    %1773 = vmatprep.subr.mxu0 0.0
    %1774 = vmatpush1.msra.mxu0 0.0
    %1775 = vmatprep.subr.mxu0 0.0
    %1776 = vmatpush1.msra.mxu0 0.0
    %1777 = vmatprep.subr.mxu0 0.0
    %1778 = vmatpush1.msra.mxu0 0.0
    %1779 = vmatprep.subr.mxu0 0.0
    %1780 = vmatpush1.msra.mxu0 0.0
    %1781 = vmatprep.subr.mxu0 0.0
    %1782 = vmatpush1.msra.mxu0 0.0
    %1783 = vmatprep.subr.mxu0 0.0
    %1784 = vmatpush1.msra.mxu0 0.0
    %1785 = vmatprep.subr.mxu0 0.0
    %1786 = vmatpush1.msra.mxu0 0.0
    %1787 = vmatprep.subr.mxu0 0.0
    %1788 = vmatpush1.msra.mxu0 0.0
    %1789 = vmatprep.subr.mxu0 0.0
    %1790 = vmatpush1.msra.mxu0 0.0
    %1791 = vmatprep.subr.mxu0 0.0
    %1792 = vmatpush1.msra.mxu0 0.0
    %1793 = vmatprep.mubr.f32.mxu0 0.0
    %1794 = vmatmul.mubr.f32.gmra.mrb[0].mxu0 %v1724
    %v1795 = vpop.f32.mrb[0].mxu0
    %v1796 = vadd.f32 0.0, %v1795
    %v1797 = vpop.f32.mrb[0].mxu0
    %1798 = vmatprep.mubr.f32.mxu0 0.0
    %1799 = vmatmul.mubr.f32.gmra.mrb[0].mxu0 %v1727
    %v1800 = vpop.f32.mrb[0].mxu0
    %v1801 = vadd.f32 0.0, %v1800
    %v1802 = vpop.f32.mrb[0].mxu0
    %1803 = vdwg.mxu0
    %1808 = vrot.lane.b32.xlu0 %v893, 8
    %v1809 = vpop.permute.xlu0 %1808
    %1810 = vrot.lane.b32.xlu0 %v898, 8
    %v1811 = vpop.permute.xlu0 %1810
    %1812 = vrot.lane.b32.xlu0 %v980, 8
    %v1813 = vpop.permute.xlu0 %1812
    %1814 = vrot.lane.b32.xlu0 %v985, 8
    %v1815 = vpop.permute.xlu0 %1814
    %1824 = vrot.lane.b32.xlu0 %v1301, 16
    %v1825 = vpop.permute.xlu0 %1824
    %1826 = vrot.lane.b32.xlu0 %v1306, 16
    %v1827 = vpop.permute.xlu0 %1826
    %1828 = vrot.lane.b32.xlu0 %v1388, 16
    %v1829 = vpop.permute.xlu0 %1828
    %1830 = vrot.lane.b32.xlu0 %v1393, 16
    %v1831 = vpop.permute.xlu0 %1830
    %1840 = vrot.lane.b32.xlu0 %v1709, 24
    %v1841 = vpop.permute.xlu0 %1840
    %1842 = vrot.lane.b32.xlu0 %v1714, 24
    %v1843 = vpop.permute.xlu0 %1842
    %1844 = vrot.lane.b32.xlu0 %v1796, 24
    %v1845 = vpop.permute.xlu0 %1844
    %1846 = vrot.lane.b32.xlu0 %v1801, 24
    %v1847 = vpop.permute.xlu0 %1846
    %v1852 = vsel %vm180, %v485, %v1809
    %v1853 = vsel %vm180, %v490, %v1811
    %v1854 = vsel %vm180, %v572, %v1813
    %v1855 = vsel %vm180, %v577, %v1815
    %v1856 = vsel %vm361, %v1852, %v1825
    %v1857 = vsel %vm361, %v1853, %v1827
    %v1858 = vsel %vm361, %v1854, %v1829
    %v1859 = vsel %vm361, %v1855, %v1831
    %vm1860 = vcmask 195584
    %v1861 = vsel %vm1860, %v1856, %v1841
    %v1862 = vsel %vm1860, %v1857, %v1843
    %v1863 = vsel %vm1860, %v1858, %v1845
    %v1864 = vsel %vm1860, %v1859, %v1847
    %v1865 = vld [vmem:[%s3] sm:$0xff]
    %v1866 = vld [vmem:[%s3 + $0x8] sm:$0xff]
    %v1867 = vld [vmem:[%s3 + $0x10] sm:$0xff]
    %v1868 = vld [vmem:[%s3 + $0x18] sm:$0xff]
    %v1869 = vld [vmem:[%s4] sm:$0x1]
    %v1871 = vlaneseq
    %v1872 = vshrl.u32 %v1871, 7
    %v1873 = vsub.s32 0, %v1872
    %v1874 = vrot.slane %v1869, %v1873
    %v1877 = vsel %vm76, %v1861, 0
    %v1880 = vsel %vm76, %v1862, 0
    %v1883 = vsel %vm76, %v1863, 0
    %v1886 = vsel %vm76, %v1864, 0
    %1888 = vmatprep.subr.mxu0 0.0
    %1889 = vmatpush1.msra.mxu0 %v1865
    %1890 = vmatprep.subr.mxu0 0.0
    %1891 = vmatpush1.msra.mxu0 %v1866
    %1892 = vmatprep.subr.mxu0 0.0
    %1893 = vmatpush1.msra.mxu0 %v1867
    %1894 = vmatprep.subr.mxu0 0.0
    %1895 = vmatpush1.msra.mxu0 %v1868
    %1896 = vmatprep.subr.mxu0 0.0
    %1897 = vmatpush1.msra.mxu0 0.0
    %1898 = vmatprep.subr.mxu0 0.0
    %1899 = vmatpush1.msra.mxu0 0.0
    %1900 = vmatprep.subr.mxu0 0.0
    %1901 = vmatpush1.msra.mxu0 0.0
    %1902 = vmatprep.subr.mxu0 0.0
    %1903 = vmatpush1.msra.mxu0 0.0
    %1904 = vmatprep.subr.mxu0 0.0
    %1905 = vmatpush1.msra.mxu0 0.0
    %1906 = vmatprep.subr.mxu0 0.0
    %1907 = vmatpush1.msra.mxu0 0.0
    %1908 = vmatprep.subr.mxu0 0.0
    %1909 = vmatpush1.msra.mxu0 0.0
    %1910 = vmatprep.subr.mxu0 0.0
    %1911 = vmatpush1.msra.mxu0 0.0
    %1912 = vmatprep.subr.mxu0 0.0
    %1913 = vmatpush1.msra.mxu0 0.0
    %1914 = vmatprep.subr.mxu0 0.0
    %1915 = vmatpush1.msra.mxu0 0.0
    %1916 = vmatprep.subr.mxu0 0.0
    %1917 = vmatpush1.msra.mxu0 0.0
    %1918 = vmatprep.subr.mxu0 0.0
    %1919 = vmatpush1.msra.mxu0 0.0
    %1920 = vmatprep.subr.mxu0 0.0
    %1921 = vmatpush1.msra.mxu0 0.0
    %1922 = vmatprep.subr.mxu0 0.0
    %1923 = vmatpush1.msra.mxu0 0.0
    %1924 = vmatprep.subr.mxu0 0.0
    %1925 = vmatpush1.msra.mxu0 0.0
    %1926 = vmatprep.subr.mxu0 0.0
    %1927 = vmatpush1.msra.mxu0 0.0
    %1928 = vmatprep.subr.mxu0 0.0
    %1929 = vmatpush1.msra.mxu0 0.0
    %1930 = vmatprep.subr.mxu0 0.0
    %1931 = vmatpush1.msra.mxu0 0.0
    %1932 = vmatprep.subr.mxu0 0.0
    %1933 = vmatpush1.msra.mxu0 0.0
    %1934 = vmatprep.subr.mxu0 0.0
    %1935 = vmatpush1.msra.mxu0 0.0
    %1936 = vmatprep.subr.mxu0 0.0
    %1937 = vmatpush1.msra.mxu0 0.0
    %1938 = vmatprep.subr.mxu0 0.0
    %1939 = vmatpush1.msra.mxu0 0.0
    %1940 = vmatprep.subr.mxu0 0.0
    %1941 = vmatpush1.msra.mxu0 0.0
    %1942 = vmatprep.subr.mxu0 0.0
    %1943 = vmatpush1.msra.mxu0 0.0
    %1944 = vmatprep.subr.mxu0 0.0
    %1945 = vmatpush1.msra.mxu0 0.0
    %1946 = vmatprep.subr.mxu0 0.0
    %1947 = vmatpush1.msra.mxu0 0.0
    %1948 = vmatprep.subr.mxu0 0.0
    %1949 = vmatpush1.msra.mxu0 0.0
    %1950 = vmatprep.subr.mxu0 0.0
    %1951 = vmatpush1.msra.mxu0 0.0
    %1952 = vmatprep.mubr.f32.mxu0 0.0
    %1953 = vmatmul.mubr.f32.gmra.mrb[0].mxu0 %v1877
    %v1954 = vpop.f32.mrb[0].mxu0
    %v1955 = vadd.f32 %v1874, %v1954
    %v1956 = vpop.f32.mrb[0].mxu0
    %1957 = vmatprep.mubr.f32.mxu0 0.0
    %1958 = vmatmul.mubr.f32.gmra.mrb[0].mxu0 %v1880
    %v1959 = vpop.f32.mrb[0].mxu0
    %v1960 = vadd.f32 %v1874, %v1959
    %v1961 = vpop.f32.mrb[0].mxu0
    %1962 = vmatprep.mubr.f32.mxu0 0.0
    %1963 = vmatmul.mubr.f32.gmra.mrb[0].mxu0 %v1883
    %v1964 = vpop.f32.mrb[0].mxu0
    %v1965 = vadd.f32 %v1874, %v1964
    %v1966 = vpop.f32.mrb[0].mxu0
    %1967 = vmatprep.mubr.f32.mxu0 0.0
    %1968 = vmatmul.mubr.f32.gmra.mrb[0].mxu0 %v1886
    %v1969 = vpop.f32.mrb[0].mxu0
    %v1970 = vadd.f32 %v1874, %v1969
    %v1971 = vpop.f32.mrb[0].mxu0
    %1972 = vdwg.mxu0
    %v1973 = vadd.f32 %v61, %v1955
    %v1974 = vadd.f32 %v62, %v1960
    %v1975 = vadd.f32 %v63, %v1965
    %v1976 = vadd.f32 %v64, %v1970
    %v1977 = vld [vmem:[%s5] sm:$0x1]
    %v1978 = vld [vmem:[%s6] sm:$0x1]
    %v1979 = vsel %vm76, %v1973, 0.0
    %1980 = vadd.xlane.f32.xlu0 %v1979
    %v1981 = vpop.xlane.xlu0 %1980
    %v1982 = vsel %vm76, %v1974, 0.0
    %1983 = vadd.xlane.f32.xlu0 %v1982
    %v1984 = vpop.xlane.xlu0 %1983
    %v1985 = vsel %vm76, %v1975, 0.0
    %1986 = vadd.xlane.f32.xlu0 %v1985
    %v1987 = vpop.xlane.xlu0 %1986
    %v1988 = vsel %vm76, %v1976, 0.0
    %1989 = vadd.xlane.f32.xlu0 %v1988
    %v1990 = vpop.xlane.xlu0 %1989
    %v1991 = vrcp.pop 32.0
    %v1992 = vmul.f32 %v1981, %v1991
    %v1993 = vmul.f32 %v1984, %v1991
    %v1994 = vmul.f32 %v1987, %v1991
    %v1995 = vmul.f32 %v1990, %v1991
    %v1996 = vsub.f32 %v1973, %v1992
    %v1997 = vsub.f32 %v1974, %v1993
    %v1998 = vsub.f32 %v1975, %v1994
    %v1999 = vsub.f32 %v1976, %v1995
    %v2000 = vmul.f32 %v1996, %v1996
    %v2001 = vmul.f32 %v1997, %v1997
    %v2002 = vmul.f32 %v1998, %v1998
    %v2003 = vmul.f32 %v1999, %v1999
    %v2004 = vsel %vm76, %v2000, 0.0
    %2005 = vadd.xlane.f32.xlu0 %v2004
    %v2006 = vpop.xlane.xlu0 %2005
    %v2007 = vsel %vm76, %v2001, 0.0
    %2008 = vadd.xlane.f32.xlu0 %v2007
    %v2009 = vpop.xlane.xlu0 %2008
    %v2010 = vsel %vm76, %v2002, 0.0
    %2011 = vadd.xlane.f32.xlu0 %v2010
    %v2012 = vpop.xlane.xlu0 %2011
    %v2013 = vsel %vm76, %v2003, 0.0
    %2014 = vadd.xlane.f32.xlu0 %v2013
    %v2015 = vpop.xlane.xlu0 %2014
    %v2016 = vmul.f32 %v2006, %v1991
    %v2017 = vmul.f32 %v2009, %v1991
    %v2018 = vmul.f32 %v2012, %v1991
    %v2019 = vmul.f32 %v2015, %v1991
    %v2020 = vadd.f32 %v2016, 1e-05
    %v2021 = vadd.f32 %v2017, 1e-05
    %v2022 = vadd.f32 %v2018, 1e-05
    %v2023 = vadd.f32 %v2019, 1e-05
    %v2024 = vrsqrt.pop %v2020
    %v2025 = vrsqrt.pop %v2021
    %v2026 = vrsqrt.pop %v2022
    %v2027 = vrsqrt.pop %v2023
    %v2028 = vmul.f32 %v1996, %v2024
    %v2029 = vmul.f32 %v1997, %v2025
    %v2030 = vmul.f32 %v1998, %v2026
    %v2031 = vmul.f32 %v1999, %v2027
    %v2033 = vlaneseq
    %v2034 = vshrl.u32 %v2033, 7
    %v2035 = vsub.s32 0, %v2034
    %v2036 = vrot.slane %v1977, %v2035
    %v2038 = vmul.f32 %v2028, %v2036
    %v2039 = vmul.f32 %v2029, %v2036
    %v2040 = vmul.f32 %v2030, %v2036
    %v2041 = vmul.f32 %v2031, %v2036
    %v2043 = vlaneseq
    %v2044 = vshrl.u32 %v2043, 7
    %v2045 = vsub.s32 0, %v2044
    %v2046 = vrot.slane %v1978, %v2045
    %v2048 = vadd.f32 %v2038, %v2046
    %v2049 = vadd.f32 %v2039, %v2046
    %v2050 = vadd.f32 %v2040, %v2046
    %v2051 = vadd.f32 %v2041, %v2046
    %v2052 = vld [vmem:[%s7] sm:$0xff]
    %v2053 = vld [vmem:[%s7 + $0x8] sm:$0xff]
    %v2054 = vld [vmem:[%s7 + $0x10] sm:$0xff]
    %v2055 = vld [vmem:[%s7 + $0x18] sm:$0xff]
    %v2056 = vld [vmem:[%s7 + $0x20] sm:$0xff]
    %v2057 = vld [vmem:[%s7 + $0x28] sm:$0xff]
    %v2058 = vld [vmem:[%s7 + $0x30] sm:$0xff]
    %v2059 = vld [vmem:[%s7 + $0x38] sm:$0xff]
    %v2060 = vld [vmem:[%s8] sm:$0x3]
    %v2062 = vlaneseq
    %v2063 = vshrl.u32 %v2062, 7
    %v2064 = vsub.s32 0, %v2063
    %v2065 = vrot.slane %v2060, %v2064
    %v2066 = vlaneseq
    %v2067 = vshrl.u32 %v2066, 7
    %v2068 = vsub.s32 1, %v2067
    %v2069 = vrot.slane %v2060, %v2068
    %v2073 = vsel %vm76, %v2048, 0
    %v2076 = vsel %vm76, %v2049, 0
    %v2079 = vsel %vm76, %v2050, 0
    %v2082 = vsel %vm76, %v2051, 0
    %2084 = vmatprep.subr.mxu0 %v2053
    %2085 = vmatpush1.msra.mxu0 %v2052
    %2086 = vmatprep.subr.mxu0 %v2055
    %2087 = vmatpush1.msra.mxu0 %v2054
    %2088 = vmatprep.subr.mxu0 %v2057
    %2089 = vmatpush1.msra.mxu0 %v2056
    %2090 = vmatprep.subr.mxu0 %v2059
    %2091 = vmatpush1.msra.mxu0 %v2058
    %2092 = vmatprep.subr.mxu0 0.0
    %2093 = vmatpush1.msra.mxu0 0.0
    %2094 = vmatprep.subr.mxu0 0.0
    %2095 = vmatpush1.msra.mxu0 0.0
    %2096 = vmatprep.subr.mxu0 0.0
    %2097 = vmatpush1.msra.mxu0 0.0
    %2098 = vmatprep.subr.mxu0 0.0
    %2099 = vmatpush1.msra.mxu0 0.0
    %2100 = vmatprep.subr.mxu0 0.0
    %2101 = vmatpush1.msra.mxu0 0.0
    %2102 = vmatprep.subr.mxu0 0.0
    %2103 = vmatpush1.msra.mxu0 0.0
    %2104 = vmatprep.subr.mxu0 0.0
    %2105 = vmatpush1.msra.mxu0 0.0
    %2106 = vmatprep.subr.mxu0 0.0
    %2107 = vmatpush1.msra.mxu0 0.0
    %2108 = vmatprep.subr.mxu0 0.0
    %2109 = vmatpush1.msra.mxu0 0.0
    %2110 = vmatprep.subr.mxu0 0.0
    %2111 = vmatpush1.msra.mxu0 0.0
    %2112 = vmatprep.subr.mxu0 0.0
    %2113 = vmatpush1.msra.mxu0 0.0
    %2114 = vmatprep.subr.mxu0 0.0
    %2115 = vmatpush1.msra.mxu0 0.0
    %2116 = vmatprep.subr.mxu0 0.0
    %2117 = vmatpush1.msra.mxu0 0.0
    %2118 = vmatprep.subr.mxu0 0.0
    %2119 = vmatpush1.msra.mxu0 0.0
    %2120 = vmatprep.subr.mxu0 0.0
    %2121 = vmatpush1.msra.mxu0 0.0
    %2122 = vmatprep.subr.mxu0 0.0
    %2123 = vmatpush1.msra.mxu0 0.0
    %2124 = vmatprep.subr.mxu0 0.0
    %2125 = vmatpush1.msra.mxu0 0.0
    %2126 = vmatprep.subr.mxu0 0.0
    %2127 = vmatpush1.msra.mxu0 0.0
    %2128 = vmatprep.subr.mxu0 0.0
    %2129 = vmatpush1.msra.mxu0 0.0
    %2130 = vmatprep.subr.mxu0 0.0
    %2131 = vmatpush1.msra.mxu0 0.0
    %2132 = vmatprep.subr.mxu0 0.0
    %2133 = vmatpush1.msra.mxu0 0.0
    %2134 = vmatprep.subr.mxu0 0.0
    %2135 = vmatpush1.msra.mxu0 0.0
    %2136 = vmatprep.subr.mxu0 0.0
    %2137 = vmatpush1.msra.mxu0 0.0
    %2138 = vmatprep.subr.mxu0 0.0
    %2139 = vmatpush1.msra.mxu0 0.0
    %2140 = vmatprep.subr.mxu0 0.0
    %2141 = vmatpush1.msra.mxu0 0.0
    %2142 = vmatprep.subr.mxu0 0.0
    %2143 = vmatpush1.msra.mxu0 0.0
    %2144 = vmatprep.subr.mxu0 0.0
    %2145 = vmatpush1.msra.mxu0 0.0
    %2146 = vmatprep.subr.mxu0 0.0
    %2147 = vmatpush1.msra.mxu0 0.0
    %2148 = vmatprep.mubr.f32.mxu0 0.0
    %2149 = vmatmul.mubr.f32.gmra.mrb[0].mxu0 %v2073
    %v2150 = vpop.f32.mrb[0].mxu0
    %v2151 = vadd.f32 %v2065, %v2150
    %v2152 = vpop.f32.mrb[0].mxu0
    %v2153 = vadd.f32 %v2069, %v2152
    %2154 = vmatprep.mubr.f32.mxu0 0.0
    %2155 = vmatmul.mubr.f32.gmra.mrb[0].mxu0 %v2076
    %v2156 = vpop.f32.mrb[0].mxu0
    %v2157 = vadd.f32 %v2065, %v2156
    %v2158 = vpop.f32.mrb[0].mxu0
    %v2159 = vadd.f32 %v2069, %v2158
    %2160 = vmatprep.mubr.f32.mxu0 0.0
    %2161 = vmatmul.mubr.f32.gmra.mrb[0].mxu0 %v2079
    %v2162 = vpop.f32.mrb[0].mxu0
    %v2163 = vadd.f32 %v2065, %v2162
    %v2164 = vpop.f32.mrb[0].mxu0
    %v2165 = vadd.f32 %v2069, %v2164
    %2166 = vmatprep.mubr.f32.mxu0 0.0
    %2167 = vmatmul.mubr.f32.gmra.mrb[0].mxu0 %v2082
    %v2168 = vpop.f32.mrb[0].mxu0
    %v2169 = vadd.f32 %v2065, %v2168
    %v2170 = vpop.f32.mrb[0].mxu0
    %v2171 = vadd.f32 %v2069, %v2170
    %2172 = vdwg.mxu0
    %v2173 = vmul.f32 %v2151, 0.5
    %v2174 = vmul.f32 %v2153, 0.5
    %v2175 = vmul.f32 %v2157, 0.5
    %v2176 = vmul.f32 %v2159, 0.5
    %v2177 = vmul.f32 %v2163, 0.5
    %v2178 = vmul.f32 %v2165, 0.5
    %v2179 = vmul.f32 %v2169, 0.5
    %v2180 = vmul.f32 %v2171, 0.5
    %v2181 = vmul.f32 %v2151, 0.044715
    %v2182 = vmul.f32 %v2153, 0.044715
    %v2183 = vmul.f32 %v2157, 0.044715
    %v2184 = vmul.f32 %v2159, 0.044715
    %v2185 = vmul.f32 %v2163, 0.044715
    %v2186 = vmul.f32 %v2165, 0.044715
    %v2187 = vmul.f32 %v2169, 0.044715
    %v2188 = vmul.f32 %v2171, 0.044715
    %v2189 = vmul.f32 %v2181, %v2151
    %v2190 = vmul.f32 %v2182, %v2153
    %v2191 = vmul.f32 %v2183, %v2157
    %v2192 = vmul.f32 %v2184, %v2159
    %v2193 = vmul.f32 %v2185, %v2163
    %v2194 = vmul.f32 %v2186, %v2165
    %v2195 = vmul.f32 %v2187, %v2169
    %v2196 = vmul.f32 %v2188, %v2171
    %v2197 = vmul.f32 %v2189, %v2151
    %v2198 = vmul.f32 %v2190, %v2153
    %v2199 = vmul.f32 %v2191, %v2157
    %v2200 = vmul.f32 %v2192, %v2159
    %v2201 = vmul.f32 %v2193, %v2163
    %v2202 = vmul.f32 %v2194, %v2165
    %v2203 = vmul.f32 %v2195, %v2169
    %v2204 = vmul.f32 %v2196, %v2171
    %v2205 = vadd.f32 %v2151, %v2197
    %v2206 = vadd.f32 %v2153, %v2198
    %v2207 = vadd.f32 %v2157, %v2199
    %v2208 = vadd.f32 %v2159, %v2200
    %v2209 = vadd.f32 %v2163, %v2201
    %v2210 = vadd.f32 %v2165, %v2202
    %v2211 = vadd.f32 %v2169, %v2203
    %v2212 = vadd.f32 %v2171, %v2204
    %v2213 = vmul.f32 %v2205, 0.7978846
    %v2214 = vmul.f32 %v2206, 0.7978846
    %v2215 = vmul.f32 %v2207, 0.7978846
    %v2216 = vmul.f32 %v2208, 0.7978846
    %v2217 = vmul.f32 %v2209, 0.7978846
    %v2218 = vmul.f32 %v2210, 0.7978846
    %v2219 = vmul.f32 %v2211, 0.7978846
    %v2220 = vmul.f32 %v2212, 0.7978846
    %v2221 = vtanh.pop %v2213
    %v2222 = vtanh.pop %v2214
    %v2223 = vtanh.pop %v2215
    %v2224 = vtanh.pop %v2216
    %v2225 = vtanh.pop %v2217
    %v2226 = vtanh.pop %v2218
    %v2227 = vtanh.pop %v2219
    %v2228 = vtanh.pop %v2220
    %v2229 = vadd.f32 %v2221, 1.0
    %v2230 = vadd.f32 %v2222, 1.0
    %v2231 = vadd.f32 %v2223, 1.0
    %v2232 = vadd.f32 %v2224, 1.0
    %v2233 = vadd.f32 %v2225, 1.0
    %v2234 = vadd.f32 %v2226, 1.0
    %v2235 = vadd.f32 %v2227, 1.0
    %v2236 = vadd.f32 %v2228, 1.0
    %v2237 = vmul.f32 %v2173, %v2229
    %v2238 = vmul.f32 %v2174, %v2230
    %v2239 = vmul.f32 %v2175, %v2231
    %v2240 = vmul.f32 %v2176, %v2232
    %v2241 = vmul.f32 %v2177, %v2233
    %v2242 = vmul.f32 %v2178, %v2234
    %v2243 = vmul.f32 %v2179, %v2235
    %v2244 = vmul.f32 %v2180, %v2236
    %v2245 = vld [vmem:[%s9] sm:$0xff]
    %v2246 = vld [vmem:[%s9 + $0x8] sm:$0xff]
    %v2247 = vld [vmem:[%s9 + $0x10] sm:$0xff]
    %v2248 = vld [vmem:[%s9 + $0x18] sm:$0xff]
    %v2249 = vld [vmem:[%s9 + $0x20] sm:$0xff]
    %v2250 = vld [vmem:[%s9 + $0x28] sm:$0xff]
    %v2251 = vld [vmem:[%s9 + $0x30] sm:$0xff]
    %v2252 = vld [vmem:[%s9 + $0x38] sm:$0xff]
    %v2253 = vld [vmem:[%s9 + $0x40] sm:$0xff]
    %v2254 = vld [vmem:[%s9 + $0x48] sm:$0xff]
    %v2255 = vld [vmem:[%s9 + $0x50] sm:$0xff]
    %v2256 = vld [vmem:[%s9 + $0x58] sm:$0xff]
    %v2257 = vld [vmem:[%s9 + $0x60] sm:$0xff]
    %v2258 = vld [vmem:[%s9 + $0x68] sm:$0xff]
    %v2259 = vld [vmem:[%s9 + $0x70] sm:$0xff]
    %v2260 = vld [vmem:[%s9 + $0x78] sm:$0xff]
    %v2261 = vld [vmem:[%s9 + $0x80] sm:$0xff]
    %v2262 = vld [vmem:[%s9 + $0x88] sm:$0xff]
    %v2263 = vld [vmem:[%s9 + $0x90] sm:$0xff]
    %v2264 = vld [vmem:[%s9 + $0x98] sm:$0xff]
    %v2265 = vld [vmem:[%s9 + $0xa0] sm:$0xff]
    %v2266 = vld [vmem:[%s9 + $0xa8] sm:$0xff]
    %v2267 = vld [vmem:[%s9 + $0xb0] sm:$0xff]
    %v2268 = vld [vmem:[%s9 + $0xb8] sm:$0xff]
    %v2269 = vld [vmem:[%s9 + $0xc0] sm:$0xff]
    %v2270 = vld [vmem:[%s9 + $0xc8] sm:$0xff]
    %v2271 = vld [vmem:[%s9 + $0xd0] sm:$0xff]
    %v2272 = vld [vmem:[%s9 + $0xd8] sm:$0xff]
    %v2273 = vld [vmem:[%s9 + $0xe0] sm:$0xff]
    %v2274 = vld [vmem:[%s9 + $0xe8] sm:$0xff]
    %v2275 = vld [vmem:[%s9 + $0xf0] sm:$0xff]
    %v2276 = vld [vmem:[%s9 + $0xf8] sm:$0xff]
    %v2277 = vld [vmem:[%s10] sm:$0x1]
    %v2279 = vlaneseq
    %v2280 = vshrl.u32 %v2279, 7
    %v2281 = vsub.s32 0, %v2280
    %v2282 = vrot.slane %v2277, %v2281
    %2284 = vmatprep.subr.mxu0 0.0
    %2285 = vmatpush1.msra.mxu0 %v2245
    %2286 = vmatprep.subr.mxu0 0.0
    %2287 = vmatpush1.msra.mxu0 %v2246
    %2288 = vmatprep.subr.mxu0 0.0
    %2289 = vmatpush1.msra.mxu0 %v2247
    %2290 = vmatprep.subr.mxu0 0.0
    %2291 = vmatpush1.msra.mxu0 %v2248
    %2292 = vmatprep.subr.mxu0 0.0
    %2293 = vmatpush1.msra.mxu0 %v2249
    %2294 = vmatprep.subr.mxu0 0.0
    %2295 = vmatpush1.msra.mxu0 %v2250
    %2296 = vmatprep.subr.mxu0 0.0
    %2297 = vmatpush1.msra.mxu0 %v2251
    %2298 = vmatprep.subr.mxu0 0.0
    %2299 = vmatpush1.msra.mxu0 %v2252
    %2300 = vmatprep.subr.mxu0 0.0
    %2301 = vmatpush1.msra.mxu0 %v2253
    %2302 = vmatprep.subr.mxu0 0.0
    %2303 = vmatpush1.msra.mxu0 %v2254
    %2304 = vmatprep.subr.mxu0 0.0
    %2305 = vmatpush1.msra.mxu0 %v2255
    %2306 = vmatprep.subr.mxu0 0.0
    %2307 = vmatpush1.msra.mxu0 %v2256
    %2308 = vmatprep.subr.mxu0 0.0
    %2309 = vmatpush1.msra.mxu0 %v2257
    %2310 = vmatprep.subr.mxu0 0.0
    %2311 = vmatpush1.msra.mxu0 %v2258
    %2312 = vmatprep.subr.mxu0 0.0
    %2313 = vmatpush1.msra.mxu0 %v2259
    %2314 = vmatprep.subr.mxu0 0.0
    %2315 = vmatpush1.msra.mxu0 %v2260
    %2316 = vmatprep.subr.mxu0 0.0
    %2317 = vmatpush1.msra.mxu0 %v2261
    %2318 = vmatprep.subr.mxu0 0.0
    %2319 = vmatpush1.msra.mxu0 %v2262
    %2320 = vmatprep.subr.mxu0 0.0
    %2321 = vmatpush1.msra.mxu0 %v2263
    %2322 = vmatprep.subr.mxu0 0.0
    %2323 = vmatpush1.msra.mxu0 %v2264
    %2324 = vmatprep.subr.mxu0 0.0
    %2325 = vmatpush1.msra.mxu0 %v2265
    %2326 = vmatprep.subr.mxu0 0.0
    %2327 = vmatpush1.msra.mxu0 %v2266
    %2328 = vmatprep.subr.mxu0 0.0
    %2329 = vmatpush1.msra.mxu0 %v2267
    %2330 = vmatprep.subr.mxu0 0.0
    %2331 = vmatpush1.msra.mxu0 %v2268
    %2332 = vmatprep.subr.mxu0 0.0
    %2333 = vmatpush1.msra.mxu0 %v2269
    %2334 = vmatprep.subr.mxu0 0.0
    %2335 = vmatpush1.msra.mxu0 %v2270
    %2336 = vmatprep.subr.mxu0 0.0
    %2337 = vmatpush1.msra.mxu0 %v2271
    %2338 = vmatprep.subr.mxu0 0.0
    %2339 = vmatpush1.msra.mxu0 %v2272
    %2340 = vmatprep.subr.mxu0 0.0
    %2341 = vmatpush1.msra.mxu0 %v2273
    %2342 = vmatprep.subr.mxu0 0.0
    %2343 = vmatpush1.msra.mxu0 %v2274
    %2344 = vmatprep.subr.mxu0 0.0
    %2345 = vmatpush1.msra.mxu0 %v2275
    %2346 = vmatprep.subr.mxu0 0.0
    %2347 = vmatpush1.msra.mxu0 %v2276
    %2348 = vmatprep.mubr.f32.mxu0 %v2238
    %2349 = vmatmul.mubr.f32.gmra.mrb[0].mxu0 %v2237
    %v2350 = vpop.f32.mrb[0].mxu0
    %v2351 = vadd.f32 %v2282, %v2350
    %v2352 = vpop.f32.mrb[0].mxu0
    %2353 = vmatprep.mubr.f32.mxu0 %v2240
    %2354 = vmatmul.mubr.f32.gmra.mrb[0].mxu0 %v2239
    %v2355 = vpop.f32.mrb[0].mxu0
    %v2356 = vadd.f32 %v2282, %v2355
    %v2357 = vpop.f32.mrb[0].mxu0
    %2358 = vmatprep.mubr.f32.mxu0 %v2242
    %2359 = vmatmul.mubr.f32.gmra.mrb[0].mxu0 %v2241
    %v2360 = vpop.f32.mrb[0].mxu0
    %v2361 = vadd.f32 %v2282, %v2360
    %v2362 = vpop.f32.mrb[0].mxu0
    %2363 = vmatprep.mubr.f32.mxu0 %v2244
    %2364 = vmatmul.mubr.f32.gmra.mrb[0].mxu0 %v2243
    %v2365 = vpop.f32.mrb[0].mxu0
    %v2366 = vadd.f32 %v2282, %v2365
    %v2367 = vpop.f32.mrb[0].mxu0
    %2368 = vdwg.mxu0
    %v2369 = vadd.f32 %v2048, %v2351
    %v2370 = vadd.f32 %v2049, %v2356
    %v2371 = vadd.f32 %v2050, %v2361
    %v2372 = vadd.f32 %v2051, %v2366
    %v2373 = vld [vmem:[%s11] sm:$0x1]
    %v2374 = vld [vmem:[%s12] sm:$0x1]
    %v2375 = vsel %vm76, %v2369, 0.0
    %2376 = vadd.xlane.f32.xlu0 %v2375
    %v2377 = vpop.xlane.xlu0 %2376
    %v2378 = vsel %vm76, %v2370, 0.0
    %2379 = vadd.xlane.f32.xlu0 %v2378
    %v2380 = vpop.xlane.xlu0 %2379
    %v2381 = vsel %vm76, %v2371, 0.0
    %2382 = vadd.xlane.f32.xlu0 %v2381
    %v2383 = vpop.xlane.xlu0 %2382
    %v2384 = vsel %vm76, %v2372, 0.0
    %2385 = vadd.xlane.f32.xlu0 %v2384
    %v2386 = vpop.xlane.xlu0 %2385
    %v2387 = vmul.f32 %v2377, %v1991
    %v2388 = vmul.f32 %v2380, %v1991
    %v2389 = vmul.f32 %v2383, %v1991
    %v2390 = vmul.f32 %v2386, %v1991
    %v2391 = vsub.f32 %v2369, %v2387
    %v2392 = vsub.f32 %v2370, %v2388
    %v2393 = vsub.f32 %v2371, %v2389
    %v2394 = vsub.f32 %v2372, %v2390
    %v2395 = vmul.f32 %v2391, %v2391
    %v2396 = vmul.f32 %v2392, %v2392
    %v2397 = vmul.f32 %v2393, %v2393
    %v2398 = vmul.f32 %v2394, %v2394
    %v2399 = vsel %vm76, %v2395, 0.0
    %2400 = vadd.xlane.f32.xlu0 %v2399
    %v2401 = vpop.xlane.xlu0 %2400
    %v2402 = vsel %vm76, %v2396, 0.0
    %2403 = vadd.xlane.f32.xlu0 %v2402
    %v2404 = vpop.xlane.xlu0 %2403
    %v2405 = vsel %vm76, %v2397, 0.0
    %2406 = vadd.xlane.f32.xlu0 %v2405
    %v2407 = vpop.xlane.xlu0 %2406
    %v2408 = vsel %vm76, %v2398, 0.0
    %2409 = vadd.xlane.f32.xlu0 %v2408
    %v2410 = vpop.xlane.xlu0 %2409
    %v2411 = vmul.f32 %v2401, %v1991
    %v2412 = vmul.f32 %v2404, %v1991
    %v2413 = vmul.f32 %v2407, %v1991
    %v2414 = vmul.f32 %v2410, %v1991
    %v2415 = vadd.f32 %v2411, 1e-05
    %v2416 = vadd.f32 %v2412, 1e-05
    %v2417 = vadd.f32 %v2413, 1e-05
    %v2418 = vadd.f32 %v2414, 1e-05
    %v2419 = vrsqrt.pop %v2415
    %v2420 = vrsqrt.pop %v2416
    %v2421 = vrsqrt.pop %v2417
    %v2422 = vrsqrt.pop %v2418
    %v2423 = vmul.f32 %v2391, %v2419
    %v2424 = vmul.f32 %v2392, %v2420
    %v2425 = vmul.f32 %v2393, %v2421
    %v2426 = vmul.f32 %v2394, %v2422
    %v2428 = vlaneseq
    %v2429 = vshrl.u32 %v2428, 7
    %v2430 = vsub.s32 0, %v2429
    %v2431 = vrot.slane %v2373, %v2430
    %v2433 = vmul.f32 %v2423, %v2431
    %v2434 = vmul.f32 %v2424, %v2431
    %v2435 = vmul.f32 %v2425, %v2431
    %v2436 = vmul.f32 %v2426, %v2431
    %v2438 = vlaneseq
    %v2439 = vshrl.u32 %v2438, 7
    %v2440 = vsub.s32 0, %v2439
    %v2441 = vrot.slane %v2374, %v2440
    %v2443 = vadd.f32 %v2433, %v2441
    %v2444 = vadd.f32 %v2434, %v2441
    %v2445 = vadd.f32 %v2435, %v2441
    %v2446 = vadd.f32 %v2436, %v2441
    %s2447 = scalar_lea.vmem %s1, 32
    %v2448 = vld [vmem:[%s2447] sm:$0xff]
    %v2449 = vld [vmem:[%s2447 + $0x8] sm:$0xff]
    %v2450 = vld [vmem:[%s2447 + $0x10] sm:$0xff]
    %v2451 = vld [vmem:[%s2447 + $0x18] sm:$0xff]
    %s2452 = scalar_lea.vmem %s2, 1
    %v2453 = vld [vmem:[%s2452] sm:$0x1]
    %v2455 = vlaneseq
    %v2456 = vshrl.u32 %v2455, 7
    %v2457 = vsub.s32 0, %v2456
    %v2458 = vrot.slane %v2453, %v2457
    %v2461 = vsel %vm76, %v2443, 0
    %v2464 = vsel %vm76, %v2444, 0
    %v2467 = vsel %vm76, %v2445, 0
    %v2470 = vsel %vm76, %v2446, 0
    %2472 = vmatprep.subr.mxu0 0.0
    %2473 = vmatpush1.msra.mxu0 %v2448
    %2474 = vmatprep.subr.mxu0 0.0
    %2475 = vmatpush1.msra.mxu0 %v2449
    %2476 = vmatprep.subr.mxu0 0.0
    %2477 = vmatpush1.msra.mxu0 %v2450
    %2478 = vmatprep.subr.mxu0 0.0
    %2479 = vmatpush1.msra.mxu0 %v2451
    %2480 = vmatprep.subr.mxu0 0.0
    %2481 = vmatpush1.msra.mxu0 0.0
    %2482 = vmatprep.subr.mxu0 0.0
    %2483 = vmatpush1.msra.mxu0 0.0
    %2484 = vmatprep.subr.mxu0 0.0
    %2485 = vmatpush1.msra.mxu0 0.0
    %2486 = vmatprep.subr.mxu0 0.0
    %2487 = vmatpush1.msra.mxu0 0.0
    %2488 = vmatprep.subr.mxu0 0.0
    %2489 = vmatpush1.msra.mxu0 0.0
    %2490 = vmatprep.subr.mxu0 0.0
    %2491 = vmatpush1.msra.mxu0 0.0
    %2492 = vmatprep.subr.mxu0 0.0
    %2493 = vmatpush1.msra.mxu0 0.0
    %2494 = vmatprep.subr.mxu0 0.0
    %2495 = vmatpush1.msra.mxu0 0.0
    %2496 = vmatprep.subr.mxu0 0.0
    %2497 = vmatpush1.msra.mxu0 0.0
    %2498 = vmatprep.subr.mxu0 0.0
    %2499 = vmatpush1.msra.mxu0 0.0
    %2500 = vmatprep.subr.mxu0 0.0
    %2501 = vmatpush1.msra.mxu0 0.0
    %2502 = vmatprep.subr.mxu0 0.0
    %2503 = vmatpush1.msra.mxu0 0.0
    %2504 = vmatprep.subr.mxu0 0.0
    %2505 = vmatpush1.msra.mxu0 0.0
    %2506 = vmatprep.subr.mxu0 0.0
    %2507 = vmatpush1.msra.mxu0 0.0
    %2508 = vmatprep.subr.mxu0 0.0
    %2509 = vmatpush1.msra.mxu0 0.0
    %2510 = vmatprep.subr.mxu0 0.0
    %2511 = vmatpush1.msra.mxu0 0.0
    %2512 = vmatprep.subr.mxu0 0.0
    %2513 = vmatpush1.msra.mxu0 0.0
    %2514 = vmatprep.subr.mxu0 0.0
    %2515 = vmatpush1.msra.mxu0 0.0
    %2516 = vmatprep.subr.mxu0 0.0
    %2517 = vmatpush1.msra.mxu0 0.0
    %2518 = vmatprep.subr.mxu0 0.0
    %2519 = vmatpush1.msra.mxu0 0.0
    %2520 = vmatprep.subr.mxu0 0.0
    %2521 = vmatpush1.msra.mxu0 0.0
    %2522 = vmatprep.subr.mxu0 0.0
    %2523 = vmatpush1.msra.mxu0 0.0
    %2524 = vmatprep.subr.mxu0 0.0
    %2525 = vmatpush1.msra.mxu0 0.0
    %2526 = vmatprep.subr.mxu0 0.0
    %2527 = vmatpush1.msra.mxu0 0.0
    %2528 = vmatprep.subr.mxu0 0.0
    %2529 = vmatpush1.msra.mxu0 0.0
    %2530 = vmatprep.subr.mxu0 0.0
    %2531 = vmatpush1.msra.mxu0 0.0
    %2532 = vmatprep.subr.mxu0 0.0
    %2533 = vmatpush1.msra.mxu0 0.0
    %2534 = vmatprep.subr.mxu0 0.0
    %2535 = vmatpush1.msra.mxu0 0.0
    %2536 = vmatprep.mubr.f32.mxu0 0.0
    %2537 = vmatmul.mubr.f32.gmra.mrb[0].mxu0 %v2461
    %v2538 = vpop.f32.mrb[0].mxu0
    %v2539 = vadd.f32 %v2458, %v2538
    %v2540 = vpop.f32.mrb[0].mxu0
    %2541 = vmatprep.mubr.f32.mxu0 0.0
    %2542 = vmatmul.mubr.f32.gmra.mrb[0].mxu0 %v2464
    %v2543 = vpop.f32.mrb[0].mxu0
    %v2544 = vadd.f32 %v2458, %v2543
    %v2545 = vpop.f32.mrb[0].mxu0
    %2546 = vmatprep.mubr.f32.mxu0 0.0
    %2547 = vmatmul.mubr.f32.gmra.mrb[0].mxu0 %v2467
    %v2548 = vpop.f32.mrb[0].mxu0
    %v2549 = vadd.f32 %v2458, %v2548
    %v2550 = vpop.f32.mrb[0].mxu0
    %2551 = vmatprep.mubr.f32.mxu0 0.0
    %2552 = vmatmul.mubr.f32.gmra.mrb[0].mxu0 %v2470
    %v2553 = vpop.f32.mrb[0].mxu0
    %v2554 = vadd.f32 %v2458, %v2553
    %v2555 = vpop.f32.mrb[0].mxu0
    %2556 = vdwg.mxu0
    %2559 = vrot.lane.b32.xlu0 %v2539, 96
    %v2560 = vpop.permute.xlu0 %2559
    %2561 = vrot.lane.b32.xlu0 %v2544, 96
    %v2562 = vpop.permute.xlu0 %2561
    %v2563 = vsel %vm180, %v2539, 0
    %v2565 = vsel %vm180, %v2544, 0
    %v2567 = vsel %vm180, %v2560, 0
    %v2569 = vsel %vm180, %v2562, 0
    %2571 = vmatprep.subr.mxu0 0.0
    %2572 = vmatpush1.xpose.msra.mxu0 %v2567
    %2573 = vmatprep.subr.mxu0 0.0
    %2574 = vmatpush1.xpose.msra.mxu0 %v2569
    %2575 = vmatprep.subr.mxu0 0.0
    %2576 = vmatpush1.xpose.msra.mxu0 0.0
    %2577 = vmatprep.subr.mxu0 0.0
    %2578 = vmatpush1.xpose.msra.mxu0 0.0
    %2579 = vmatprep.subr.mxu0 0.0
    %2580 = vmatpush1.xpose.msra.mxu0 0.0
    %2581 = vmatprep.subr.mxu0 0.0
    %2582 = vmatpush1.xpose.msra.mxu0 0.0
    %2583 = vmatprep.subr.mxu0 0.0
    %2584 = vmatpush1.xpose.msra.mxu0 0.0
    %2585 = vmatprep.subr.mxu0 0.0
    %2586 = vmatpush1.xpose.msra.mxu0 0.0
    %2587 = vmatprep.subr.mxu0 0.0
    %2588 = vmatpush1.xpose.msra.mxu0 0.0
    %2589 = vmatprep.subr.mxu0 0.0
    %2590 = vmatpush1.xpose.msra.mxu0 0.0
    %2591 = vmatprep.subr.mxu0 0.0
    %2592 = vmatpush1.xpose.msra.mxu0 0.0
    %2593 = vmatprep.subr.mxu0 0.0
    %2594 = vmatpush1.xpose.msra.mxu0 0.0
    %2595 = vmatprep.subr.mxu0 0.0
    %2596 = vmatpush1.xpose.msra.mxu0 0.0
    %2597 = vmatprep.subr.mxu0 0.0
    %2598 = vmatpush1.xpose.msra.mxu0 0.0
    %2599 = vmatprep.subr.mxu0 0.0
    %2600 = vmatpush1.xpose.msra.mxu0 0.0
    %2601 = vmatprep.subr.mxu0 0.0
    %2602 = vmatpush1.xpose.msra.mxu0 0.0
    %2603 = vmatprep.subr.mxu0 0.0
    %2604 = vmatpush1.xpose.msra.mxu0 0.0
    %2605 = vmatprep.subr.mxu0 0.0
    %2606 = vmatpush1.xpose.msra.mxu0 0.0
    %2607 = vmatprep.subr.mxu0 0.0
    %2608 = vmatpush1.xpose.msra.mxu0 0.0
    %2609 = vmatprep.subr.mxu0 0.0
    %2610 = vmatpush1.xpose.msra.mxu0 0.0
    %2611 = vmatprep.subr.mxu0 0.0
    %2612 = vmatpush1.xpose.msra.mxu0 0.0
    %2613 = vmatprep.subr.mxu0 0.0
    %2614 = vmatpush1.xpose.msra.mxu0 0.0
    %2615 = vmatprep.subr.mxu0 0.0
    %2616 = vmatpush1.xpose.msra.mxu0 0.0
    %2617 = vmatprep.subr.mxu0 0.0
    %2618 = vmatpush1.xpose.msra.mxu0 0.0
    %2619 = vmatprep.subr.mxu0 0.0
    %2620 = vmatpush1.xpose.msra.mxu0 0.0
    %2621 = vmatprep.subr.mxu0 0.0
    %2622 = vmatpush1.xpose.msra.mxu0 0.0
    %2623 = vmatprep.subr.mxu0 0.0
    %2624 = vmatpush1.xpose.msra.mxu0 0.0
    %2625 = vmatprep.subr.mxu0 0.0
    %2626 = vmatpush1.xpose.msra.mxu0 0.0
    %2627 = vmatprep.subr.mxu0 0.0
    %2628 = vmatpush1.xpose.msra.mxu0 0.0
    %2629 = vmatprep.subr.mxu0 0.0
    %2630 = vmatpush1.xpose.msra.mxu0 0.0
    %2631 = vmatprep.subr.mxu0 0.0
    %2632 = vmatpush1.xpose.msra.mxu0 0.0
    %2633 = vmatprep.subr.mxu0 0.0
    %2634 = vmatpush1.xpose.msra.mxu0 0.0
    %2635 = vmatprep.mubr.f32.mxu0 0.0
    %2636 = vmatmul.mubr.f32.gmra.mrb[0].mxu0 %v2563
    %v2637 = vpop.f32.mrb[0].mxu0
    %v2638 = vadd.f32 0.0, %v2637
    %v2639 = vpop.f32.mrb[0].mxu0
    %2640 = vmatprep.mubr.f32.mxu0 0.0
    %2641 = vmatmul.mubr.f32.gmra.mrb[0].mxu0 %v2565
    %v2642 = vpop.f32.mrb[0].mxu0
    %v2643 = vadd.f32 0.0, %v2642
    %v2644 = vpop.f32.mrb[0].mxu0
    %2645 = vdwg.mxu0
    %2648 = vrot.lane.b32.xlu0 %v2549, 96
    %v2649 = vpop.permute.xlu0 %2648
    %2650 = vrot.lane.b32.xlu0 %v2554, 96
    %v2651 = vpop.permute.xlu0 %2650
    %v2652 = vsel %vm180, %v2549, 0
    %v2654 = vsel %vm180, %v2554, 0
    %v2656 = vsel %vm180, %v2649, 0
    %v2658 = vsel %vm180, %v2651, 0
    %2660 = vmatprep.subr.mxu0 0.0
    %2661 = vmatpush1.xpose.msra.mxu0 %v2656
    %2662 = vmatprep.subr.mxu0 0.0
    %2663 = vmatpush1.xpose.msra.mxu0 %v2658
    %2664 = vmatprep.subr.mxu0 0.0
    %2665 = vmatpush1.xpose.msra.mxu0 0.0
    %2666 = vmatprep.subr.mxu0 0.0
    %2667 = vmatpush1.xpose.msra.mxu0 0.0
    %2668 = vmatprep.subr.mxu0 0.0
    %2669 = vmatpush1.xpose.msra.mxu0 0.0
    %2670 = vmatprep.subr.mxu0 0.0
    %2671 = vmatpush1.xpose.msra.mxu0 0.0
    %2672 = vmatprep.subr.mxu0 0.0
    %2673 = vmatpush1.xpose.msra.mxu0 0.0
    %2674 = vmatprep.subr.mxu0 0.0
    %2675 = vmatpush1.xpose.msra.mxu0 0.0
    %2676 = vmatprep.subr.mxu0 0.0
    %2677 = vmatpush1.xpose.msra.mxu0 0.0
    %2678 = vmatprep.subr.mxu0 0.0
    %2679 = vmatpush1.xpose.msra.mxu0 0.0
    %2680 = vmatprep.subr.mxu0 0.0
    %2681 = vmatpush1.xpose.msra.mxu0 0.0
    %2682 = vmatprep.subr.mxu0 0.0
    %2683 = vmatpush1.xpose.msra.mxu0 0.0
    %2684 = vmatprep.subr.mxu0 0.0
    %2685 = vmatpush1.xpose.msra.mxu0 0.0
    %2686 = vmatprep.subr.mxu0 0.0
    %2687 = vmatpush1.xpose.msra.mxu0 0.0
    %2688 = vmatprep.subr.mxu0 0.0
    %2689 = vmatpush1.xpose.msra.mxu0 0.0
    %2690 = vmatprep.subr.mxu0 0.0
    %2691 = vmatpush1.xpose.msra.mxu0 0.0
    %2692 = vmatprep.subr.mxu0 0.0
    %2693 = vmatpush1.xpose.msra.mxu0 0.0
    %2694 = vmatprep.subr.mxu0 0.0
    %2695 = vmatpush1.xpose.msra.mxu0 0.0
    %2696 = vmatprep.subr.mxu0 0.0
    %2697 = vmatpush1.xpose.msra.mxu0 0.0
    %2698 = vmatprep.subr.mxu0 0.0
    %2699 = vmatpush1.xpose.msra.mxu0 0.0
    %2700 = vmatprep.subr.mxu0 0.0
    %2701 = vmatpush1.xpose.msra.mxu0 0.0
    %2702 = vmatprep.subr.mxu0 0.0
    %2703 = vmatpush1.xpose.msra.mxu0 0.0
    %2704 = vmatprep.subr.mxu0 0.0
    %2705 = vmatpush1.xpose.msra.mxu0 0.0
    %2706 = vmatprep.subr.mxu0 0.0
    %2707 = vmatpush1.xpose.msra.mxu0 0.0
    %2708 = vmatprep.subr.mxu0 0.0
    %2709 = vmatpush1.xpose.msra.mxu0 0.0
    %2710 = vmatprep.subr.mxu0 0.0
    %2711 = vmatpush1.xpose.msra.mxu0 0.0
    %2712 = vmatprep.subr.mxu0 0.0
    %2713 = vmatpush1.xpose.msra.mxu0 0.0
    %2714 = vmatprep.subr.mxu0 0.0
    %2715 = vmatpush1.xpose.msra.mxu0 0.0
    %2716 = vmatprep.subr.mxu0 0.0
    %2717 = vmatpush1.xpose.msra.mxu0 0.0
    %2718 = vmatprep.subr.mxu0 0.0
    %2719 = vmatpush1.xpose.msra.mxu0 0.0
    %2720 = vmatprep.subr.mxu0 0.0
    %2721 = vmatpush1.xpose.msra.mxu0 0.0
    %2722 = vmatprep.subr.mxu0 0.0
    %2723 = vmatpush1.xpose.msra.mxu0 0.0
    %2724 = vmatprep.mubr.f32.mxu0 0.0
    %2725 = vmatmul.mubr.f32.gmra.mrb[0].mxu0 %v2652
    %v2726 = vpop.f32.mrb[0].mxu0
    %v2727 = vadd.f32 0.0, %v2726
    %v2728 = vpop.f32.mrb[0].mxu0
    %2729 = vmatprep.mubr.f32.mxu0 0.0
    %2730 = vmatmul.mubr.f32.gmra.mrb[0].mxu0 %v2654
    %v2731 = vpop.f32.mrb[0].mxu0
    %v2732 = vadd.f32 0.0, %v2731
    %v2733 = vpop.f32.mrb[0].mxu0
    %2734 = vdwg.mxu0
    %v2735 = vmul.f32 %v2638, 0.35355338
    %v2736 = vmul.f32 %v2643, 0.35355338
    %v2737 = vmul.f32 %v2727, 0.35355338
    %v2738 = vmul.f32 %v2732, 0.35355338
    %v2739 = vadd.f32 %v2735, %v60
    %v2740 = vadd.f32 %v2736, %v60
    %v2741 = vadd.f32 %v2737, %v60
    %v2742 = vadd.f32 %v2738, %v60
    %v2743 = vsel %vm361, %v2739, -inf
    %2744 = vmax.xlane.f32.xlu0 %v2743
    %v2745 = vpop.xlane.xlu0 %2744
    %v2746 = vsel %vm361, %v2740, -inf
    %2747 = vmax.xlane.f32.xlu0 %v2746
    %v2748 = vpop.xlane.xlu0 %2747
    %v2749 = vsel %vm361, %v2741, -inf
    %2750 = vmax.xlane.f32.xlu0 %v2749
    %v2751 = vpop.xlane.xlu0 %2750
    %v2752 = vsel %vm361, %v2742, -inf
    %2753 = vmax.xlane.f32.xlu0 %v2752
    %v2754 = vpop.xlane.xlu0 %2753
    %v2755 = vsub.f32 %v2739, %v2745
    %v2756 = vsub.f32 %v2740, %v2748
    %v2757 = vsub.f32 %v2741, %v2751
    %v2758 = vsub.f32 %v2742, %v2754
    %v2759 = vmul.f32 %v2755, 1.442695
    %v2760 = vpow.pop %v2759
    %v2761 = vmul.f32 %v2756, 1.442695
    %v2762 = vpow.pop %v2761
    %v2763 = vmul.f32 %v2757, 1.442695
    %v2764 = vpow.pop %v2763
    %v2765 = vmul.f32 %v2758, 1.442695
    %v2766 = vpow.pop %v2765
    %v2767 = vsel %vm361, %v2760, 0.0
    %2768 = vadd.xlane.f32.xlu0 %v2767
    %v2769 = vpop.xlane.xlu0 %2768
    %v2770 = vsel %vm361, %v2762, 0.0
    %2771 = vadd.xlane.f32.xlu0 %v2770
    %v2772 = vpop.xlane.xlu0 %2771
    %v2773 = vsel %vm361, %v2764, 0.0
    %2774 = vadd.xlane.f32.xlu0 %v2773
    %v2775 = vpop.xlane.xlu0 %2774
    %v2776 = vsel %vm361, %v2766, 0.0
    %2777 = vadd.xlane.f32.xlu0 %v2776
    %v2778 = vpop.xlane.xlu0 %2777
    %v2779 = vrcp.pop %v2769
    %v2780 = vrcp.pop %v2772
    %v2781 = vrcp.pop %v2775
    %v2782 = vrcp.pop %v2778
    %v2783 = vmul.f32 %v2760, %v2779
    %v2784 = vmul.f32 %v2762, %v2780
    %v2785 = vmul.f32 %v2764, %v2781
    %v2786 = vmul.f32 %v2766, %v2782
    %2787 = vrot.lane.b32.xlu0 %v2539, 64
    %v2788 = vpop.permute.xlu0 %2787
    %2789 = vrot.lane.b32.xlu0 %v2544, 64
    %v2790 = vpop.permute.xlu0 %2789
    %v2794 = vsel %vm361, %v2783, 0
    %v2797 = vsel %vm361, %v2784, 0
    %2799 = vmatprep.subr.mxu0 0.0
    %2800 = vmatpush1.msra.mxu0 %v2788
    %2801 = vmatprep.subr.mxu0 0.0
    %2802 = vmatpush1.msra.mxu0 %v2790
    %2803 = vmatprep.subr.mxu0 0.0
    %2804 = vmatpush1.msra.mxu0 0.0
    %2805 = vmatprep.subr.mxu0 0.0
    %2806 = vmatpush1.msra.mxu0 0.0
    %2807 = vmatprep.subr.mxu0 0.0
    %2808 = vmatpush1.msra.mxu0 0.0
    %2809 = vmatprep.subr.mxu0 0.0
    %2810 = vmatpush1.msra.mxu0 0.0
    %2811 = vmatprep.subr.mxu0 0.0
    %2812 = vmatpush1.msra.mxu0 0.0
    %2813 = vmatprep.subr.mxu0 0.0
    %2814 = vmatpush1.msra.mxu0 0.0
    %2815 = vmatprep.subr.mxu0 0.0
    %2816 = vmatpush1.msra.mxu0 0.0
    %2817 = vmatprep.subr.mxu0 0.0
    %2818 = vmatpush1.msra.mxu0 0.0
    %2819 = vmatprep.subr.mxu0 0.0
    %2820 = vmatpush1.msra.mxu0 0.0
    %2821 = vmatprep.subr.mxu0 0.0
    %2822 = vmatpush1.msra.mxu0 0.0
    %2823 = vmatprep.subr.mxu0 0.0
    %2824 = vmatpush1.msra.mxu0 0.0
    %2825 = vmatprep.subr.mxu0 0.0
    %2826 = vmatpush1.msra.mxu0 0.0
    %2827 = vmatprep.subr.mxu0 0.0
    %2828 = vmatpush1.msra.mxu0 0.0
    %2829 = vmatprep.subr.mxu0 0.0
    %2830 = vmatpush1.msra.mxu0 0.0
    %2831 = vmatprep.subr.mxu0 0.0
    %2832 = vmatpush1.msra.mxu0 0.0
    %2833 = vmatprep.subr.mxu0 0.0
    %2834 = vmatpush1.msra.mxu0 0.0
    %2835 = vmatprep.subr.mxu0 0.0
    %2836 = vmatpush1.msra.mxu0 0.0
    %2837 = vmatprep.subr.mxu0 0.0
    %2838 = vmatpush1.msra.mxu0 0.0
    %2839 = vmatprep.subr.mxu0 0.0
    %2840 = vmatpush1.msra.mxu0 0.0
    %2841 = vmatprep.subr.mxu0 0.0
    %2842 = vmatpush1.msra.mxu0 0.0
    %2843 = vmatprep.subr.mxu0 0.0
    %2844 = vmatpush1.msra.mxu0 0.0
    %2845 = vmatprep.subr.mxu0 0.0
    %2846 = vmatpush1.msra.mxu0 0.0
    %2847 = vmatprep.subr.mxu0 0.0
    %2848 = vmatpush1.msra.mxu0 0.0
    %2849 = vmatprep.subr.mxu0 0.0
    %2850 = vmatpush1.msra.mxu0 0.0
    %2851 = vmatprep.subr.mxu0 0.0
    %2852 = vmatpush1.msra.mxu0 0.0
    %2853 = vmatprep.subr.mxu0 0.0
    %2854 = vmatpush1.msra.mxu0 0.0
    %2855 = vmatprep.subr.mxu0 0.0
    %2856 = vmatpush1.msra.mxu0 0.0
    %2857 = vmatprep.subr.mxu0 0.0
    %2858 = vmatpush1.msra.mxu0 0.0
    %2859 = vmatprep.subr.mxu0 0.0
    %2860 = vmatpush1.msra.mxu0 0.0
    %2861 = vmatprep.subr.mxu0 0.0
    %2862 = vmatpush1.msra.mxu0 0.0
    %2863 = vmatprep.mubr.f32.mxu0 0.0
    %2864 = vmatmul.mubr.f32.gmra.mrb[0].mxu0 %v2794
    %v2865 = vpop.f32.mrb[0].mxu0
    %v2866 = vadd.f32 0.0, %v2865
    %v2867 = vpop.f32.mrb[0].mxu0
    %2868 = vmatprep.mubr.f32.mxu0 0.0
    %2869 = vmatmul.mubr.f32.gmra.mrb[0].mxu0 %v2797
    %v2870 = vpop.f32.mrb[0].mxu0
    %v2871 = vadd.f32 0.0, %v2870
    %v2872 = vpop.f32.mrb[0].mxu0
    %2873 = vdwg.mxu0
    %2874 = vrot.lane.b32.xlu0 %v2549, 64
    %v2875 = vpop.permute.xlu0 %2874
    %2876 = vrot.lane.b32.xlu0 %v2554, 64
    %v2877 = vpop.permute.xlu0 %2876
    %v2881 = vsel %vm361, %v2785, 0
    %v2884 = vsel %vm361, %v2786, 0
    %2886 = vmatprep.subr.mxu0 0.0
    %2887 = vmatpush1.msra.mxu0 %v2875
    %2888 = vmatprep.subr.mxu0 0.0
    %2889 = vmatpush1.msra.mxu0 %v2877
    %2890 = vmatprep.subr.mxu0 0.0
    %2891 = vmatpush1.msra.mxu0 0.0
    %2892 = vmatprep.subr.mxu0 0.0
    %2893 = vmatpush1.msra.mxu0 0.0
    %2894 = vmatprep.subr.mxu0 0.0
    %2895 = vmatpush1.msra.mxu0 0.0
    %2896 = vmatprep.subr.mxu0 0.0
    %2897 = vmatpush1.msra.mxu0 0.0
    %2898 = vmatprep.subr.mxu0 0.0
    %2899 = vmatpush1.msra.mxu0 0.0
    %2900 = vmatprep.subr.mxu0 0.0
    %2901 = vmatpush1.msra.mxu0 0.0
    %2902 = vmatprep.subr.mxu0 0.0
    %2903 = vmatpush1.msra.mxu0 0.0
    %2904 = vmatprep.subr.mxu0 0.0
    %2905 = vmatpush1.msra.mxu0 0.0
    %2906 = vmatprep.subr.mxu0 0.0
    %2907 = vmatpush1.msra.mxu0 0.0
    %2908 = vmatprep.subr.mxu0 0.0
    %2909 = vmatpush1.msra.mxu0 0.0
    %2910 = vmatprep.subr.mxu0 0.0
    %2911 = vmatpush1.msra.mxu0 0.0
    %2912 = vmatprep.subr.mxu0 0.0
    %2913 = vmatpush1.msra.mxu0 0.0
    %2914 = vmatprep.subr.mxu0 0.0
    %2915 = vmatpush1.msra.mxu0 0.0
    %2916 = vmatprep.subr.mxu0 0.0
    %2917 = vmatpush1.msra.mxu0 0.0
    %2918 = vmatprep.subr.mxu0 0.0
    %2919 = vmatpush1.msra.mxu0 0.0
    %2920 = vmatprep.subr.mxu0 0.0
    %2921 = vmatpush1.msra.mxu0 0.0
    %2922 = vmatprep.subr.mxu0 0.0
    %2923 = vmatpush1.msra.mxu0 0.0
    %2924 = vmatprep.subr.mxu0 0.0
    %2925 = vmatpush1.msra.mxu0 0.0
    %2926 = vmatprep.subr.mxu0 0.0
    %2927 = vmatpush1.msra.mxu0 0.0
    %2928 = vmatprep.subr.mxu0 0.0
    %2929 = vmatpush1.msra.mxu0 0.0
    %2930 = vmatprep.subr.mxu0 0.0
    %2931 = vmatpush1.msra.mxu0 0.0
    %2932 = vmatprep.subr.mxu0 0.0
    %2933 = vmatpush1.msra.mxu0 0.0
    %2934 = vmatprep.subr.mxu0 0.0
    %2935 = vmatpush1.msra.mxu0 0.0
    %2936 = vmatprep.subr.mxu0 0.0
    %2937 = vmatpush1.msra.mxu0 0.0
    %2938 = vmatprep.subr.mxu0 0.0
    %2939 = vmatpush1.msra.mxu0 0.0
    %2940 = vmatprep.subr.mxu0 0.0
    %2941 = vmatpush1.msra.mxu0 0.0
    %2942 = vmatprep.subr.mxu0 0.0
    %2943 = vmatpush1.msra.mxu0 0.0
    %2944 = vmatprep.subr.mxu0 0.0
    %2945 = vmatpush1.msra.mxu0 0.0
    %2946 = vmatprep.subr.mxu0 0.0
    %2947 = vmatpush1.msra.mxu0 0.0
    %2948 = vmatprep.subr.mxu0 0.0
    %2949 = vmatpush1.msra.mxu0 0.0
    %2950 = vmatprep.mubr.f32.mxu0 0.0
    %2951 = vmatmul.mubr.f32.gmra.mrb[0].mxu0 %v2881
    %v2952 = vpop.f32.mrb[0].mxu0
    %v2953 = vadd.f32 0.0, %v2952
    %v2954 = vpop.f32.mrb[0].mxu0
    %2955 = vmatprep.mubr.f32.mxu0 0.0
    %2956 = vmatmul.mubr.f32.gmra.mrb[0].mxu0 %v2884
    %v2957 = vpop.f32.mrb[0].mxu0
    %v2958 = vadd.f32 0.0, %v2957
    %v2959 = vpop.f32.mrb[0].mxu0
    %2960 = vdwg.mxu0
    %2961 = vrot.lane.b32.xlu0 %v2539, 120
    %v2962 = vpop.permute.xlu0 %2961
    %2963 = vrot.lane.b32.xlu0 %v2544, 120
    %v2964 = vpop.permute.xlu0 %2963
    %2965 = vrot.lane.b32.xlu0 %v2539, 88
    %v2966 = vpop.permute.xlu0 %2965
    %2967 = vrot.lane.b32.xlu0 %v2544, 88
    %v2968 = vpop.permute.xlu0 %2967
    %v2969 = vsel %vm180, %v2962, 0
    %v2971 = vsel %vm180, %v2964, 0
    %v2973 = vsel %vm180, %v2966, 0
    %v2975 = vsel %vm180, %v2968, 0
    %2977 = vmatprep.subr.mxu0 0.0
    %2978 = vmatpush1.xpose.msra.mxu0 %v2973
    %2979 = vmatprep.subr.mxu0 0.0
    %2980 = vmatpush1.xpose.msra.mxu0 %v2975
    %2981 = vmatprep.subr.mxu0 0.0
    %2982 = vmatpush1.xpose.msra.mxu0 0.0
    %2983 = vmatprep.subr.mxu0 0.0
    %2984 = vmatpush1.xpose.msra.mxu0 0.0
    %2985 = vmatprep.subr.mxu0 0.0
    %2986 = vmatpush1.xpose.msra.mxu0 0.0
    %2987 = vmatprep.subr.mxu0 0.0
    %2988 = vmatpush1.xpose.msra.mxu0 0.0
    %2989 = vmatprep.subr.mxu0 0.0
    %2990 = vmatpush1.xpose.msra.mxu0 0.0
    %2991 = vmatprep.subr.mxu0 0.0
    %2992 = vmatpush1.xpose.msra.mxu0 0.0
    %2993 = vmatprep.subr.mxu0 0.0
    %2994 = vmatpush1.xpose.msra.mxu0 0.0
    %2995 = vmatprep.subr.mxu0 0.0
    %2996 = vmatpush1.xpose.msra.mxu0 0.0
    %2997 = vmatprep.subr.mxu0 0.0
    %2998 = vmatpush1.xpose.msra.mxu0 0.0
    %2999 = vmatprep.subr.mxu0 0.0
    %3000 = vmatpush1.xpose.msra.mxu0 0.0
    %3001 = vmatprep.subr.mxu0 0.0
    %3002 = vmatpush1.xpose.msra.mxu0 0.0
    %3003 = vmatprep.subr.mxu0 0.0
    %3004 = vmatpush1.xpose.msra.mxu0 0.0
    %3005 = vmatprep.subr.mxu0 0.0
    %3006 = vmatpush1.xpose.msra.mxu0 0.0
    %3007 = vmatprep.subr.mxu0 0.0
    %3008 = vmatpush1.xpose.msra.mxu0 0.0
    %3009 = vmatprep.subr.mxu0 0.0
    %3010 = vmatpush1.xpose.msra.mxu0 0.0
    %3011 = vmatprep.subr.mxu0 0.0
    %3012 = vmatpush1.xpose.msra.mxu0 0.0
    %3013 = vmatprep.subr.mxu0 0.0
    %3014 = vmatpush1.xpose.msra.mxu0 0.0
    %3015 = vmatprep.subr.mxu0 0.0
    %3016 = vmatpush1.xpose.msra.mxu0 0.0
    %3017 = vmatprep.subr.mxu0 0.0
    %3018 = vmatpush1.xpose.msra.mxu0 0.0
    %3019 = vmatprep.subr.mxu0 0.0
    %3020 = vmatpush1.xpose.msra.mxu0 0.0
    %3021 = vmatprep.subr.mxu0 0.0
    %3022 = vmatpush1.xpose.msra.mxu0 0.0
    %3023 = vmatprep.subr.mxu0 0.0
    %3024 = vmatpush1.xpose.msra.mxu0 0.0
    %3025 = vmatprep.subr.mxu0 0.0
    %3026 = vmatpush1.xpose.msra.mxu0 0.0
    %3027 = vmatprep.subr.mxu0 0.0
    %3028 = vmatpush1.xpose.msra.mxu0 0.0
    %3029 = vmatprep.subr.mxu0 0.0
    %3030 = vmatpush1.xpose.msra.mxu0 0.0
    %3031 = vmatprep.subr.mxu0 0.0
    %3032 = vmatpush1.xpose.msra.mxu0 0.0
    %3033 = vmatprep.subr.mxu0 0.0
    %3034 = vmatpush1.xpose.msra.mxu0 0.0
    %3035 = vmatprep.subr.mxu0 0.0
    %3036 = vmatpush1.xpose.msra.mxu0 0.0
    %3037 = vmatprep.subr.mxu0 0.0
    %3038 = vmatpush1.xpose.msra.mxu0 0.0
    %3039 = vmatprep.subr.mxu0 0.0
    %3040 = vmatpush1.xpose.msra.mxu0 0.0
    %3041 = vmatprep.mubr.f32.mxu0 0.0
    %3042 = vmatmul.mubr.f32.gmra.mrb[0].mxu0 %v2969
    %v3043 = vpop.f32.mrb[0].mxu0
    %v3044 = vadd.f32 0.0, %v3043
    %v3045 = vpop.f32.mrb[0].mxu0
    %3046 = vmatprep.mubr.f32.mxu0 0.0
    %3047 = vmatmul.mubr.f32.gmra.mrb[0].mxu0 %v2971
    %v3048 = vpop.f32.mrb[0].mxu0
    %v3049 = vadd.f32 0.0, %v3048
    %v3050 = vpop.f32.mrb[0].mxu0
    %3051 = vdwg.mxu0
    %3052 = vrot.lane.b32.xlu0 %v2549, 120
    %v3053 = vpop.permute.xlu0 %3052
    %3054 = vrot.lane.b32.xlu0 %v2554, 120
    %v3055 = vpop.permute.xlu0 %3054
    %3056 = vrot.lane.b32.xlu0 %v2549, 88
    %v3057 = vpop.permute.xlu0 %3056
    %3058 = vrot.lane.b32.xlu0 %v2554, 88
    %v3059 = vpop.permute.xlu0 %3058
    %v3060 = vsel %vm180, %v3053, 0
    %v3062 = vsel %vm180, %v3055, 0
    %v3064 = vsel %vm180, %v3057, 0
    %v3066 = vsel %vm180, %v3059, 0
    %3068 = vmatprep.subr.mxu0 0.0
    %3069 = vmatpush1.xpose.msra.mxu0 %v3064
    %3070 = vmatprep.subr.mxu0 0.0
    %3071 = vmatpush1.xpose.msra.mxu0 %v3066
    %3072 = vmatprep.subr.mxu0 0.0
    %3073 = vmatpush1.xpose.msra.mxu0 0.0
    %3074 = vmatprep.subr.mxu0 0.0
    %3075 = vmatpush1.xpose.msra.mxu0 0.0
    %3076 = vmatprep.subr.mxu0 0.0
    %3077 = vmatpush1.xpose.msra.mxu0 0.0
    %3078 = vmatprep.subr.mxu0 0.0
    %3079 = vmatpush1.xpose.msra.mxu0 0.0
    %3080 = vmatprep.subr.mxu0 0.0
    %3081 = vmatpush1.xpose.msra.mxu0 0.0
    %3082 = vmatprep.subr.mxu0 0.0
    %3083 = vmatpush1.xpose.msra.mxu0 0.0
    %3084 = vmatprep.subr.mxu0 0.0
    %3085 = vmatpush1.xpose.msra.mxu0 0.0
    %3086 = vmatprep.subr.mxu0 0.0
    %3087 = vmatpush1.xpose.msra.mxu0 0.0
    %3088 = vmatprep.subr.mxu0 0.0
    %3089 = vmatpush1.xpose.msra.mxu0 0.0
    %3090 = vmatprep.subr.mxu0 0.0
    %3091 = vmatpush1.xpose.msra.mxu0 0.0
    %3092 = vmatprep.subr.mxu0 0.0
    %3093 = vmatpush1.xpose.msra.mxu0 0.0
    %3094 = vmatprep.subr.mxu0 0.0
    %3095 = vmatpush1.xpose.msra.mxu0 0.0
    %3096 = vmatprep.subr.mxu0 0.0
    %3097 = vmatpush1.xpose.msra.mxu0 0.0
    %3098 = vmatprep.subr.mxu0 0.0
    %3099 = vmatpush1.xpose.msra.mxu0 0.0
    %3100 = vmatprep.subr.mxu0 0.0
    %3101 = vmatpush1.xpose.msra.mxu0 0.0
    %3102 = vmatprep.subr.mxu0 0.0
    %3103 = vmatpush1.xpose.msra.mxu0 0.0
    %3104 = vmatprep.subr.mxu0 0.0
    %3105 = vmatpush1.xpose.msra.mxu0 0.0
    %3106 = vmatprep.subr.mxu0 0.0
    %3107 = vmatpush1.xpose.msra.mxu0 0.0
    %3108 = vmatprep.subr.mxu0 0.0
    %3109 = vmatpush1.xpose.msra.mxu0 0.0
    %3110 = vmatprep.subr.mxu0 0.0
    %3111 = vmatpush1.xpose.msra.mxu0 0.0
    %3112 = vmatprep.subr.mxu0 0.0
    %3113 = vmatpush1.xpose.msra.mxu0 0.0
    %3114 = vmatprep.subr.mxu0 0.0
    %3115 = vmatpush1.xpose.msra.mxu0 0.0
    %3116 = vmatprep.subr.mxu0 0.0
    %3117 = vmatpush1.xpose.msra.mxu0 0.0
    %3118 = vmatprep.subr.mxu0 0.0
    %3119 = vmatpush1.xpose.msra.mxu0 0.0
    %3120 = vmatprep.subr.mxu0 0.0
    %3121 = vmatpush1.xpose.msra.mxu0 0.0
    %3122 = vmatprep.subr.mxu0 0.0
    %3123 = vmatpush1.xpose.msra.mxu0 0.0
    %3124 = vmatprep.subr.mxu0 0.0
    %3125 = vmatpush1.xpose.msra.mxu0 0.0
    %3126 = vmatprep.subr.mxu0 0.0
    %3127 = vmatpush1.xpose.msra.mxu0 0.0
    %3128 = vmatprep.subr.mxu0 0.0
    %3129 = vmatpush1.xpose.msra.mxu0 0.0
    %3130 = vmatprep.subr.mxu0 0.0
    %3131 = vmatpush1.xpose.msra.mxu0 0.0
    %3132 = vmatprep.mubr.f32.mxu0 0.0
    %3133 = vmatmul.mubr.f32.gmra.mrb[0].mxu0 %v3060
    %v3134 = vpop.f32.mrb[0].mxu0
    %v3135 = vadd.f32 0.0, %v3134
    %v3136 = vpop.f32.mrb[0].mxu0
    %3137 = vmatprep.mubr.f32.mxu0 0.0
    %3138 = vmatmul.mubr.f32.gmra.mrb[0].mxu0 %v3062
    %v3139 = vpop.f32.mrb[0].mxu0
    %v3140 = vadd.f32 0.0, %v3139
    %v3141 = vpop.f32.mrb[0].mxu0
    %3142 = vdwg.mxu0
    %v3143 = vmul.f32 %v3044, 0.35355338
    %v3144 = vmul.f32 %v3049, 0.35355338
    %v3145 = vmul.f32 %v3135, 0.35355338
    %v3146 = vmul.f32 %v3140, 0.35355338
    %v3147 = vadd.f32 %v3143, %v60
    %v3148 = vadd.f32 %v3144, %v60
    %v3149 = vadd.f32 %v3145, %v60
    %v3150 = vadd.f32 %v3146, %v60
    %v3151 = vsel %vm361, %v3147, -inf
    %3152 = vmax.xlane.f32.xlu0 %v3151
    %v3153 = vpop.xlane.xlu0 %3152
    %v3154 = vsel %vm361, %v3148, -inf
    %3155 = vmax.xlane.f32.xlu0 %v3154
    %v3156 = vpop.xlane.xlu0 %3155
    %v3157 = vsel %vm361, %v3149, -inf
    %3158 = vmax.xlane.f32.xlu0 %v3157
    %v3159 = vpop.xlane.xlu0 %3158
    %v3160 = vsel %vm361, %v3150, -inf
    %3161 = vmax.xlane.f32.xlu0 %v3160
    %v3162 = vpop.xlane.xlu0 %3161
    %v3163 = vsub.f32 %v3147, %v3153
    %v3164 = vsub.f32 %v3148, %v3156
    %v3165 = vsub.f32 %v3149, %v3159
    %v3166 = vsub.f32 %v3150, %v3162
    %v3167 = vmul.f32 %v3163, 1.442695
    %v3168 = vpow.pop %v3167
    %v3169 = vmul.f32 %v3164, 1.442695
    %v3170 = vpow.pop %v3169
    %v3171 = vmul.f32 %v3165, 1.442695
    %v3172 = vpow.pop %v3171
    %v3173 = vmul.f32 %v3166, 1.442695
    %v3174 = vpow.pop %v3173
    %v3175 = vsel %vm361, %v3168, 0.0
    %3176 = vadd.xlane.f32.xlu0 %v3175
    %v3177 = vpop.xlane.xlu0 %3176
    %v3178 = vsel %vm361, %v3170, 0.0
    %3179 = vadd.xlane.f32.xlu0 %v3178
    %v3180 = vpop.xlane.xlu0 %3179
    %v3181 = vsel %vm361, %v3172, 0.0
    %3182 = vadd.xlane.f32.xlu0 %v3181
    %v3183 = vpop.xlane.xlu0 %3182
    %v3184 = vsel %vm361, %v3174, 0.0
    %3185 = vadd.xlane.f32.xlu0 %v3184
    %v3186 = vpop.xlane.xlu0 %3185
    %v3187 = vrcp.pop %v3177
    %v3188 = vrcp.pop %v3180
    %v3189 = vrcp.pop %v3183
    %v3190 = vrcp.pop %v3186
    %v3191 = vmul.f32 %v3168, %v3187
    %v3192 = vmul.f32 %v3170, %v3188
    %v3193 = vmul.f32 %v3172, %v3189
    %v3194 = vmul.f32 %v3174, %v3190
    %3195 = vrot.lane.b32.xlu0 %v2539, 56
    %v3196 = vpop.permute.xlu0 %3195
    %3197 = vrot.lane.b32.xlu0 %v2544, 56
    %v3198 = vpop.permute.xlu0 %3197
    %v3202 = vsel %vm361, %v3191, 0
    %v3205 = vsel %vm361, %v3192, 0
    %3207 = vmatprep.subr.mxu0 0.0
    %3208 = vmatpush1.msra.mxu0 %v3196
    %3209 = vmatprep.subr.mxu0 0.0
    %3210 = vmatpush1.msra.mxu0 %v3198
    %3211 = vmatprep.subr.mxu0 0.0
    %3212 = vmatpush1.msra.mxu0 0.0
    %3213 = vmatprep.subr.mxu0 0.0
    %3214 = vmatpush1.msra.mxu0 0.0
    %3215 = vmatprep.subr.mxu0 0.0
    %3216 = vmatpush1.msra.mxu0 0.0
    %3217 = vmatprep.subr.mxu0 0.0
    %3218 = vmatpush1.msra.mxu0 0.0
    %3219 = vmatprep.subr.mxu0 0.0
    %3220 = vmatpush1.msra.mxu0 0.0
    %3221 = vmatprep.subr.mxu0 0.0
    %3222 = vmatpush1.msra.mxu0 0.0
    %3223 = vmatprep.subr.mxu0 0.0
    %3224 = vmatpush1.msra.mxu0 0.0
    %3225 = vmatprep.subr.mxu0 0.0
    %3226 = vmatpush1.msra.mxu0 0.0
    %3227 = vmatprep.subr.mxu0 0.0
    %3228 = vmatpush1.msra.mxu0 0.0
    %3229 = vmatprep.subr.mxu0 0.0
    %3230 = vmatpush1.msra.mxu0 0.0
    %3231 = vmatprep.subr.mxu0 0.0
    %3232 = vmatpush1.msra.mxu0 0.0
    %3233 = vmatprep.subr.mxu0 0.0
    %3234 = vmatpush1.msra.mxu0 0.0
    %3235 = vmatprep.subr.mxu0 0.0
    %3236 = vmatpush1.msra.mxu0 0.0
    %3237 = vmatprep.subr.mxu0 0.0
    %3238 = vmatpush1.msra.mxu0 0.0
    %3239 = vmatprep.subr.mxu0 0.0
    %3240 = vmatpush1.msra.mxu0 0.0
    %3241 = vmatprep.subr.mxu0 0.0
    %3242 = vmatpush1.msra.mxu0 0.0
    %3243 = vmatprep.subr.mxu0 0.0
    %3244 = vmatpush1.msra.mxu0 0.0
    %3245 = vmatprep.subr.mxu0 0.0
    %3246 = vmatpush1.msra.mxu0 0.0
    %3247 = vmatprep.subr.mxu0 0.0
    %3248 = vmatpush1.msra.mxu0 0.0
    %3249 = vmatprep.subr.mxu0 0.0
    %3250 = vmatpush1.msra.mxu0 0.0
    %3251 = vmatprep.subr.mxu0 0.0
    %3252 = vmatpush1.msra.mxu0 0.0
    %3253 = vmatprep.subr.mxu0 0.0
    %3254 = vmatpush1.msra.mxu0 0.0
    %3255 = vmatprep.subr.mxu0 0.0
    %3256 = vmatpush1.msra.mxu0 0.0
    %3257 = vmatprep.subr.mxu0 0.0
    %3258 = vmatpush1.msra.mxu0 0.0
    %3259 = vmatprep.subr.mxu0 0.0
    %3260 = vmatpush1.msra.mxu0 0.0
    %3261 = vmatprep.subr.mxu0 0.0
    %3262 = vmatpush1.msra.mxu0 0.0
    %3263 = vmatprep.subr.mxu0 0.0
    %3264 = vmatpush1.msra.mxu0 0.0
    %3265 = vmatprep.subr.mxu0 0.0
    %3266 = vmatpush1.msra.mxu0 0.0
    %3267 = vmatprep.subr.mxu0 0.0
    %3268 = vmatpush1.msra.mxu0 0.0
    %3269 = vmatprep.subr.mxu0 0.0
    %3270 = vmatpush1.msra.mxu0 0.0
    %3271 = vmatprep.mubr.f32.mxu0 0.0
    %3272 = vmatmul.mubr.f32.gmra.mrb[0].mxu0 %v3202
    %v3273 = vpop.f32.mrb[0].mxu0
    %v3274 = vadd.f32 0.0, %v3273
    %v3275 = vpop.f32.mrb[0].mxu0
    %3276 = vmatprep.mubr.f32.mxu0 0.0
    %3277 = vmatmul.mubr.f32.gmra.mrb[0].mxu0 %v3205
    %v3278 = vpop.f32.mrb[0].mxu0
    %v3279 = vadd.f32 0.0, %v3278
    %v3280 = vpop.f32.mrb[0].mxu0
    %3281 = vdwg.mxu0
    %3282 = vrot.lane.b32.xlu0 %v2549, 56
    %v3283 = vpop.permute.xlu0 %3282
    %3284 = vrot.lane.b32.xlu0 %v2554, 56
    %v3285 = vpop.permute.xlu0 %3284
    %v3289 = vsel %vm361, %v3193, 0
    %v3292 = vsel %vm361, %v3194, 0
    %3294 = vmatprep.subr.mxu0 0.0
    %3295 = vmatpush1.msra.mxu0 %v3283
    %3296 = vmatprep.subr.mxu0 0.0
    %3297 = vmatpush1.msra.mxu0 %v3285
    %3298 = vmatprep.subr.mxu0 0.0
    %3299 = vmatpush1.msra.mxu0 0.0
    %3300 = vmatprep.subr.mxu0 0.0
    %3301 = vmatpush1.msra.mxu0 0.0
    %3302 = vmatprep.subr.mxu0 0.0
    %3303 = vmatpush1.msra.mxu0 0.0
    %3304 = vmatprep.subr.mxu0 0.0
    %3305 = vmatpush1.msra.mxu0 0.0
    %3306 = vmatprep.subr.mxu0 0.0
    %3307 = vmatpush1.msra.mxu0 0.0
    %3308 = vmatprep.subr.mxu0 0.0
    %3309 = vmatpush1.msra.mxu0 0.0
    %3310 = vmatprep.subr.mxu0 0.0
    %3311 = vmatpush1.msra.mxu0 0.0
    %3312 = vmatprep.subr.mxu0 0.0
    %3313 = vmatpush1.msra.mxu0 0.0
    %3314 = vmatprep.subr.mxu0 0.0
    %3315 = vmatpush1.msra.mxu0 0.0
    %3316 = vmatprep.subr.mxu0 0.0
    %3317 = vmatpush1.msra.mxu0 0.0
    %3318 = vmatprep.subr.mxu0 0.0
    %3319 = vmatpush1.msra.mxu0 0.0
    %3320 = vmatprep.subr.mxu0 0.0
    %3321 = vmatpush1.msra.mxu0 0.0
    %3322 = vmatprep.subr.mxu0 0.0
    %3323 = vmatpush1.msra.mxu0 0.0
    %3324 = vmatprep.subr.mxu0 0.0
    %3325 = vmatpush1.msra.mxu0 0.0
    %3326 = vmatprep.subr.mxu0 0.0
    %3327 = vmatpush1.msra.mxu0 0.0
    %3328 = vmatprep.subr.mxu0 0.0
    %3329 = vmatpush1.msra.mxu0 0.0
    %3330 = vmatprep.subr.mxu0 0.0
    %3331 = vmatpush1.msra.mxu0 0.0
    %3332 = vmatprep.subr.mxu0 0.0
    %3333 = vmatpush1.msra.mxu0 0.0
    %3334 = vmatprep.subr.mxu0 0.0
    %3335 = vmatpush1.msra.mxu0 0.0
    %3336 = vmatprep.subr.mxu0 0.0
    %3337 = vmatpush1.msra.mxu0 0.0
    %3338 = vmatprep.subr.mxu0 0.0
    %3339 = vmatpush1.msra.mxu0 0.0
    %3340 = vmatprep.subr.mxu0 0.0
    %3341 = vmatpush1.msra.mxu0 0.0
    %3342 = vmatprep.subr.mxu0 0.0
    %3343 = vmatpush1.msra.mxu0 0.0
    %3344 = vmatprep.subr.mxu0 0.0
    %3345 = vmatpush1.msra.mxu0 0.0
    %3346 = vmatprep.subr.mxu0 0.0
    %3347 = vmatpush1.msra.mxu0 0.0
    %3348 = vmatprep.subr.mxu0 0.0
    %3349 = vmatpush1.msra.mxu0 0.0
    %3350 = vmatprep.subr.mxu0 0.0
    %3351 = vmatpush1.msra.mxu0 0.0
    %3352 = vmatprep.subr.mxu0 0.0
    %3353 = vmatpush1.msra.mxu0 0.0
    %3354 = vmatprep.subr.mxu0 0.0
    %3355 = vmatpush1.msra.mxu0 0.0
    %3356 = vmatprep.subr.mxu0 0.0
    %3357 = vmatpush1.msra.mxu0 0.0
    %3358 = vmatprep.mubr.f32.mxu0 0.0
    %3359 = vmatmul.mubr.f32.gmra.mrb[0].mxu0 %v3289
    %v3360 = vpop.f32.mrb[0].mxu0
    %v3361 = vadd.f32 0.0, %v3360
    %v3362 = vpop.f32.mrb[0].mxu0
    %3363 = vmatprep.mubr.f32.mxu0 0.0
    %3364 = vmatmul.mubr.f32.gmra.mrb[0].mxu0 %v3292
    %v3365 = vpop.f32.mrb[0].mxu0
    %v3366 = vadd.f32 0.0, %v3365
    %v3367 = vpop.f32.mrb[0].mxu0
    %3368 = vdwg.mxu0
    %3369 = vrot.lane.b32.xlu0 %v2539, 112
    %v3370 = vpop.permute.xlu0 %3369
    %3371 = vrot.lane.b32.xlu0 %v2544, 112
    %v3372 = vpop.permute.xlu0 %3371
    %3373 = vrot.lane.b32.xlu0 %v2539, 80
    %v3374 = vpop.permute.xlu0 %3373
    %3375 = vrot.lane.b32.xlu0 %v2544, 80
    %v3376 = vpop.permute.xlu0 %3375
    %v3377 = vsel %vm180, %v3370, 0
    %v3379 = vsel %vm180, %v3372, 0
    %v3381 = vsel %vm180, %v3374, 0
    %v3383 = vsel %vm180, %v3376, 0
    %3385 = vmatprep.subr.mxu0 0.0
    %3386 = vmatpush1.xpose.msra.mxu0 %v3381
    %3387 = vmatprep.subr.mxu0 0.0
    %3388 = vmatpush1.xpose.msra.mxu0 %v3383
    %3389 = vmatprep.subr.mxu0 0.0
    %3390 = vmatpush1.xpose.msra.mxu0 0.0
    %3391 = vmatprep.subr.mxu0 0.0
    %3392 = vmatpush1.xpose.msra.mxu0 0.0
    %3393 = vmatprep.subr.mxu0 0.0
    %3394 = vmatpush1.xpose.msra.mxu0 0.0
    %3395 = vmatprep.subr.mxu0 0.0
    %3396 = vmatpush1.xpose.msra.mxu0 0.0
    %3397 = vmatprep.subr.mxu0 0.0
    %3398 = vmatpush1.xpose.msra.mxu0 0.0
    %3399 = vmatprep.subr.mxu0 0.0
    %3400 = vmatpush1.xpose.msra.mxu0 0.0
    %3401 = vmatprep.subr.mxu0 0.0
    %3402 = vmatpush1.xpose.msra.mxu0 0.0
    %3403 = vmatprep.subr.mxu0 0.0
    %3404 = vmatpush1.xpose.msra.mxu0 0.0
    %3405 = vmatprep.subr.mxu0 0.0
    %3406 = vmatpush1.xpose.msra.mxu0 0.0
    %3407 = vmatprep.subr.mxu0 0.0
    %3408 = vmatpush1.xpose.msra.mxu0 0.0
    %3409 = vmatprep.subr.mxu0 0.0
    %3410 = vmatpush1.xpose.msra.mxu0 0.0
    %3411 = vmatprep.subr.mxu0 0.0
    %3412 = vmatpush1.xpose.msra.mxu0 0.0
    %3413 = vmatprep.subr.mxu0 0.0
    %3414 = vmatpush1.xpose.msra.mxu0 0.0
    %3415 = vmatprep.subr.mxu0 0.0
    %3416 = vmatpush1.xpose.msra.mxu0 0.0
    %3417 = vmatprep.subr.mxu0 0.0
    %3418 = vmatpush1.xpose.msra.mxu0 0.0
    %3419 = vmatprep.subr.mxu0 0.0
    %3420 = vmatpush1.xpose.msra.mxu0 0.0
    %3421 = vmatprep.subr.mxu0 0.0
    %3422 = vmatpush1.xpose.msra.mxu0 0.0
    %3423 = vmatprep.subr.mxu0 0.0
    %3424 = vmatpush1.xpose.msra.mxu0 0.0
    %3425 = vmatprep.subr.mxu0 0.0
    %3426 = vmatpush1.xpose.msra.mxu0 0.0
    %3427 = vmatprep.subr.mxu0 0.0
    %3428 = vmatpush1.xpose.msra.mxu0 0.0
    %3429 = vmatprep.subr.mxu0 0.0
    %3430 = vmatpush1.xpose.msra.mxu0 0.0
    %3431 = vmatprep.subr.mxu0 0.0
    %3432 = vmatpush1.xpose.msra.mxu0 0.0
    %3433 = vmatprep.subr.mxu0 0.0
    %3434 = vmatpush1.xpose.msra.mxu0 0.0
    %3435 = vmatprep.subr.mxu0 0.0
    %3436 = vmatpush1.xpose.msra.mxu0 0.0
    %3437 = vmatprep.subr.mxu0 0.0
    %3438 = vmatpush1.xpose.msra.mxu0 0.0
    %3439 = vmatprep.subr.mxu0 0.0
    %3440 = vmatpush1.xpose.msra.mxu0 0.0
    %3441 = vmatprep.subr.mxu0 0.0
    %3442 = vmatpush1.xpose.msra.mxu0 0.0
    %3443 = vmatprep.subr.mxu0 0.0
    %3444 = vmatpush1.xpose.msra.mxu0 0.0
    %3445 = vmatprep.subr.mxu0 0.0
    %3446 = vmatpush1.xpose.msra.mxu0 0.0
    %3447 = vmatprep.subr.mxu0 0.0
    %3448 = vmatpush1.xpose.msra.mxu0 0.0
    %3449 = vmatprep.mubr.f32.mxu0 0.0
    %3450 = vmatmul.mubr.f32.gmra.mrb[0].mxu0 %v3377
    %v3451 = vpop.f32.mrb[0].mxu0
    %v3452 = vadd.f32 0.0, %v3451
    %v3453 = vpop.f32.mrb[0].mxu0
    %3454 = vmatprep.mubr.f32.mxu0 0.0
    %3455 = vmatmul.mubr.f32.gmra.mrb[0].mxu0 %v3379
    %v3456 = vpop.f32.mrb[0].mxu0
    %v3457 = vadd.f32 0.0, %v3456
    %v3458 = vpop.f32.mrb[0].mxu0
    %3459 = vdwg.mxu0
    %3460 = vrot.lane.b32.xlu0 %v2549, 112
    %v3461 = vpop.permute.xlu0 %3460
    %3462 = vrot.lane.b32.xlu0 %v2554, 112
    %v3463 = vpop.permute.xlu0 %3462
    %3464 = vrot.lane.b32.xlu0 %v2549, 80
    %v3465 = vpop.permute.xlu0 %3464
    %3466 = vrot.lane.b32.xlu0 %v2554, 80
    %v3467 = vpop.permute.xlu0 %3466
    %v3468 = vsel %vm180, %v3461, 0
    %v3470 = vsel %vm180, %v3463, 0
    %v3472 = vsel %vm180, %v3465, 0
    %v3474 = vsel %vm180, %v3467, 0
    %3476 = vmatprep.subr.mxu0 0.0
    %3477 = vmatpush1.xpose.msra.mxu0 %v3472
    %3478 = vmatprep.subr.mxu0 0.0
    %3479 = vmatpush1.xpose.msra.mxu0 %v3474
    %3480 = vmatprep.subr.mxu0 0.0
    %3481 = vmatpush1.xpose.msra.mxu0 0.0
    %3482 = vmatprep.subr.mxu0 0.0
    %3483 = vmatpush1.xpose.msra.mxu0 0.0
    %3484 = vmatprep.subr.mxu0 0.0
    %3485 = vmatpush1.xpose.msra.mxu0 0.0
    %3486 = vmatprep.subr.mxu0 0.0
    %3487 = vmatpush1.xpose.msra.mxu0 0.0
    %3488 = vmatprep.subr.mxu0 0.0
    %3489 = vmatpush1.xpose.msra.mxu0 0.0
    %3490 = vmatprep.subr.mxu0 0.0
    %3491 = vmatpush1.xpose.msra.mxu0 0.0
    %3492 = vmatprep.subr.mxu0 0.0
    %3493 = vmatpush1.xpose.msra.mxu0 0.0
    %3494 = vmatprep.subr.mxu0 0.0
    %3495 = vmatpush1.xpose.msra.mxu0 0.0
    %3496 = vmatprep.subr.mxu0 0.0
    %3497 = vmatpush1.xpose.msra.mxu0 0.0
    %3498 = vmatprep.subr.mxu0 0.0
    %3499 = vmatpush1.xpose.msra.mxu0 0.0
    %3500 = vmatprep.subr.mxu0 0.0
    %3501 = vmatpush1.xpose.msra.mxu0 0.0
    %3502 = vmatprep.subr.mxu0 0.0
    %3503 = vmatpush1.xpose.msra.mxu0 0.0
    %3504 = vmatprep.subr.mxu0 0.0
    %3505 = vmatpush1.xpose.msra.mxu0 0.0
    %3506 = vmatprep.subr.mxu0 0.0
    %3507 = vmatpush1.xpose.msra.mxu0 0.0
    %3508 = vmatprep.subr.mxu0 0.0
    %3509 = vmatpush1.xpose.msra.mxu0 0.0
    %3510 = vmatprep.subr.mxu0 0.0
    %3511 = vmatpush1.xpose.msra.mxu0 0.0
    %3512 = vmatprep.subr.mxu0 0.0
    %3513 = vmatpush1.xpose.msra.mxu0 0.0
    %3514 = vmatprep.subr.mxu0 0.0
    %3515 = vmatpush1.xpose.msra.mxu0 0.0
    %3516 = vmatprep.subr.mxu0 0.0
    %3517 = vmatpush1.xpose.msra.mxu0 0.0
    %3518 = vmatprep.subr.mxu0 0.0
    %3519 = vmatpush1.xpose.msra.mxu0 0.0
    %3520 = vmatprep.subr.mxu0 0.0
    %3521 = vmatpush1.xpose.msra.mxu0 0.0
    %3522 = vmatprep.subr.mxu0 0.0
    %3523 = vmatpush1.xpose.msra.mxu0 0.0
    %3524 = vmatprep.subr.mxu0 0.0
    %3525 = vmatpush1.xpose.msra.mxu0 0.0
    %3526 = vmatprep.subr.mxu0 0.0
    %3527 = vmatpush1.xpose.msra.mxu0 0.0
    %3528 = vmatprep.subr.mxu0 0.0
    %3529 = vmatpush1.xpose.msra.mxu0 0.0
    %3530 = vmatprep.subr.mxu0 0.0
    %3531 = vmatpush1.xpose.msra.mxu0 0.0
    %3532 = vmatprep.subr.mxu0 0.0
    %3533 = vmatpush1.xpose.msra.mxu0 0.0
    %3534 = vmatprep.subr.mxu0 0.0
    %3535 = vmatpush1.xpose.msra.mxu0 0.0
    %3536 = vmatprep.subr.mxu0 0.0
    %3537 = vmatpush1.xpose.msra.mxu0 0.0
    %3538 = vmatprep.subr.mxu0 0.0
    %3539 = vmatpush1.xpose.msra.mxu0 0.0
    %3540 = vmatprep.mubr.f32.mxu0 0.0
    %3541 = vmatmul.mubr.f32.gmra.mrb[0].mxu0 %v3468
    %v3542 = vpop.f32.mrb[0].mxu0
    %v3543 = vadd.f32 0.0, %v3542
    %v3544 = vpop.f32.mrb[0].mxu0
    %3545 = vmatprep.mubr.f32.mxu0 0.0
    %3546 = vmatmul.mubr.f32.gmra.mrb[0].mxu0 %v3470
    %v3547 = vpop.f32.mrb[0].mxu0
    %v3548 = vadd.f32 0.0, %v3547
    %v3549 = vpop.f32.mrb[0].mxu0
    %3550 = vdwg.mxu0
    %v3551 = vmul.f32 %v3452, 0.35355338
    %v3552 = vmul.f32 %v3457, 0.35355338
    %v3553 = vmul.f32 %v3543, 0.35355338
    %v3554 = vmul.f32 %v3548, 0.35355338
    %v3555 = vadd.f32 %v3551, %v60
    %v3556 = vadd.f32 %v3552, %v60
    %v3557 = vadd.f32 %v3553, %v60
    %v3558 = vadd.f32 %v3554, %v60
    %v3559 = vsel %vm361, %v3555, -inf
    %3560 = vmax.xlane.f32.xlu0 %v3559
    %v3561 = vpop.xlane.xlu0 %3560
    %v3562 = vsel %vm361, %v3556, -inf
    %3563 = vmax.xlane.f32.xlu0 %v3562
    %v3564 = vpop.xlane.xlu0 %3563
    %v3565 = vsel %vm361, %v3557, -inf
    %3566 = vmax.xlane.f32.xlu0 %v3565
    %v3567 = vpop.xlane.xlu0 %3566
    %v3568 = vsel %vm361, %v3558, -inf
    %3569 = vmax.xlane.f32.xlu0 %v3568
    %v3570 = vpop.xlane.xlu0 %3569
    %v3571 = vsub.f32 %v3555, %v3561
    %v3572 = vsub.f32 %v3556, %v3564
    %v3573 = vsub.f32 %v3557, %v3567
    %v3574 = vsub.f32 %v3558, %v3570
    %v3575 = vmul.f32 %v3571, 1.442695
    %v3576 = vpow.pop %v3575
    %v3577 = vmul.f32 %v3572, 1.442695
    %v3578 = vpow.pop %v3577
    %v3579 = vmul.f32 %v3573, 1.442695
    %v3580 = vpow.pop %v3579
    %v3581 = vmul.f32 %v3574, 1.442695
    %v3582 = vpow.pop %v3581
    %v3583 = vsel %vm361, %v3576, 0.0
    %3584 = vadd.xlane.f32.xlu0 %v3583
    %v3585 = vpop.xlane.xlu0 %3584
    %v3586 = vsel %vm361, %v3578, 0.0
    %3587 = vadd.xlane.f32.xlu0 %v3586
    %v3588 = vpop.xlane.xlu0 %3587
    %v3589 = vsel %vm361, %v3580, 0.0
    %3590 = vadd.xlane.f32.xlu0 %v3589
    %v3591 = vpop.xlane.xlu0 %3590
    %v3592 = vsel %vm361, %v3582, 0.0
    %3593 = vadd.xlane.f32.xlu0 %v3592
    %v3594 = vpop.xlane.xlu0 %3593
    %v3595 = vrcp.pop %v3585
    %v3596 = vrcp.pop %v3588
    %v3597 = vrcp.pop %v3591
    %v3598 = vrcp.pop %v3594
    %v3599 = vmul.f32 %v3576, %v3595
    %v3600 = vmul.f32 %v3578, %v3596
    %v3601 = vmul.f32 %v3580, %v3597
    %v3602 = vmul.f32 %v3582, %v3598
    %3603 = vrot.lane.b32.xlu0 %v2539, 48
    %v3604 = vpop.permute.xlu0 %3603
    %3605 = vrot.lane.b32.xlu0 %v2544, 48
    %v3606 = vpop.permute.xlu0 %3605
    %v3610 = vsel %vm361, %v3599, 0
    %v3613 = vsel %vm361, %v3600, 0
    %3615 = vmatprep.subr.mxu0 0.0
    %3616 = vmatpush1.msra.mxu0 %v3604
    %3617 = vmatprep.subr.mxu0 0.0
    %3618 = vmatpush1.msra.mxu0 %v3606
    %3619 = vmatprep.subr.mxu0 0.0
    %3620 = vmatpush1.msra.mxu0 0.0
    %3621 = vmatprep.subr.mxu0 0.0
    %3622 = vmatpush1.msra.mxu0 0.0
    %3623 = vmatprep.subr.mxu0 0.0
    %3624 = vmatpush1.msra.mxu0 0.0
    %3625 = vmatprep.subr.mxu0 0.0
    %3626 = vmatpush1.msra.mxu0 0.0
    %3627 = vmatprep.subr.mxu0 0.0
    %3628 = vmatpush1.msra.mxu0 0.0
    %3629 = vmatprep.subr.mxu0 0.0
    %3630 = vmatpush1.msra.mxu0 0.0
    %3631 = vmatprep.subr.mxu0 0.0
    %3632 = vmatpush1.msra.mxu0 0.0
    %3633 = vmatprep.subr.mxu0 0.0
    %3634 = vmatpush1.msra.mxu0 0.0
    %3635 = vmatprep.subr.mxu0 0.0
    %3636 = vmatpush1.msra.mxu0 0.0
    %3637 = vmatprep.subr.mxu0 0.0
    %3638 = vmatpush1.msra.mxu0 0.0
    %3639 = vmatprep.subr.mxu0 0.0
    %3640 = vmatpush1.msra.mxu0 0.0
    %3641 = vmatprep.subr.mxu0 0.0
    %3642 = vmatpush1.msra.mxu0 0.0
    %3643 = vmatprep.subr.mxu0 0.0
    %3644 = vmatpush1.msra.mxu0 0.0
    %3645 = vmatprep.subr.mxu0 0.0
    %3646 = vmatpush1.msra.mxu0 0.0
    %3647 = vmatprep.subr.mxu0 0.0
    %3648 = vmatpush1.msra.mxu0 0.0
    %3649 = vmatprep.subr.mxu0 0.0
    %3650 = vmatpush1.msra.mxu0 0.0
    %3651 = vmatprep.subr.mxu0 0.0
    %3652 = vmatpush1.msra.mxu0 0.0
    %3653 = vmatprep.subr.mxu0 0.0
    %3654 = vmatpush1.msra.mxu0 0.0
    %3655 = vmatprep.subr.mxu0 0.0
    %3656 = vmatpush1.msra.mxu0 0.0
    %3657 = vmatprep.subr.mxu0 0.0
    %3658 = vmatpush1.msra.mxu0 0.0
    %3659 = vmatprep.subr.mxu0 0.0
    %3660 = vmatpush1.msra.mxu0 0.0
    %3661 = vmatprep.subr.mxu0 0.0
    %3662 = vmatpush1.msra.mxu0 0.0
    %3663 = vmatprep.subr.mxu0 0.0
    %3664 = vmatpush1.msra.mxu0 0.0
    %3665 = vmatprep.subr.mxu0 0.0
    %3666 = vmatpush1.msra.mxu0 0.0
    %3667 = vmatprep.subr.mxu0 0.0
    %3668 = vmatpush1.msra.mxu0 0.0
    %3669 = vmatprep.subr.mxu0 0.0
    %3670 = vmatpush1.msra.mxu0 0.0
    %3671 = vmatprep.subr.mxu0 0.0
    %3672 = vmatpush1.msra.mxu0 0.0
    %3673 = vmatprep.subr.mxu0 0.0
    %3674 = vmatpush1.msra.mxu0 0.0
    %3675 = vmatprep.subr.mxu0 0.0
    %3676 = vmatpush1.msra.mxu0 0.0
    %3677 = vmatprep.subr.mxu0 0.0
    %3678 = vmatpush1.msra.mxu0 0.0
    %3679 = vmatprep.mubr.f32.mxu0 0.0
    %3680 = vmatmul.mubr.f32.gmra.mrb[0].mxu0 %v3610
    %v3681 = vpop.f32.mrb[0].mxu0
    %v3682 = vadd.f32 0.0, %v3681
    %v3683 = vpop.f32.mrb[0].mxu0
    %3684 = vmatprep.mubr.f32.mxu0 0.0
    %3685 = vmatmul.mubr.f32.gmra.mrb[0].mxu0 %v3613
    %v3686 = vpop.f32.mrb[0].mxu0
    %v3687 = vadd.f32 0.0, %v3686
    %v3688 = vpop.f32.mrb[0].mxu0
    %3689 = vdwg.mxu0
    %3690 = vrot.lane.b32.xlu0 %v2549, 48
    %v3691 = vpop.permute.xlu0 %3690
    %3692 = vrot.lane.b32.xlu0 %v2554, 48
    %v3693 = vpop.permute.xlu0 %3692
    %v3697 = vsel %vm361, %v3601, 0
    %v3700 = vsel %vm361, %v3602, 0
    %3702 = vmatprep.subr.mxu0 0.0
    %3703 = vmatpush1.msra.mxu0 %v3691
    %3704 = vmatprep.subr.mxu0 0.0
    %3705 = vmatpush1.msra.mxu0 %v3693
    %3706 = vmatprep.subr.mxu0 0.0
    %3707 = vmatpush1.msra.mxu0 0.0
    %3708 = vmatprep.subr.mxu0 0.0
    %3709 = vmatpush1.msra.mxu0 0.0
    %3710 = vmatprep.subr.mxu0 0.0
    %3711 = vmatpush1.msra.mxu0 0.0
    %3712 = vmatprep.subr.mxu0 0.0
    %3713 = vmatpush1.msra.mxu0 0.0
    %3714 = vmatprep.subr.mxu0 0.0
    %3715 = vmatpush1.msra.mxu0 0.0
    %3716 = vmatprep.subr.mxu0 0.0
    %3717 = vmatpush1.msra.mxu0 0.0
    %3718 = vmatprep.subr.mxu0 0.0
    %3719 = vmatpush1.msra.mxu0 0.0
    %3720 = vmatprep.subr.mxu0 0.0
    %3721 = vmatpush1.msra.mxu0 0.0
    %3722 = vmatprep.subr.mxu0 0.0
    %3723 = vmatpush1.msra.mxu0 0.0
    %3724 = vmatprep.subr.mxu0 0.0
    %3725 = vmatpush1.msra.mxu0 0.0
    %3726 = vmatprep.subr.mxu0 0.0
    %3727 = vmatpush1.msra.mxu0 0.0
    %3728 = vmatprep.subr.mxu0 0.0
    %3729 = vmatpush1.msra.mxu0 0.0
    %3730 = vmatprep.subr.mxu0 0.0
    %3731 = vmatpush1.msra.mxu0 0.0
    %3732 = vmatprep.subr.mxu0 0.0
    %3733 = vmatpush1.msra.mxu0 0.0
    %3734 = vmatprep.subr.mxu0 0.0
    %3735 = vmatpush1.msra.mxu0 0.0
    %3736 = vmatprep.subr.mxu0 0.0
    %3737 = vmatpush1.msra.mxu0 0.0
    %3738 = vmatprep.subr.mxu0 0.0
    %3739 = vmatpush1.msra.mxu0 0.0
    %3740 = vmatprep.subr.mxu0 0.0
    %3741 = vmatpush1.msra.mxu0 0.0
    %3742 = vmatprep.subr.mxu0 0.0
    %3743 = vmatpush1.msra.mxu0 0.0
    %3744 = vmatprep.subr.mxu0 0.0
    %3745 = vmatpush1.msra.mxu0 0.0
    %3746 = vmatprep.subr.mxu0 0.0
    %3747 = vmatpush1.msra.mxu0 0.0
    %3748 = vmatprep.subr.mxu0 0.0
    %3749 = vmatpush1.msra.mxu0 0.0
    %3750 = vmatprep.subr.mxu0 0.0
    %3751 = vmatpush1.msra.mxu0 0.0
    %3752 = vmatprep.subr.mxu0 0.0
    %3753 = vmatpush1.msra.mxu0 0.0
    %3754 = vmatprep.subr.mxu0 0.0
    %3755 = vmatpush1.msra.mxu0 0.0
    %3756 = vmatprep.subr.mxu0 0.0
    %3757 = vmatpush1.msra.mxu0 0.0
    %3758 = vmatprep.subr.mxu0 0.0
    %3759 = vmatpush1.msra.mxu0 0.0
    %3760 = vmatprep.subr.mxu0 0.0
    %3761 = vmatpush1.msra.mxu0 0.0
    %3762 = vmatprep.subr.mxu0 0.0
    %3763 = vmatpush1.msra.mxu0 0.0
    %3764 = vmatprep.subr.mxu0 0.0
    %3765 = vmatpush1.msra.mxu0 0.0
    %3766 = vmatprep.mubr.f32.mxu0 0.0
    %3767 = vmatmul.mubr.f32.gmra.mrb[0].mxu0 %v3697
    %v3768 = vpop.f32.mrb[0].mxu0
    %v3769 = vadd.f32 0.0, %v3768
    %v3770 = vpop.f32.mrb[0].mxu0
    %3771 = vmatprep.mubr.f32.mxu0 0.0
    %3772 = vmatmul.mubr.f32.gmra.mrb[0].mxu0 %v3700
    %v3773 = vpop.f32.mrb[0].mxu0
    %v3774 = vadd.f32 0.0, %v3773
    %v3775 = vpop.f32.mrb[0].mxu0
    %3776 = vdwg.mxu0
    %3777 = vrot.lane.b32.xlu0 %v2539, 104
    %v3778 = vpop.permute.xlu0 %3777
    %3779 = vrot.lane.b32.xlu0 %v2544, 104
    %v3780 = vpop.permute.xlu0 %3779
    %3781 = vrot.lane.b32.xlu0 %v2539, 72
    %v3782 = vpop.permute.xlu0 %3781
    %3783 = vrot.lane.b32.xlu0 %v2544, 72
    %v3784 = vpop.permute.xlu0 %3783
    %v3785 = vsel %vm180, %v3778, 0
    %v3787 = vsel %vm180, %v3780, 0
    %v3789 = vsel %vm180, %v3782, 0
    %v3791 = vsel %vm180, %v3784, 0
    %3793 = vmatprep.subr.mxu0 0.0
    %3794 = vmatpush1.xpose.msra.mxu0 %v3789
    %3795 = vmatprep.subr.mxu0 0.0
    %3796 = vmatpush1.xpose.msra.mxu0 %v3791
    %3797 = vmatprep.subr.mxu0 0.0
    %3798 = vmatpush1.xpose.msra.mxu0 0.0
    %3799 = vmatprep.subr.mxu0 0.0
    %3800 = vmatpush1.xpose.msra.mxu0 0.0
    %3801 = vmatprep.subr.mxu0 0.0
    %3802 = vmatpush1.xpose.msra.mxu0 0.0
    %3803 = vmatprep.subr.mxu0 0.0
    %3804 = vmatpush1.xpose.msra.mxu0 0.0
    %3805 = vmatprep.subr.mxu0 0.0
    %3806 = vmatpush1.xpose.msra.mxu0 0.0
    %3807 = vmatprep.subr.mxu0 0.0
    %3808 = vmatpush1.xpose.msra.mxu0 0.0
    %3809 = vmatprep.subr.mxu0 0.0
    %3810 = vmatpush1.xpose.msra.mxu0 0.0
    %3811 = vmatprep.subr.mxu0 0.0
    %3812 = vmatpush1.xpose.msra.mxu0 0.0
    %3813 = vmatprep.subr.mxu0 0.0
    %3814 = vmatpush1.xpose.msra.mxu0 0.0
    %3815 = vmatprep.subr.mxu0 0.0
    %3816 = vmatpush1.xpose.msra.mxu0 0.0
    %3817 = vmatprep.subr.mxu0 0.0
    %3818 = vmatpush1.xpose.msra.mxu0 0.0
    %3819 = vmatprep.subr.mxu0 0.0
    %3820 = vmatpush1.xpose.msra.mxu0 0.0
    %3821 = vmatprep.subr.mxu0 0.0
    %3822 = vmatpush1.xpose.msra.mxu0 0.0
    %3823 = vmatprep.subr.mxu0 0.0
    %3824 = vmatpush1.xpose.msra.mxu0 0.0
    %3825 = vmatprep.subr.mxu0 0.0
    %3826 = vmatpush1.xpose.msra.mxu0 0.0
    %3827 = vmatprep.subr.mxu0 0.0
    %3828 = vmatpush1.xpose.msra.mxu0 0.0
    %3829 = vmatprep.subr.mxu0 0.0
    %3830 = vmatpush1.xpose.msra.mxu0 0.0
    %3831 = vmatprep.subr.mxu0 0.0
    %3832 = vmatpush1.xpose.msra.mxu0 0.0
    %3833 = vmatprep.subr.mxu0 0.0
    %3834 = vmatpush1.xpose.msra.mxu0 0.0
    %3835 = vmatprep.subr.mxu0 0.0
    %3836 = vmatpush1.xpose.msra.mxu0 0.0
    %3837 = vmatprep.subr.mxu0 0.0
    %3838 = vmatpush1.xpose.msra.mxu0 0.0
    %3839 = vmatprep.subr.mxu0 0.0
    %3840 = vmatpush1.xpose.msra.mxu0 0.0
    %3841 = vmatprep.subr.mxu0 0.0
    %3842 = vmatpush1.xpose.msra.mxu0 0.0
    %3843 = vmatprep.subr.mxu0 0.0
    %3844 = vmatpush1.xpose.msra.mxu0 0.0
    %3845 = vmatprep.subr.mxu0 0.0
    %3846 = vmatpush1.xpose.msra.mxu0 0.0
    %3847 = vmatprep.subr.mxu0 0.0
    %3848 = vmatpush1.xpose.msra.mxu0 0.0
    %3849 = vmatprep.subr.mxu0 0.0
    %3850 = vmatpush1.xpose.msra.mxu0 0.0
    %3851 = vmatprep.subr.mxu0 0.0
    %3852 = vmatpush1.xpose.msra.mxu0 0.0
    %3853 = vmatprep.subr.mxu0 0.0
    %3854 = vmatpush1.xpose.msra.mxu0 0.0
    %3855 = vmatprep.subr.mxu0 0.0
    %3856 = vmatpush1.xpose.msra.mxu0 0.0
    %3857 = vmatprep.mubr.f32.mxu0 0.0
    %3858 = vmatmul.mubr.f32.gmra.mrb[0].mxu0 %v3785
    %v3859 = vpop.f32.mrb[0].mxu0
    %v3860 = vadd.f32 0.0, %v3859
    %v3861 = vpop.f32.mrb[0].mxu0
    %3862 = vmatprep.mubr.f32.mxu0 0.0
    %3863 = vmatmul.mubr.f32.gmra.mrb[0].mxu0 %v3787
    %v3864 = vpop.f32.mrb[0].mxu0
    %v3865 = vadd.f32 0.0, %v3864
    %v3866 = vpop.f32.mrb[0].mxu0
    %3867 = vdwg.mxu0
    %3868 = vrot.lane.b32.xlu0 %v2549, 104
    %v3869 = vpop.permute.xlu0 %3868
    %3870 = vrot.lane.b32.xlu0 %v2554, 104
    %v3871 = vpop.permute.xlu0 %3870
    %3872 = vrot.lane.b32.xlu0 %v2549, 72
    %v3873 = vpop.permute.xlu0 %3872
    %3874 = vrot.lane.b32.xlu0 %v2554, 72
    %v3875 = vpop.permute.xlu0 %3874
    %v3876 = vsel %vm180, %v3869, 0
    %v3878 = vsel %vm180, %v3871, 0
    %v3880 = vsel %vm180, %v3873, 0
    %v3882 = vsel %vm180, %v3875, 0
    %3884 = vmatprep.subr.mxu0 0.0
    %3885 = vmatpush1.xpose.msra.mxu0 %v3880
    %3886 = vmatprep.subr.mxu0 0.0
    %3887 = vmatpush1.xpose.msra.mxu0 %v3882
    %3888 = vmatprep.subr.mxu0 0.0
    %3889 = vmatpush1.xpose.msra.mxu0 0.0
    %3890 = vmatprep.subr.mxu0 0.0
    %3891 = vmatpush1.xpose.msra.mxu0 0.0
    %3892 = vmatprep.subr.mxu0 0.0
    %3893 = vmatpush1.xpose.msra.mxu0 0.0
    %3894 = vmatprep.subr.mxu0 0.0
    %3895 = vmatpush1.xpose.msra.mxu0 0.0
    %3896 = vmatprep.subr.mxu0 0.0
    %3897 = vmatpush1.xpose.msra.mxu0 0.0
    %3898 = vmatprep.subr.mxu0 0.0
    %3899 = vmatpush1.xpose.msra.mxu0 0.0
    %3900 = vmatprep.subr.mxu0 0.0
    %3901 = vmatpush1.xpose.msra.mxu0 0.0
    %3902 = vmatprep.subr.mxu0 0.0
    %3903 = vmatpush1.xpose.msra.mxu0 0.0
    %3904 = vmatprep.subr.mxu0 0.0
    %3905 = vmatpush1.xpose.msra.mxu0 0.0
    %3906 = vmatprep.subr.mxu0 0.0
    %3907 = vmatpush1.xpose.msra.mxu0 0.0
    %3908 = vmatprep.subr.mxu0 0.0
    %3909 = vmatpush1.xpose.msra.mxu0 0.0
    %3910 = vmatprep.subr.mxu0 0.0
    %3911 = vmatpush1.xpose.msra.mxu0 0.0
    %3912 = vmatprep.subr.mxu0 0.0
    %3913 = vmatpush1.xpose.msra.mxu0 0.0
    %3914 = vmatprep.subr.mxu0 0.0
    %3915 = vmatpush1.xpose.msra.mxu0 0.0
    %3916 = vmatprep.subr.mxu0 0.0
    %3917 = vmatpush1.xpose.msra.mxu0 0.0
    %3918 = vmatprep.subr.mxu0 0.0
    %3919 = vmatpush1.xpose.msra.mxu0 0.0
    %3920 = vmatprep.subr.mxu0 0.0
    %3921 = vmatpush1.xpose.msra.mxu0 0.0
    %3922 = vmatprep.subr.mxu0 0.0
    %3923 = vmatpush1.xpose.msra.mxu0 0.0
    %3924 = vmatprep.subr.mxu0 0.0
    %3925 = vmatpush1.xpose.msra.mxu0 0.0
    %3926 = vmatprep.subr.mxu0 0.0
    %3927 = vmatpush1.xpose.msra.mxu0 0.0
    %3928 = vmatprep.subr.mxu0 0.0
    %3929 = vmatpush1.xpose.msra.mxu0 0.0
    %3930 = vmatprep.subr.mxu0 0.0
    %3931 = vmatpush1.xpose.msra.mxu0 0.0
    %3932 = vmatprep.subr.mxu0 0.0
    %3933 = vmatpush1.xpose.msra.mxu0 0.0
    %3934 = vmatprep.subr.mxu0 0.0
    %3935 = vmatpush1.xpose.msra.mxu0 0.0
    %3936 = vmatprep.subr.mxu0 0.0
    %3937 = vmatpush1.xpose.msra.mxu0 0.0
    %3938 = vmatprep.subr.mxu0 0.0
    %3939 = vmatpush1.xpose.msra.mxu0 0.0
    %3940 = vmatprep.subr.mxu0 0.0
    %3941 = vmatpush1.xpose.msra.mxu0 0.0
    %3942 = vmatprep.subr.mxu0 0.0
    %3943 = vmatpush1.xpose.msra.mxu0 0.0
    %3944 = vmatprep.subr.mxu0 0.0
    %3945 = vmatpush1.xpose.msra.mxu0 0.0
    %3946 = vmatprep.subr.mxu0 0.0
    %3947 = vmatpush1.xpose.msra.mxu0 0.0
    %3948 = vmatprep.mubr.f32.mxu0 0.0
    %3949 = vmatmul.mubr.f32.gmra.mrb[0].mxu0 %v3876
    %v3950 = vpop.f32.mrb[0].mxu0
    %v3951 = vadd.f32 0.0, %v3950
    %v3952 = vpop.f32.mrb[0].mxu0
    %3953 = vmatprep.mubr.f32.mxu0 0.0
    %3954 = vmatmul.mubr.f32.gmra.mrb[0].mxu0 %v3878
    %v3955 = vpop.f32.mrb[0].mxu0
    %v3956 = vadd.f32 0.0, %v3955
    %v3957 = vpop.f32.mrb[0].mxu0
    %3958 = vdwg.mxu0
    %v3959 = vmul.f32 %v3860, 0.35355338
    %v3960 = vmul.f32 %v3865, 0.35355338
    %v3961 = vmul.f32 %v3951, 0.35355338
    %v3962 = vmul.f32 %v3956, 0.35355338
    %v3963 = vadd.f32 %v3959, %v60
    %v3964 = vadd.f32 %v3960, %v60
    %v3965 = vadd.f32 %v3961, %v60
    %v3966 = vadd.f32 %v3962, %v60
    %v3967 = vsel %vm361, %v3963, -inf
    %3968 = vmax.xlane.f32.xlu0 %v3967
    %v3969 = vpop.xlane.xlu0 %3968
    %v3970 = vsel %vm361, %v3964, -inf
    %3971 = vmax.xlane.f32.xlu0 %v3970
    %v3972 = vpop.xlane.xlu0 %3971
    %v3973 = vsel %vm361, %v3965, -inf
    %3974 = vmax.xlane.f32.xlu0 %v3973
    %v3975 = vpop.xlane.xlu0 %3974
    %v3976 = vsel %vm361, %v3966, -inf
    %3977 = vmax.xlane.f32.xlu0 %v3976
    %v3978 = vpop.xlane.xlu0 %3977
    %v3979 = vsub.f32 %v3963, %v3969
    %v3980 = vsub.f32 %v3964, %v3972
    %v3981 = vsub.f32 %v3965, %v3975
    %v3982 = vsub.f32 %v3966, %v3978
    %v3983 = vmul.f32 %v3979, 1.442695
    %v3984 = vpow.pop %v3983
    %v3985 = vmul.f32 %v3980, 1.442695
    %v3986 = vpow.pop %v3985
    %v3987 = vmul.f32 %v3981, 1.442695
    %v3988 = vpow.pop %v3987
    %v3989 = vmul.f32 %v3982, 1.442695
    %v3990 = vpow.pop %v3989
    %v3991 = vsel %vm361, %v3984, 0.0
    %3992 = vadd.xlane.f32.xlu0 %v3991
    %v3993 = vpop.xlane.xlu0 %3992
    %v3994 = vsel %vm361, %v3986, 0.0
    %3995 = vadd.xlane.f32.xlu0 %v3994
    %v3996 = vpop.xlane.xlu0 %3995
    %v3997 = vsel %vm361, %v3988, 0.0
    %3998 = vadd.xlane.f32.xlu0 %v3997
    %v3999 = vpop.xlane.xlu0 %3998
    %v4000 = vsel %vm361, %v3990, 0.0
    %4001 = vadd.xlane.f32.xlu0 %v4000
    %v4002 = vpop.xlane.xlu0 %4001
    %v4003 = vrcp.pop %v3993
    %v4004 = vrcp.pop %v3996
    %v4005 = vrcp.pop %v3999
    %v4006 = vrcp.pop %v4002
    %v4007 = vmul.f32 %v3984, %v4003
    %v4008 = vmul.f32 %v3986, %v4004
    %v4009 = vmul.f32 %v3988, %v4005
    %v4010 = vmul.f32 %v3990, %v4006
    %4011 = vrot.lane.b32.xlu0 %v2539, 40
    %v4012 = vpop.permute.xlu0 %4011
    %4013 = vrot.lane.b32.xlu0 %v2544, 40
    %v4014 = vpop.permute.xlu0 %4013
    %v4018 = vsel %vm361, %v4007, 0
    %v4021 = vsel %vm361, %v4008, 0
    %4023 = vmatprep.subr.mxu0 0.0
    %4024 = vmatpush1.msra.mxu0 %v4012
    %4025 = vmatprep.subr.mxu0 0.0
    %4026 = vmatpush1.msra.mxu0 %v4014
    %4027 = vmatprep.subr.mxu0 0.0
    %4028 = vmatpush1.msra.mxu0 0.0
    %4029 = vmatprep.subr.mxu0 0.0
    %4030 = vmatpush1.msra.mxu0 0.0
    %4031 = vmatprep.subr.mxu0 0.0
    %4032 = vmatpush1.msra.mxu0 0.0
    %4033 = vmatprep.subr.mxu0 0.0
    %4034 = vmatpush1.msra.mxu0 0.0
    %4035 = vmatprep.subr.mxu0 0.0
    %4036 = vmatpush1.msra.mxu0 0.0
    %4037 = vmatprep.subr.mxu0 0.0
    %4038 = vmatpush1.msra.mxu0 0.0
    %4039 = vmatprep.subr.mxu0 0.0
    %4040 = vmatpush1.msra.mxu0 0.0
    %4041 = vmatprep.subr.mxu0 0.0
    %4042 = vmatpush1.msra.mxu0 0.0
    %4043 = vmatprep.subr.mxu0 0.0
    %4044 = vmatpush1.msra.mxu0 0.0
    %4045 = vmatprep.subr.mxu0 0.0
    %4046 = vmatpush1.msra.mxu0 0.0
    %4047 = vmatprep.subr.mxu0 0.0
    %4048 = vmatpush1.msra.mxu0 0.0
    %4049 = vmatprep.subr.mxu0 0.0
    %4050 = vmatpush1.msra.mxu0 0.0
    %4051 = vmatprep.subr.mxu0 0.0
    %4052 = vmatpush1.msra.mxu0 0.0
    %4053 = vmatprep.subr.mxu0 0.0
    %4054 = vmatpush1.msra.mxu0 0.0
    %4055 = vmatprep.subr.mxu0 0.0
    %4056 = vmatpush1.msra.mxu0 0.0
    %4057 = vmatprep.subr.mxu0 0.0
    %4058 = vmatpush1.msra.mxu0 0.0
    %4059 = vmatprep.subr.mxu0 0.0
    %4060 = vmatpush1.msra.mxu0 0.0
    %4061 = vmatprep.subr.mxu0 0.0
    %4062 = vmatpush1.msra.mxu0 0.0
    %4063 = vmatprep.subr.mxu0 0.0
    %4064 = vmatpush1.msra.mxu0 0.0
    %4065 = vmatprep.subr.mxu0 0.0
    %4066 = vmatpush1.msra.mxu0 0.0
    %4067 = vmatprep.subr.mxu0 0.0
    %4068 = vmatpush1.msra.mxu0 0.0
    %4069 = vmatprep.subr.mxu0 0.0
    %4070 = vmatpush1.msra.mxu0 0.0
    %4071 = vmatprep.subr.mxu0 0.0
    %4072 = vmatpush1.msra.mxu0 0.0
    %4073 = vmatprep.subr.mxu0 0.0
    %4074 = vmatpush1.msra.mxu0 0.0
    %4075 = vmatprep.subr.mxu0 0.0
    %4076 = vmatpush1.msra.mxu0 0.0
    %4077 = vmatprep.subr.mxu0 0.0
    %4078 = vmatpush1.msra.mxu0 0.0
    %4079 = vmatprep.subr.mxu0 0.0
    %4080 = vmatpush1.msra.mxu0 0.0
    %4081 = vmatprep.subr.mxu0 0.0
    %4082 = vmatpush1.msra.mxu0 0.0
    %4083 = vmatprep.subr.mxu0 0.0
    %4084 = vmatpush1.msra.mxu0 0.0
    %4085 = vmatprep.subr.mxu0 0.0
    %4086 = vmatpush1.msra.mxu0 0.0
    %4087 = vmatprep.mubr.f32.mxu0 0.0
    %4088 = vmatmul.mubr.f32.gmra.mrb[0].mxu0 %v4018
    %v4089 = vpop.f32.mrb[0].mxu0
    %v4090 = vadd.f32 0.0, %v4089
    %v4091 = vpop.f32.mrb[0].mxu0
    %4092 = vmatprep.mubr.f32.mxu0 0.0
    %4093 = vmatmul.mubr.f32.gmra.mrb[0].mxu0 %v4021
    %v4094 = vpop.f32.mrb[0].mxu0
    %v4095 = vadd.f32 0.0, %v4094
    %v4096 = vpop.f32.mrb[0].mxu0
    %4097 = vdwg.mxu0
    %4098 = vrot.lane.b32.xlu0 %v2549, 40
    %v4099 = vpop.permute.xlu0 %4098
    %4100 = vrot.lane.b32.xlu0 %v2554, 40
    %v4101 = vpop.permute.xlu0 %4100
    %v4105 = vsel %vm361, %v4009, 0
    %v4108 = vsel %vm361, %v4010, 0
    %4110 = vmatprep.subr.mxu0 0.0
    %4111 = vmatpush1.msra.mxu0 %v4099
    %4112 = vmatprep.subr.mxu0 0.0
    %4113 = vmatpush1.msra.mxu0 %v4101
    %4114 = vmatprep.subr.mxu0 0.0
    %4115 = vmatpush1.msra.mxu0 0.0
    %4116 = vmatprep.subr.mxu0 0.0
    %4117 = vmatpush1.msra.mxu0 0.0
    %4118 = vmatprep.subr.mxu0 0.0
    %4119 = vmatpush1.msra.mxu0 0.0
    %4120 = vmatprep.subr.mxu0 0.0
    %4121 = vmatpush1.msra.mxu0 0.0
    %4122 = vmatprep.subr.mxu0 0.0
    %4123 = vmatpush1.msra.mxu0 0.0
    %4124 = vmatprep.subr.mxu0 0.0
    %4125 = vmatpush1.msra.mxu0 0.0
    %4126 = vmatprep.subr.mxu0 0.0
    %4127 = vmatpush1.msra.mxu0 0.0
    %4128 = vmatprep.subr.mxu0 0.0
    %4129 = vmatpush1.msra.mxu0 0.0
    %4130 = vmatprep.subr.mxu0 0.0
    %4131 = vmatpush1.msra.mxu0 0.0
    %4132 = vmatprep.subr.mxu0 0.0
    %4133 = vmatpush1.msra.mxu0 0.0
    %4134 = vmatprep.subr.mxu0 0.0
    %4135 = vmatpush1.msra.mxu0 0.0
    %4136 = vmatprep.subr.mxu0 0.0
    %4137 = vmatpush1.msra.mxu0 0.0
    %4138 = vmatprep.subr.mxu0 0.0
    %4139 = vmatpush1.msra.mxu0 0.0
    %4140 = vmatprep.subr.mxu0 0.0
    %4141 = vmatpush1.msra.mxu0 0.0
    %4142 = vmatprep.subr.mxu0 0.0
    %4143 = vmatpush1.msra.mxu0 0.0
    %4144 = vmatprep.subr.mxu0 0.0
    %4145 = vmatpush1.msra.mxu0 0.0
    %4146 = vmatprep.subr.mxu0 0.0
    %4147 = vmatpush1.msra.mxu0 0.0
    %4148 = vmatprep.subr.mxu0 0.0
    %4149 = vmatpush1.msra.mxu0 0.0
    %4150 = vmatprep.subr.mxu0 0.0
    %4151 = vmatpush1.msra.mxu0 0.0
    %4152 = vmatprep.subr.mxu0 0.0
    %4153 = vmatpush1.msra.mxu0 0.0
    %4154 = vmatprep.subr.mxu0 0.0
    %4155 = vmatpush1.msra.mxu0 0.0
    %4156 = vmatprep.subr.mxu0 0.0
    %4157 = vmatpush1.msra.mxu0 0.0
    %4158 = vmatprep.subr.mxu0 0.0
    %4159 = vmatpush1.msra.mxu0 0.0
    %4160 = vmatprep.subr.mxu0 0.0
    %4161 = vmatpush1.msra.mxu0 0.0
    %4162 = vmatprep.subr.mxu0 0.0
    %4163 = vmatpush1.msra.mxu0 0.0
    %4164 = vmatprep.subr.mxu0 0.0
    %4165 = vmatpush1.msra.mxu0 0.0
    %4166 = vmatprep.subr.mxu0 0.0
    %4167 = vmatpush1.msra.mxu0 0.0
    %4168 = vmatprep.subr.mxu0 0.0
    %4169 = vmatpush1.msra.mxu0 0.0
    %4170 = vmatprep.subr.mxu0 0.0
    %4171 = vmatpush1.msra.mxu0 0.0
    %4172 = vmatprep.subr.mxu0 0.0
    %4173 = vmatpush1.msra.mxu0 0.0
    %4174 = vmatprep.mubr.f32.mxu0 0.0
    %4175 = vmatmul.mubr.f32.gmra.mrb[0].mxu0 %v4105
    %v4176 = vpop.f32.mrb[0].mxu0
    %v4177 = vadd.f32 0.0, %v4176
    %v4178 = vpop.f32.mrb[0].mxu0
    %4179 = vmatprep.mubr.f32.mxu0 0.0
    %4180 = vmatmul.mubr.f32.gmra.mrb[0].mxu0 %v4108
    %v4181 = vpop.f32.mrb[0].mxu0
    %v4182 = vadd.f32 0.0, %v4181
    %v4183 = vpop.f32.mrb[0].mxu0
    %4184 = vdwg.mxu0
    %4189 = vrot.lane.b32.xlu0 %v3274, 8
    %v4190 = vpop.permute.xlu0 %4189
    %4191 = vrot.lane.b32.xlu0 %v3279, 8
    %v4192 = vpop.permute.xlu0 %4191
    %4193 = vrot.lane.b32.xlu0 %v3361, 8
    %v4194 = vpop.permute.xlu0 %4193
    %4195 = vrot.lane.b32.xlu0 %v3366, 8
    %v4196 = vpop.permute.xlu0 %4195
    %4205 = vrot.lane.b32.xlu0 %v3682, 16
    %v4206 = vpop.permute.xlu0 %4205
    %4207 = vrot.lane.b32.xlu0 %v3687, 16
    %v4208 = vpop.permute.xlu0 %4207
    %4209 = vrot.lane.b32.xlu0 %v3769, 16
    %v4210 = vpop.permute.xlu0 %4209
    %4211 = vrot.lane.b32.xlu0 %v3774, 16
    %v4212 = vpop.permute.xlu0 %4211
    %4221 = vrot.lane.b32.xlu0 %v4090, 24
    %v4222 = vpop.permute.xlu0 %4221
    %4223 = vrot.lane.b32.xlu0 %v4095, 24
    %v4224 = vpop.permute.xlu0 %4223
    %4225 = vrot.lane.b32.xlu0 %v4177, 24
    %v4226 = vpop.permute.xlu0 %4225
    %4227 = vrot.lane.b32.xlu0 %v4182, 24
    %v4228 = vpop.permute.xlu0 %4227
    %v4233 = vsel %vm180, %v2866, %v4190
    %v4234 = vsel %vm180, %v2871, %v4192
    %v4235 = vsel %vm180, %v2953, %v4194
    %v4236 = vsel %vm180, %v2958, %v4196
    %v4237 = vsel %vm361, %v4233, %v4206
    %v4238 = vsel %vm361, %v4234, %v4208
    %v4239 = vsel %vm361, %v4235, %v4210
    %v4240 = vsel %vm361, %v4236, %v4212
    %v4241 = vsel %vm1860, %v4237, %v4222
    %v4242 = vsel %vm1860, %v4238, %v4224
    %v4243 = vsel %vm1860, %v4239, %v4226
    %v4244 = vsel %vm1860, %v4240, %v4228
    %s4245 = scalar_lea.vmem %s3, 32
    %v4246 = vld [vmem:[%s4245] sm:$0xff]
    %v4247 = vld [vmem:[%s4245 + $0x8] sm:$0xff]
    %v4248 = vld [vmem:[%s4245 + $0x10] sm:$0xff]
    %v4249 = vld [vmem:[%s4245 + $0x18] sm:$0xff]
    %s4250 = scalar_lea.vmem %s4, 1
    %v4251 = vld [vmem:[%s4250] sm:$0x1]
    %v4253 = vlaneseq
    %v4254 = vshrl.u32 %v4253, 7
    %v4255 = vsub.s32 0, %v4254
    %v4256 = vrot.slane %v4251, %v4255
    %v4259 = vsel %vm76, %v4241, 0
    %v4262 = vsel %vm76, %v4242, 0
    %v4265 = vsel %vm76, %v4243, 0
    %v4268 = vsel %vm76, %v4244, 0
    %4270 = vmatprep.subr.mxu0 0.0
    %4271 = vmatpush1.msra.mxu0 %v4246
    %4272 = vmatprep.subr.mxu0 0.0
    %4273 = vmatpush1.msra.mxu0 %v4247
    %4274 = vmatprep.subr.mxu0 0.0
    %4275 = vmatpush1.msra.mxu0 %v4248
    %4276 = vmatprep.subr.mxu0 0.0
    %4277 = vmatpush1.msra.mxu0 %v4249
    %4278 = vmatprep.subr.mxu0 0.0
    %4279 = vmatpush1.msra.mxu0 0.0
    %4280 = vmatprep.subr.mxu0 0.0
    %4281 = vmatpush1.msra.mxu0 0.0
    %4282 = vmatprep.subr.mxu0 0.0
    %4283 = vmatpush1.msra.mxu0 0.0
    %4284 = vmatprep.subr.mxu0 0.0
    %4285 = vmatpush1.msra.mxu0 0.0
    %4286 = vmatprep.subr.mxu0 0.0
    %4287 = vmatpush1.msra.mxu0 0.0
    %4288 = vmatprep.subr.mxu0 0.0
    %4289 = vmatpush1.msra.mxu0 0.0
    %4290 = vmatprep.subr.mxu0 0.0
    %4291 = vmatpush1.msra.mxu0 0.0
    %4292 = vmatprep.subr.mxu0 0.0
    %4293 = vmatpush1.msra.mxu0 0.0
    %4294 = vmatprep.subr.mxu0 0.0
    %4295 = vmatpush1.msra.mxu0 0.0
    %4296 = vmatprep.subr.mxu0 0.0
    %4297 = vmatpush1.msra.mxu0 0.0
    %4298 = vmatprep.subr.mxu0 0.0
    %4299 = vmatpush1.msra.mxu0 0.0
    %4300 = vmatprep.subr.mxu0 0.0
    %4301 = vmatpush1.msra.mxu0 0.0
    %4302 = vmatprep.subr.mxu0 0.0
    %4303 = vmatpush1.msra.mxu0 0.0
    %4304 = vmatprep.subr.mxu0 0.0
    %4305 = vmatpush1.msra.mxu0 0.0
    %4306 = vmatprep.subr.mxu0 0.0
    %4307 = vmatpush1.msra.mxu0 0.0
    %4308 = vmatprep.subr.mxu0 0.0
    %4309 = vmatpush1.msra.mxu0 0.0
    %4310 = vmatprep.subr.mxu0 0.0
    %4311 = vmatpush1.msra.mxu0 0.0
    %4312 = vmatprep.subr.mxu0 0.0
    %4313 = vmatpush1.msra.mxu0 0.0
    %4314 = vmatprep.subr.mxu0 0.0
    %4315 = vmatpush1.msra.mxu0 0.0
    %4316 = vmatprep.subr.mxu0 0.0
    %4317 = vmatpush1.msra.mxu0 0.0
    %4318 = vmatprep.subr.mxu0 0.0
    %4319 = vmatpush1.msra.mxu0 0.0
    %4320 = vmatprep.subr.mxu0 0.0
    %4321 = vmatpush1.msra.mxu0 0.0
    %4322 = vmatprep.subr.mxu0 0.0
    %4323 = vmatpush1.msra.mxu0 0.0
    %4324 = vmatprep.subr.mxu0 0.0
    %4325 = vmatpush1.msra.mxu0 0.0
    %4326 = vmatprep.subr.mxu0 0.0
    %4327 = vmatpush1.msra.mxu0 0.0
    %4328 = vmatprep.subr.mxu0 0.0
    %4329 = vmatpush1.msra.mxu0 0.0
    %4330 = vmatprep.subr.mxu0 0.0
    %4331 = vmatpush1.msra.mxu0 0.0
    %4332 = vmatprep.subr.mxu0 0.0
    %4333 = vmatpush1.msra.mxu0 0.0
    %4334 = vmatprep.mubr.f32.mxu0 0.0
    %4335 = vmatmul.mubr.f32.gmra.mrb[0].mxu0 %v4259
    %v4336 = vpop.f32.mrb[0].mxu0
    %v4337 = vadd.f32 %v4256, %v4336
    %v4338 = vpop.f32.mrb[0].mxu0
    %4339 = vmatprep.mubr.f32.mxu0 0.0
    %4340 = vmatmul.mubr.f32.gmra.mrb[0].mxu0 %v4262
    %v4341 = vpop.f32.mrb[0].mxu0
    %v4342 = vadd.f32 %v4256, %v4341
    %v4343 = vpop.f32.mrb[0].mxu0
    %4344 = vmatprep.mubr.f32.mxu0 0.0
    %4345 = vmatmul.mubr.f32.gmra.mrb[0].mxu0 %v4265
    %v4346 = vpop.f32.mrb[0].mxu0
    %v4347 = vadd.f32 %v4256, %v4346
    %v4348 = vpop.f32.mrb[0].mxu0
    %4349 = vmatprep.mubr.f32.mxu0 0.0
    %4350 = vmatmul.mubr.f32.gmra.mrb[0].mxu0 %v4268
    %v4351 = vpop.f32.mrb[0].mxu0
    %v4352 = vadd.f32 %v4256, %v4351
    %v4353 = vpop.f32.mrb[0].mxu0
    %4354 = vdwg.mxu0
    %v4355 = vadd.f32 %v2443, %v4337
    %v4356 = vadd.f32 %v2444, %v4342
    %v4357 = vadd.f32 %v2445, %v4347
    %v4358 = vadd.f32 %v2446, %v4352
    %s4359 = scalar_lea.vmem %s5, 1
    %v4360 = vld [vmem:[%s4359] sm:$0x1]
    %s4361 = scalar_lea.vmem %s6, 1
    %v4362 = vld [vmem:[%s4361] sm:$0x1]
    %v4363 = vsel %vm76, %v4355, 0.0
    %4364 = vadd.xlane.f32.xlu0 %v4363
    %v4365 = vpop.xlane.xlu0 %4364
    %v4366 = vsel %vm76, %v4356, 0.0
    %4367 = vadd.xlane.f32.xlu0 %v4366
    %v4368 = vpop.xlane.xlu0 %4367
    %v4369 = vsel %vm76, %v4357, 0.0
    %4370 = vadd.xlane.f32.xlu0 %v4369
    %v4371 = vpop.xlane.xlu0 %4370
    %v4372 = vsel %vm76, %v4358, 0.0
    %4373 = vadd.xlane.f32.xlu0 %v4372
    %v4374 = vpop.xlane.xlu0 %4373
    %v4375 = vmul.f32 %v4365, %v1991
    %v4376 = vmul.f32 %v4368, %v1991
    %v4377 = vmul.f32 %v4371, %v1991
    %v4378 = vmul.f32 %v4374, %v1991
    %v4379 = vsub.f32 %v4355, %v4375
    %v4380 = vsub.f32 %v4356, %v4376
    %v4381 = vsub.f32 %v4357, %v4377
    %v4382 = vsub.f32 %v4358, %v4378
    %v4383 = vmul.f32 %v4379, %v4379
    %v4384 = vmul.f32 %v4380, %v4380
    %v4385 = vmul.f32 %v4381, %v4381
    %v4386 = vmul.f32 %v4382, %v4382
    %v4387 = vsel %vm76, %v4383, 0.0
    %4388 = vadd.xlane.f32.xlu0 %v4387
    %v4389 = vpop.xlane.xlu0 %4388
    %v4390 = vsel %vm76, %v4384, 0.0
    %4391 = vadd.xlane.f32.xlu0 %v4390
    %v4392 = vpop.xlane.xlu0 %4391
    %v4393 = vsel %vm76, %v4385, 0.0
    %4394 = vadd.xlane.f32.xlu0 %v4393
    %v4395 = vpop.xlane.xlu0 %4394
    %v4396 = vsel %vm76, %v4386, 0.0
    %4397 = vadd.xlane.f32.xlu0 %v4396
    %v4398 = vpop.xlane.xlu0 %4397
    %v4399 = vmul.f32 %v4389, %v1991
    %v4400 = vmul.f32 %v4392, %v1991
    %v4401 = vmul.f32 %v4395, %v1991
    %v4402 = vmul.f32 %v4398, %v1991
    %v4403 = vadd.f32 %v4399, 1e-05
    %v4404 = vadd.f32 %v4400, 1e-05
    %v4405 = vadd.f32 %v4401, 1e-05
    %v4406 = vadd.f32 %v4402, 1e-05
    %v4407 = vrsqrt.pop %v4403
    %v4408 = vrsqrt.pop %v4404
    %v4409 = vrsqrt.pop %v4405
    %v4410 = vrsqrt.pop %v4406
    %v4411 = vmul.f32 %v4379, %v4407
    %v4412 = vmul.f32 %v4380, %v4408
    %v4413 = vmul.f32 %v4381, %v4409
    %v4414 = vmul.f32 %v4382, %v4410
    %v4416 = vlaneseq
    %v4417 = vshrl.u32 %v4416, 7
    %v4418 = vsub.s32 0, %v4417
    %v4419 = vrot.slane %v4360, %v4418
    %v4421 = vmul.f32 %v4411, %v4419
    %v4422 = vmul.f32 %v4412, %v4419
    %v4423 = vmul.f32 %v4413, %v4419
    %v4424 = vmul.f32 %v4414, %v4419
    %v4426 = vlaneseq
    %v4427 = vshrl.u32 %v4426, 7
    %v4428 = vsub.s32 0, %v4427
    %v4429 = vrot.slane %v4362, %v4428
    %v4431 = vadd.f32 %v4421, %v4429
    %v4432 = vadd.f32 %v4422, %v4429
    %v4433 = vadd.f32 %v4423, %v4429
    %v4434 = vadd.f32 %v4424, %v4429
    %s4435 = scalar_lea.vmem %s7, 64
    %v4436 = vld [vmem:[%s4435] sm:$0xff]
    %v4437 = vld [vmem:[%s4435 + $0x8] sm:$0xff]
    %v4438 = vld [vmem:[%s4435 + $0x10] sm:$0xff]
    %v4439 = vld [vmem:[%s4435 + $0x18] sm:$0xff]
    %v4440 = vld [vmem:[%s4435 + $0x20] sm:$0xff]
    %v4441 = vld [vmem:[%s4435 + $0x28] sm:$0xff]
    %v4442 = vld [vmem:[%s4435 + $0x30] sm:$0xff]
    %v4443 = vld [vmem:[%s4435 + $0x38] sm:$0xff]
    %s4444 = scalar_lea.vmem %s8, 2
    %v4445 = vld [vmem:[%s4444] sm:$0x3]
    %v4447 = vlaneseq
    %v4448 = vshrl.u32 %v4447, 7
    %v4449 = vsub.s32 0, %v4448
    %v4450 = vrot.slane %v4445, %v4449
    %v4451 = vlaneseq
    %v4452 = vshrl.u32 %v4451, 7
    %v4453 = vsub.s32 1, %v4452
    %v4454 = vrot.slane %v4445, %v4453
    %v4458 = vsel %vm76, %v4431, 0
    %v4461 = vsel %vm76, %v4432, 0
    %v4464 = vsel %vm76, %v4433, 0
    %v4467 = vsel %vm76, %v4434, 0
    %4469 = vmatprep.subr.mxu0 %v4437
    %4470 = vmatpush1.msra.mxu0 %v4436
    %4471 = vmatprep.subr.mxu0 %v4439
    %4472 = vmatpush1.msra.mxu0 %v4438
    %4473 = vmatprep.subr.mxu0 %v4441
    %4474 = vmatpush1.msra.mxu0 %v4440
    %4475 = vmatprep.subr.mxu0 %v4443
    %4476 = vmatpush1.msra.mxu0 %v4442
    %4477 = vmatprep.subr.mxu0 0.0
    %4478 = vmatpush1.msra.mxu0 0.0
    %4479 = vmatprep.subr.mxu0 0.0
    %4480 = vmatpush1.msra.mxu0 0.0
    %4481 = vmatprep.subr.mxu0 0.0
    %4482 = vmatpush1.msra.mxu0 0.0
    %4483 = vmatprep.subr.mxu0 0.0
    %4484 = vmatpush1.msra.mxu0 0.0
    %4485 = vmatprep.subr.mxu0 0.0
    %4486 = vmatpush1.msra.mxu0 0.0
    %4487 = vmatprep.subr.mxu0 0.0
    %4488 = vmatpush1.msra.mxu0 0.0
    %4489 = vmatprep.subr.mxu0 0.0
    %4490 = vmatpush1.msra.mxu0 0.0
    %4491 = vmatprep.subr.mxu0 0.0
    %4492 = vmatpush1.msra.mxu0 0.0
    %4493 = vmatprep.subr.mxu0 0.0
    %4494 = vmatpush1.msra.mxu0 0.0
    %4495 = vmatprep.subr.mxu0 0.0
    %4496 = vmatpush1.msra.mxu0 0.0
    %4497 = vmatprep.subr.mxu0 0.0
    %4498 = vmatpush1.msra.mxu0 0.0
    %4499 = vmatprep.subr.mxu0 0.0
    %4500 = vmatpush1.msra.mxu0 0.0
    %4501 = vmatprep.subr.mxu0 0.0
    %4502 = vmatpush1.msra.mxu0 0.0
    %4503 = vmatprep.subr.mxu0 0.0
    %4504 = vmatpush1.msra.mxu0 0.0
    %4505 = vmatprep.subr.mxu0 0.0
    %4506 = vmatpush1.msra.mxu0 0.0
    %4507 = vmatprep.subr.mxu0 0.0
    %4508 = vmatpush1.msra.mxu0 0.0
    %4509 = vmatprep.subr.mxu0 0.0
    %4510 = vmatpush1.msra.mxu0 0.0
    %4511 = vmatprep.subr.mxu0 0.0
    %4512 = vmatpush1.msra.mxu0 0.0
    %4513 = vmatprep.subr.mxu0 0.0
    %4514 = vmatpush1.msra.mxu0 0.0
    %4515 = vmatprep.subr.mxu0 0.0
    %4516 = vmatpush1.msra.mxu0 0.0
    %4517 = vmatprep.subr.mxu0 0.0
    %4518 = vmatpush1.msra.mxu0 0.0
    %4519 = vmatprep.subr.mxu0 0.0
    %4520 = vmatpush1.msra.mxu0 0.0
    %4521 = vmatprep.subr.mxu0 0.0
    %4522 = vmatpush1.msra.mxu0 0.0
    %4523 = vmatprep.subr.mxu0 0.0
    %4524 = vmatpush1.msra.mxu0 0.0
    %4525 = vmatprep.subr.mxu0 0.0
    %4526 = vmatpush1.msra.mxu0 0.0
    %4527 = vmatprep.subr.mxu0 0.0
    %4528 = vmatpush1.msra.mxu0 0.0
    %4529 = vmatprep.subr.mxu0 0.0
    %4530 = vmatpush1.msra.mxu0 0.0
    %4531 = vmatprep.subr.mxu0 0.0
    %4532 = vmatpush1.msra.mxu0 0.0
    %4533 = vmatprep.mubr.f32.mxu0 0.0
    %4534 = vmatmul.mubr.f32.gmra.mrb[0].mxu0 %v4458
    %v4535 = vpop.f32.mrb[0].mxu0
    %v4536 = vadd.f32 %v4450, %v4535
    %v4537 = vpop.f32.mrb[0].mxu0
    %v4538 = vadd.f32 %v4454, %v4537
    %4539 = vmatprep.mubr.f32.mxu0 0.0
    %4540 = vmatmul.mubr.f32.gmra.mrb[0].mxu0 %v4461
    %v4541 = vpop.f32.mrb[0].mxu0
    %v4542 = vadd.f32 %v4450, %v4541
    %v4543 = vpop.f32.mrb[0].mxu0
    %v4544 = vadd.f32 %v4454, %v4543
    %4545 = vmatprep.mubr.f32.mxu0 0.0
    %4546 = vmatmul.mubr.f32.gmra.mrb[0].mxu0 %v4464
    %v4547 = vpop.f32.mrb[0].mxu0
    %v4548 = vadd.f32 %v4450, %v4547
    %v4549 = vpop.f32.mrb[0].mxu0
    %v4550 = vadd.f32 %v4454, %v4549
    %4551 = vmatprep.mubr.f32.mxu0 0.0
    %4552 = vmatmul.mubr.f32.gmra.mrb[0].mxu0 %v4467
    %v4553 = vpop.f32.mrb[0].mxu0
    %v4554 = vadd.f32 %v4450, %v4553
    %v4555 = vpop.f32.mrb[0].mxu0
    %v4556 = vadd.f32 %v4454, %v4555
    %4557 = vdwg.mxu0
    %v4558 = vmul.f32 %v4536, 0.5
    %v4559 = vmul.f32 %v4538, 0.5
    %v4560 = vmul.f32 %v4542, 0.5
    %v4561 = vmul.f32 %v4544, 0.5
    %v4562 = vmul.f32 %v4548, 0.5
    %v4563 = vmul.f32 %v4550, 0.5
    %v4564 = vmul.f32 %v4554, 0.5
    %v4565 = vmul.f32 %v4556, 0.5
    %v4566 = vmul.f32 %v4536, 0.044715
    %v4567 = vmul.f32 %v4538, 0.044715
    %v4568 = vmul.f32 %v4542, 0.044715
    %v4569 = vmul.f32 %v4544, 0.044715
    %v4570 = vmul.f32 %v4548, 0.044715
    %v4571 = vmul.f32 %v4550, 0.044715
    %v4572 = vmul.f32 %v4554, 0.044715
    %v4573 = vmul.f32 %v4556, 0.044715
    %v4574 = vmul.f32 %v4566, %v4536
    %v4575 = vmul.f32 %v4567, %v4538
    %v4576 = vmul.f32 %v4568, %v4542
    %v4577 = vmul.f32 %v4569, %v4544
    %v4578 = vmul.f32 %v4570, %v4548
    %v4579 = vmul.f32 %v4571, %v4550
    %v4580 = vmul.f32 %v4572, %v4554
    %v4581 = vmul.f32 %v4573, %v4556
    %v4582 = vmul.f32 %v4574, %v4536
    %v4583 = vmul.f32 %v4575, %v4538
    %v4584 = vmul.f32 %v4576, %v4542
    %v4585 = vmul.f32 %v4577, %v4544
    %v4586 = vmul.f32 %v4578, %v4548
    %v4587 = vmul.f32 %v4579, %v4550
    %v4588 = vmul.f32 %v4580, %v4554
    %v4589 = vmul.f32 %v4581, %v4556
    %v4590 = vadd.f32 %v4536, %v4582
    %v4591 = vadd.f32 %v4538, %v4583
    %v4592 = vadd.f32 %v4542, %v4584
    %v4593 = vadd.f32 %v4544, %v4585
    %v4594 = vadd.f32 %v4548, %v4586
    %v4595 = vadd.f32 %v4550, %v4587
    %v4596 = vadd.f32 %v4554, %v4588
    %v4597 = vadd.f32 %v4556, %v4589
    %v4598 = vmul.f32 %v4590, 0.7978846
    %v4599 = vmul.f32 %v4591, 0.7978846
    %v4600 = vmul.f32 %v4592, 0.7978846
    %v4601 = vmul.f32 %v4593, 0.7978846
    %v4602 = vmul.f32 %v4594, 0.7978846
    %v4603 = vmul.f32 %v4595, 0.7978846
    %v4604 = vmul.f32 %v4596, 0.7978846
    %v4605 = vmul.f32 %v4597, 0.7978846
    %v4606 = vtanh.pop %v4598
    %v4607 = vtanh.pop %v4599
    %v4608 = vtanh.pop %v4600
    %v4609 = vtanh.pop %v4601
    %v4610 = vtanh.pop %v4602
    %v4611 = vtanh.pop %v4603
    %v4612 = vtanh.pop %v4604
    %v4613 = vtanh.pop %v4605
    %v4614 = vadd.f32 %v4606, 1.0
    %v4615 = vadd.f32 %v4607, 1.0
    %v4616 = vadd.f32 %v4608, 1.0
    %v4617 = vadd.f32 %v4609, 1.0
    %v4618 = vadd.f32 %v4610, 1.0
    %v4619 = vadd.f32 %v4611, 1.0
    %v4620 = vadd.f32 %v4612, 1.0
    %v4621 = vadd.f32 %v4613, 1.0
    %v4622 = vmul.f32 %v4558, %v4614
    %v4623 = vmul.f32 %v4559, %v4615
    %v4624 = vmul.f32 %v4560, %v4616
    %v4625 = vmul.f32 %v4561, %v4617
    %v4626 = vmul.f32 %v4562, %v4618
    %v4627 = vmul.f32 %v4563, %v4619
    %v4628 = vmul.f32 %v4564, %v4620
    %v4629 = vmul.f32 %v4565, %v4621
    %s4630 = scalar_lea.vmem %s9, 256
    %v4631 = vld [vmem:[%s4630] sm:$0xff]
    %v4632 = vld [vmem:[%s4630 + $0x8] sm:$0xff]
    %v4633 = vld [vmem:[%s4630 + $0x10] sm:$0xff]
    %v4634 = vld [vmem:[%s4630 + $0x18] sm:$0xff]
    %v4635 = vld [vmem:[%s4630 + $0x20] sm:$0xff]
    %v4636 = vld [vmem:[%s4630 + $0x28] sm:$0xff]
    %v4637 = vld [vmem:[%s4630 + $0x30] sm:$0xff]
    %v4638 = vld [vmem:[%s4630 + $0x38] sm:$0xff]
    %v4639 = vld [vmem:[%s4630 + $0x40] sm:$0xff]
    %v4640 = vld [vmem:[%s4630 + $0x48] sm:$0xff]
    %v4641 = vld [vmem:[%s4630 + $0x50] sm:$0xff]
    %v4642 = vld [vmem:[%s4630 + $0x58] sm:$0xff]
    %v4643 = vld [vmem:[%s4630 + $0x60] sm:$0xff]
    %v4644 = vld [vmem:[%s4630 + $0x68] sm:$0xff]
    %v4645 = vld [vmem:[%s4630 + $0x70] sm:$0xff]
    %v4646 = vld [vmem:[%s4630 + $0x78] sm:$0xff]
    %v4647 = vld [vmem:[%s4630 + $0x80] sm:$0xff]
    %v4648 = vld [vmem:[%s4630 + $0x88] sm:$0xff]
    %v4649 = vld [vmem:[%s4630 + $0x90] sm:$0xff]
    %v4650 = vld [vmem:[%s4630 + $0x98] sm:$0xff]
    %v4651 = vld [vmem:[%s4630 + $0xa0] sm:$0xff]
    %v4652 = vld [vmem:[%s4630 + $0xa8] sm:$0xff]
    %v4653 = vld [vmem:[%s4630 + $0xb0] sm:$0xff]
    %v4654 = vld [vmem:[%s4630 + $0xb8] sm:$0xff]
    %v4655 = vld [vmem:[%s4630 + $0xc0] sm:$0xff]
    %v4656 = vld [vmem:[%s4630 + $0xc8] sm:$0xff]
    %v4657 = vld [vmem:[%s4630 + $0xd0] sm:$0xff]
    %v4658 = vld [vmem:[%s4630 + $0xd8] sm:$0xff]
    %v4659 = vld [vmem:[%s4630 + $0xe0] sm:$0xff]
    %v4660 = vld [vmem:[%s4630 + $0xe8] sm:$0xff]
    %v4661 = vld [vmem:[%s4630 + $0xf0] sm:$0xff]
    %v4662 = vld [vmem:[%s4630 + $0xf8] sm:$0xff]
    %s4663 = scalar_lea.vmem %s10, 1
    %v4664 = vld [vmem:[%s4663] sm:$0x1]
    %v4666 = vlaneseq
    %v4667 = vshrl.u32 %v4666, 7
    %v4668 = vsub.s32 0, %v4667
    %v4669 = vrot.slane %v4664, %v4668
    %4671 = vmatprep.subr.mxu0 0.0
    %4672 = vmatpush1.msra.mxu0 %v4631
    %4673 = vmatprep.subr.mxu0 0.0
    %4674 = vmatpush1.msra.mxu0 %v4632
    %4675 = vmatprep.subr.mxu0 0.0
    %4676 = vmatpush1.msra.mxu0 %v4633
    %4677 = vmatprep.subr.mxu0 0.0
    %4678 = vmatpush1.msra.mxu0 %v4634
    %4679 = vmatprep.subr.mxu0 0.0
    %4680 = vmatpush1.msra.mxu0 %v4635
    %4681 = vmatprep.subr.mxu0 0.0
    %4682 = vmatpush1.msra.mxu0 %v4636
    %4683 = vmatprep.subr.mxu0 0.0
    %4684 = vmatpush1.msra.mxu0 %v4637
    %4685 = vmatprep.subr.mxu0 0.0
    %4686 = vmatpush1.msra.mxu0 %v4638
    %4687 = vmatprep.subr.mxu0 0.0
    %4688 = vmatpush1.msra.mxu0 %v4639
    %4689 = vmatprep.subr.mxu0 0.0
    %4690 = vmatpush1.msra.mxu0 %v4640
    %4691 = vmatprep.subr.mxu0 0.0
    %4692 = vmatpush1.msra.mxu0 %v4641
    %4693 = vmatprep.subr.mxu0 0.0
    %4694 = vmatpush1.msra.mxu0 %v4642
    %4695 = vmatprep.subr.mxu0 0.0
    %4696 = vmatpush1.msra.mxu0 %v4643
    %4697 = vmatprep.subr.mxu0 0.0
    %4698 = vmatpush1.msra.mxu0 %v4644
    %4699 = vmatprep.subr.mxu0 0.0
    %4700 = vmatpush1.msra.mxu0 %v4645
    %4701 = vmatprep.subr.mxu0 0.0
    %4702 = vmatpush1.msra.mxu0 %v4646
    %4703 = vmatprep.subr.mxu0 0.0
    %4704 = vmatpush1.msra.mxu0 %v4647
    %4705 = vmatprep.subr.mxu0 0.0
    %4706 = vmatpush1.msra.mxu0 %v4648
    %4707 = vmatprep.subr.mxu0 0.0
    %4708 = vmatpush1.msra.mxu0 %v4649
    %4709 = vmatprep.subr.mxu0 0.0
    %4710 = vmatpush1.msra.mxu0 %v4650
    %4711 = vmatprep.subr.mxu0 0.0
    %4712 = vmatpush1.msra.mxu0 %v4651
    %4713 = vmatprep.subr.mxu0 0.0
    %4714 = vmatpush1.msra.mxu0 %v4652
    %4715 = vmatprep.subr.mxu0 0.0
    %4716 = vmatpush1.msra.mxu0 %v4653
    %4717 = vmatprep.subr.mxu0 0.0
    %4718 = vmatpush1.msra.mxu0 %v4654
    %4719 = vmatprep.subr.mxu0 0.0
    %4720 = vmatpush1.msra.mxu0 %v4655
    %4721 = vmatprep.subr.mxu0 0.0
    %4722 = vmatpush1.msra.mxu0 %v4656
    %4723 = vmatprep.subr.mxu0 0.0
    %4724 = vmatpush1.msra.mxu0 %v4657
    %4725 = vmatprep.subr.mxu0 0.0
    %4726 = vmatpush1.msra.mxu0 %v4658
    %4727 = vmatprep.subr.mxu0 0.0
    %4728 = vmatpush1.msra.mxu0 %v4659
    %4729 = vmatprep.subr.mxu0 0.0
    %4730 = vmatpush1.msra.mxu0 %v4660
    %4731 = vmatprep.subr.mxu0 0.0
    %4732 = vmatpush1.msra.mxu0 %v4661
    %4733 = vmatprep.subr.mxu0 0.0
    %4734 = vmatpush1.msra.mxu0 %v4662
    %4735 = vmatprep.mubr.f32.mxu0 %v4623
    %4736 = vmatmul.mubr.f32.gmra.mrb[0].mxu0 %v4622
    %v4737 = vpop.f32.mrb[0].mxu0
    %v4738 = vadd.f32 %v4669, %v4737
    %v4739 = vpop.f32.mrb[0].mxu0
    %4740 = vmatprep.mubr.f32.mxu0 %v4625
    %4741 = vmatmul.mubr.f32.gmra.mrb[0].mxu0 %v4624
    %v4742 = vpop.f32.mrb[0].mxu0
    %v4743 = vpop.f32.mrb[0].mxu0
    %4744 = vmatprep.mubr.f32.mxu0 %v4627
    %4745 = vmatmul.mubr.f32.gmra.mrb[0].mxu0 %v4626
    %v4746 = vpop.f32.mrb[0].mxu0
    %v4747 = vadd.f32 %v4669, %v4746
    %v4748 = vpop.f32.mrb[0].mxu0
    %4749 = vmatprep.mubr.f32.mxu0 %v4629
    %4750 = vmatmul.mubr.f32.gmra.mrb[0].mxu0 %v4628
    %v4751 = vpop.f32.mrb[0].mxu0
    %v4752 = vpop.f32.mrb[0].mxu0
    %4753 = vdwg.mxu0
    %v4754 = vadd.f32 %v4431, %v4738
    %v4755 = vadd.f32 %v4433, %v4747
    %s4756 = scalar_lea.vmem %s11, 1
    %v4757 = vld [vmem:[%s4756] sm:$0x1]
    %s4758 = scalar_lea.vmem %s12, 1
    %v4759 = vld [vmem:[%s4758] sm:$0x1]
    %v4760 = vsel %vm76, %v4754, 0.0
    %4761 = vadd.xlane.f32.xlu0 %v4760
    %v4762 = vpop.xlane.xlu0 %4761
    %v4763 = vsel %vm76, %v4755, 0.0
    %4764 = vadd.xlane.f32.xlu0 %v4763
    %v4765 = vpop.xlane.xlu0 %4764
    %v4766 = vmul.f32 %v4762, %v1991
    %v4767 = vmul.f32 %v4765, %v1991
    %v4768 = vsub.f32 %v4754, %v4766
    %v4769 = vsub.f32 %v4755, %v4767
    %v4770 = vmul.f32 %v4768, %v4768
    %v4771 = vmul.f32 %v4769, %v4769
    %v4772 = vsel %vm76, %v4770, 0.0
    %4773 = vadd.xlane.f32.xlu0 %v4772
    %v4774 = vpop.xlane.xlu0 %4773
    %v4775 = vsel %vm76, %v4771, 0.0
    %4776 = vadd.xlane.f32.xlu0 %v4775
    %v4777 = vpop.xlane.xlu0 %4776
    %v4778 = vmul.f32 %v4774, %v1991
    %v4779 = vmul.f32 %v4777, %v1991
    %v4780 = vadd.f32 %v4778, 1e-05
    %v4781 = vadd.f32 %v4779, 1e-05
    %v4782 = vrsqrt.pop %v4780
    %v4783 = vrsqrt.pop %v4781
    %v4784 = vmul.f32 %v4768, %v4782
    %v4785 = vmul.f32 %v4769, %v4783
    %v4787 = vlaneseq
    %v4788 = vshrl.u32 %v4787, 7
    %v4789 = vsub.s32 0, %v4788
    %v4790 = vrot.slane %v4757, %v4789
    %v4792 = vmul.f32 %v4784, %v4790
    %v4793 = vmul.f32 %v4785, %v4790
    %v4795 = vlaneseq
    %v4796 = vshrl.u32 %v4795, 7
    %v4797 = vsub.s32 0, %v4796
    %v4798 = vrot.slane %v4759, %v4797
    %v4800 = vadd.f32 %v4792, %v4798
    %v4801 = vadd.f32 %v4793, %v4798
    %v4802 = vld [vmem:[%s13] sm:$0xff]
    %v4803 = vld [vmem:[%s13 + $0x8] sm:$0xff]
    %v4804 = vld [vmem:[%s13 + $0x10] sm:$0xff]
    %v4805 = vld [vmem:[%s13 + $0x18] sm:$0xff]
    %v4806 = vld [vmem:[%s13 + $0x20] sm:$0xff]
    %v4807 = vld [vmem:[%s13 + $0x28] sm:$0xff]
    %v4808 = vld [vmem:[%s13 + $0x30] sm:$0xff]
    %v4809 = vld [vmem:[%s13 + $0x38] sm:$0xff]
    %v4810 = vld [vmem:[%s14] sm:$0x3]
    %v4812 = vlaneseq
    %v4813 = vshrl.u32 %v4812, 7
    %v4814 = vsub.s32 0, %v4813
    %v4815 = vrot.slane %v4810, %v4814
    %v4816 = vlaneseq
    %v4817 = vshrl.u32 %v4816, 7
    %v4818 = vsub.s32 1, %v4817
    %v4819 = vrot.slane %v4810, %v4818
    %v4824 = vrot.slane %v4801, 7
    %vm4825 = vcmask 1041409
    %v4826 = vsel %vm4825, %v4824, %v4800
    %v4827 = vsel %vm76, %v4826, 0
    %4829 = vmatprep.subr.mxu0 %v4803
    %4830 = vmatpush1.msra.mxu0 %v4802
    %4831 = vmatprep.subr.mxu0 %v4805
    %4832 = vmatpush1.msra.mxu0 %v4804
    %4833 = vmatprep.subr.mxu0 %v4807
    %4834 = vmatpush1.msra.mxu0 %v4806
    %4835 = vmatprep.subr.mxu0 %v4809
    %4836 = vmatpush1.msra.mxu0 %v4808
    %4837 = vmatprep.subr.mxu0 0.0
    %4838 = vmatpush1.msra.mxu0 0.0
    %4839 = vmatprep.subr.mxu0 0.0
    %4840 = vmatpush1.msra.mxu0 0.0
    %4841 = vmatprep.subr.mxu0 0.0
    %4842 = vmatpush1.msra.mxu0 0.0
    %4843 = vmatprep.subr.mxu0 0.0
    %4844 = vmatpush1.msra.mxu0 0.0
    %4845 = vmatprep.subr.mxu0 0.0
    %4846 = vmatpush1.msra.mxu0 0.0
    %4847 = vmatprep.subr.mxu0 0.0
    %4848 = vmatpush1.msra.mxu0 0.0
    %4849 = vmatprep.subr.mxu0 0.0
    %4850 = vmatpush1.msra.mxu0 0.0
    %4851 = vmatprep.subr.mxu0 0.0
    %4852 = vmatpush1.msra.mxu0 0.0
    %4853 = vmatprep.subr.mxu0 0.0
    %4854 = vmatpush1.msra.mxu0 0.0
    %4855 = vmatprep.subr.mxu0 0.0
    %4856 = vmatpush1.msra.mxu0 0.0
    %4857 = vmatprep.subr.mxu0 0.0
    %4858 = vmatpush1.msra.mxu0 0.0
    %4859 = vmatprep.subr.mxu0 0.0
    %4860 = vmatpush1.msra.mxu0 0.0
    %4861 = vmatprep.subr.mxu0 0.0
    %4862 = vmatpush1.msra.mxu0 0.0
    %4863 = vmatprep.subr.mxu0 0.0
    %4864 = vmatpush1.msra.mxu0 0.0
    %4865 = vmatprep.subr.mxu0 0.0
    %4866 = vmatpush1.msra.mxu0 0.0
    %4867 = vmatprep.subr.mxu0 0.0
    %4868 = vmatpush1.msra.mxu0 0.0
    %4869 = vmatprep.subr.mxu0 0.0
    %4870 = vmatpush1.msra.mxu0 0.0
    %4871 = vmatprep.subr.mxu0 0.0
    %4872 = vmatpush1.msra.mxu0 0.0
    %4873 = vmatprep.subr.mxu0 0.0
    %4874 = vmatpush1.msra.mxu0 0.0
    %4875 = vmatprep.subr.mxu0 0.0
    %4876 = vmatpush1.msra.mxu0 0.0
    %4877 = vmatprep.subr.mxu0 0.0
    %4878 = vmatpush1.msra.mxu0 0.0
    %4879 = vmatprep.subr.mxu0 0.0
    %4880 = vmatpush1.msra.mxu0 0.0
    %4881 = vmatprep.subr.mxu0 0.0
    %4882 = vmatpush1.msra.mxu0 0.0
    %4883 = vmatprep.subr.mxu0 0.0
    %4884 = vmatpush1.msra.mxu0 0.0
    %4885 = vmatprep.subr.mxu0 0.0
    %4886 = vmatpush1.msra.mxu0 0.0
    %4887 = vmatprep.subr.mxu0 0.0
    %4888 = vmatpush1.msra.mxu0 0.0
    %4889 = vmatprep.subr.mxu0 0.0
    %4890 = vmatpush1.msra.mxu0 0.0
    %4891 = vmatprep.subr.mxu0 0.0
    %4892 = vmatpush1.msra.mxu0 0.0
    %4893 = vmatprep.mubr.f32.mxu0 0.0
    %4894 = vmatmul.mubr.f32.gmra.mrb[0].mxu0 %v4827
    %v4895 = vpop.f32.mrb[0].mxu0
    %v4896 = vadd.f32 %v4815, %v4895
    %v4897 = vpop.f32.mrb[0].mxu0
    %v4898 = vadd.f32 %v4819, %v4897
    %4899 = vdwg.mxu0
    %v4900 = vsub.f32 0.0, %v4896
    %v4901 = vsub.f32 0.0, %v4898
    %v4902 = vmul.f32 %v4900, 1.442695
    %v4903 = vpow.pop %v4902
    %v4904 = vmul.f32 %v4901, 1.442695
    %v4905 = vpow.pop %v4904
    %v4906 = vadd.f32 %v4903, 1.0
    %v4907 = vadd.f32 %v4905, 1.0
    %v4908 = vrcp.pop %v4906
    %v4909 = vmul.f32 1.0, %v4908
    %v4910 = vrcp.pop %v4907
    %v4911 = vmul.f32 1.0, %v4910
    %v4912 = vmul.f32 %v4896, %v4909
    %v4913 = vmul.f32 %v4898, %v4911
    %v4914 = vld [vmem:[%s15] sm:$0xff]
    %v4915 = vld [vmem:[%s15 + $0x8] sm:$0xff]
    %v4916 = vld [vmem:[%s15 + $0x10] sm:$0xff]
    %v4917 = vld [vmem:[%s15 + $0x18] sm:$0xff]
    %v4918 = vld [vmem:[%s15 + $0x20] sm:$0xff]
    %v4919 = vld [vmem:[%s15 + $0x28] sm:$0xff]
    %v4920 = vld [vmem:[%s15 + $0x30] sm:$0xff]
    %v4921 = vld [vmem:[%s15 + $0x38] sm:$0xff]
    %v4922 = vld [vmem:[%s15 + $0x40] sm:$0xff]
    %v4923 = vld [vmem:[%s15 + $0x48] sm:$0xff]
    %v4924 = vld [vmem:[%s15 + $0x50] sm:$0xff]
    %v4925 = vld [vmem:[%s15 + $0x58] sm:$0xff]
    %v4926 = vld [vmem:[%s15 + $0x60] sm:$0xff]
    %v4927 = vld [vmem:[%s15 + $0x68] sm:$0xff]
    %v4928 = vld [vmem:[%s15 + $0x70] sm:$0xff]
    %v4929 = vld [vmem:[%s15 + $0x78] sm:$0xff]
    %v4930 = vld [vmem:[%s15 + $0x80] sm:$0xff]
    %v4931 = vld [vmem:[%s15 + $0x88] sm:$0xff]
    %v4932 = vld [vmem:[%s15 + $0x90] sm:$0xff]
    %v4933 = vld [vmem:[%s15 + $0x98] sm:$0xff]
    %v4934 = vld [vmem:[%s15 + $0xa0] sm:$0xff]
    %v4935 = vld [vmem:[%s15 + $0xa8] sm:$0xff]
    %v4936 = vld [vmem:[%s15 + $0xb0] sm:$0xff]
    %v4937 = vld [vmem:[%s15 + $0xb8] sm:$0xff]
    %v4938 = vld [vmem:[%s15 + $0xc0] sm:$0xff]
    %v4939 = vld [vmem:[%s15 + $0xc8] sm:$0xff]
    %v4940 = vld [vmem:[%s15 + $0xd0] sm:$0xff]
    %v4941 = vld [vmem:[%s15 + $0xd8] sm:$0xff]
    %v4942 = vld [vmem:[%s15 + $0xe0] sm:$0xff]
    %v4943 = vld [vmem:[%s15 + $0xe8] sm:$0xff]
    %v4944 = vld [vmem:[%s15 + $0xf0] sm:$0xff]
    %v4945 = vld [vmem:[%s15 + $0xf8] sm:$0xff]
    %v4946 = vld [vmem:[%s16] sm:$0x1]
    %v4948 = vlaneseq
    %v4949 = vshrl.u32 %v4948, 7
    %v4950 = vsub.s32 0, %v4949
    %v4951 = vrot.slane %v4946, %v4950
    %4953 = vmatprep.subr.mxu0 0.0
    %4954 = vmatpush1.msra.mxu0 %v4914
    %4955 = vmatprep.subr.mxu0 0.0
    %4956 = vmatpush1.msra.mxu0 %v4915
    %4957 = vmatprep.subr.mxu0 0.0
    %4958 = vmatpush1.msra.mxu0 %v4916
    %4959 = vmatprep.subr.mxu0 0.0
    %4960 = vmatpush1.msra.mxu0 %v4917
    %4961 = vmatprep.subr.mxu0 0.0
    %4962 = vmatpush1.msra.mxu0 %v4918
    %4963 = vmatprep.subr.mxu0 0.0
    %4964 = vmatpush1.msra.mxu0 %v4919
    %4965 = vmatprep.subr.mxu0 0.0
    %4966 = vmatpush1.msra.mxu0 %v4920
    %4967 = vmatprep.subr.mxu0 0.0
    %4968 = vmatpush1.msra.mxu0 %v4921
    %4969 = vmatprep.subr.mxu0 0.0
    %4970 = vmatpush1.msra.mxu0 %v4922
    %4971 = vmatprep.subr.mxu0 0.0
    %4972 = vmatpush1.msra.mxu0 %v4923
    %4973 = vmatprep.subr.mxu0 0.0
    %4974 = vmatpush1.msra.mxu0 %v4924
    %4975 = vmatprep.subr.mxu0 0.0
    %4976 = vmatpush1.msra.mxu0 %v4925
    %4977 = vmatprep.subr.mxu0 0.0
    %4978 = vmatpush1.msra.mxu0 %v4926
    %4979 = vmatprep.subr.mxu0 0.0
    %4980 = vmatpush1.msra.mxu0 %v4927
    %4981 = vmatprep.subr.mxu0 0.0
    %4982 = vmatpush1.msra.mxu0 %v4928
    %4983 = vmatprep.subr.mxu0 0.0
    %4984 = vmatpush1.msra.mxu0 %v4929
    %4985 = vmatprep.subr.mxu0 0.0
    %4986 = vmatpush1.msra.mxu0 %v4930
    %4987 = vmatprep.subr.mxu0 0.0
    %4988 = vmatpush1.msra.mxu0 %v4931
    %4989 = vmatprep.subr.mxu0 0.0
    %4990 = vmatpush1.msra.mxu0 %v4932
    %4991 = vmatprep.subr.mxu0 0.0
    %4992 = vmatpush1.msra.mxu0 %v4933
    %4993 = vmatprep.subr.mxu0 0.0
    %4994 = vmatpush1.msra.mxu0 %v4934
    %4995 = vmatprep.subr.mxu0 0.0
    %4996 = vmatpush1.msra.mxu0 %v4935
    %4997 = vmatprep.subr.mxu0 0.0
    %4998 = vmatpush1.msra.mxu0 %v4936
    %4999 = vmatprep.subr.mxu0 0.0
    %5000 = vmatpush1.msra.mxu0 %v4937
    %5001 = vmatprep.subr.mxu0 0.0
    %5002 = vmatpush1.msra.mxu0 %v4938
    %5003 = vmatprep.subr.mxu0 0.0
    %5004 = vmatpush1.msra.mxu0 %v4939
    %5005 = vmatprep.subr.mxu0 0.0
    %5006 = vmatpush1.msra.mxu0 %v4940
    %5007 = vmatprep.subr.mxu0 0.0
    %5008 = vmatpush1.msra.mxu0 %v4941
    %5009 = vmatprep.subr.mxu0 0.0
    %5010 = vmatpush1.msra.mxu0 %v4942
    %5011 = vmatprep.subr.mxu0 0.0
    %5012 = vmatpush1.msra.mxu0 %v4943
    %5013 = vmatprep.subr.mxu0 0.0
    %5014 = vmatpush1.msra.mxu0 %v4944
    %5015 = vmatprep.subr.mxu0 0.0
    %5016 = vmatpush1.msra.mxu0 %v4945
    %5017 = vmatprep.mubr.f32.mxu0 %v4913
    %5018 = vmatmul.mubr.f32.gmra.mrb[0].mxu0 %v4912
    %v5019 = vpop.f32.mrb[0].mxu0
    %v5020 = vadd.f32 %v4951, %v5019
    %v5021 = vpop.f32.mrb[0].mxu0
    %5022 = vdwg.mxu0
    %5023 = vst [vmem:[#allocation2] sm:$0x3] %v5020
    // Predicated region
    $region70: #{tpu_custom_call.1} parent=1 // pred_check
      _
    $region71: #{tpu_custom_call.1} parent=1 // pred_check_branch
      %5025 = sbr.rel (0) target = $region73
    $region72: #{tpu_custom_call.1} parent=1 // pred_region
      %s5027 = ssub.s32 32, 32
      %5028 = vsyncadd [#allocation3], %s5027
      %s5030 = sshll.u32 [#allocation2], 4
      %s5031 = int_to_ptr.vmem [resolvable:$true] %s5030
      %5033 = dma.vmem_to_hbm [thread:$0]  %s5031, 32, %s17, [#allocation3]
    $region73: #{tpu_custom_call.1} parent=1 // pred_fallthru
      _
    // Predicated region
    $region74: #{tpu_custom_call.1} parent=1 // pred_check
      _
    $region75: #{tpu_custom_call.1} parent=1 // pred_check_branch
      %5035 = sbr.rel (0) target = $region77
    $region76: #{tpu_custom_call.1} parent=1 // pred_region
      %5036 = dma.done [#allocation3], 32
    $region77: #{tpu_custom_call.1} parent=1 // pred_fallthru
      _
    %5037 = vsyncpa [#allocation3], 1

</llo_original>
